<compile_context>
chip_gen: v5e
topology: v5e:2x2
jax: 0.10.0
libtpu: 0.0.40
codegen_flags: <defaults>
</compile_context>

<pallas_src>
import functools

import jax
import jax.numpy as jnp
from jax import lax
from jax.experimental import pallas as pl
from jax.experimental.pallas import tpu as pltpu

K = 3          # conv kernel size
EPS = 1e-5     # BatchNorm eps
S = 8          # rows per strip (one f32 sublane tile)


def fused_conv_bn_kernel(x_ref, w1_ref, w2_ref, g1_ref, b1_ref, g2_ref, b2_ref,
                         o_ref, y1_ref, ssum_ref, ssq_ref, *,
                         true_h, true_w, n_strips1, n_strips2):
    # beta1 / mu1 only add a per-output-channel constant to conv2's output,
    # which training-mode BN2 removes again via its batch-mean subtraction.
    # NOTE: this cancellation is exact only because the convs are VALID and
    # BN2's stats are taken over exactly the trimmed valid region.
    del b1_ref
    cin, _, wp = x_ref.shape
    cout = o_ref.shape[0]

    # loop-invariant iotas for the valid-region masks (hoisted out of loops)
    row_iota = lax.broadcasted_iota(jnp.int32, (S, wp), 0)
    col_iota = lax.broadcasted_iota(jnp.int32, (S, wp), 1)

    def strip_loop(n_strips, body):
        def _body(s, carry):
            body(s)
            return carry
        lax.fori_loop(0, n_strips, _body, 0)

    def strip_mask(r0, valid_h, valid_w):
        return (row_iota < (valid_h - r0)) & (col_iota < valid_w)

    def zero_stats():
        for c in range(cout):
            ssum_ref[c] = jnp.zeros((1, wp), jnp.float32)
            ssq_ref[c] = jnp.zeros((1, wp), jnp.float32)

    def conv_strip(src_ref, r0, w_ref, in_scale=None):
        """Direct 3x3 VALID conv for one S-row strip, register-resident accs.

        kw shift = lane rotation (XLU) of the (S+2,Wp) input strip,
        kh shift = static slice of that rolled strip.  `in_scale[ci]` (traced
        scalar) rescales the loaded input strip once per channel (BN1 fold).
        Roll-wrap columns are garbage but only land in the region masked out
        of the BN statistics and trimmed in the wrapper.
        """
        accs = [None] * cout
        for ci in range(cin):
            strip = src_ref[ci, pl.ds(r0, S + K - 1), :]
            if in_scale is not None:
                strip = strip * in_scale[ci]
            for kw in range(K):
                rolled = strip if kw == 0 else pltpu.roll(
                    strip, shift=(wp - kw) % wp, axis=1)   # == roll by -kw
                for kh in range(K):
                    shifted = rolled[kh:kh + S, :]
                    for co in range(cout):
                        # PyTorch OIHW flat index
                        w = w_ref[((co * cin + ci) * K + kh) * K + kw]
                        t = w * shifted
                        accs[co] = t if accs[co] is None else accs[co] + t
        return accs

    def accumulate_stats(accs, mask):
        # fused BN partials: per-lane running sum / sum-of-squares
        for co in range(cout):
            m = jnp.where(mask, accs[co], 0.0)
            ssum_ref[co] = ssum_ref[co] + jnp.sum(m, axis=0, keepdims=True)
            ssq_ref[co] = ssq_ref[co] + jnp.sum(m * m, axis=0, keepdims=True)

    def finalize_stats(count):
        # one-pass biased variance (E[x^2] - mu^2); fp32 is ample for the
        # O(1)-scale activations this module produces.
        mus, rstds = [], []
        for co in range(cout):
            mu = jnp.sum(ssum_ref[co]) / count
            var = jnp.sum(ssq_ref[co]) / count - mu * mu
            mus.append(mu)
            rstds.append(lax.rsqrt(var + EPS))
        return mus, rstds

    # ---- pass 1: conv1 strips + fused BN1 stats -----------------------------
    zero_stats()
    vh1 = true_h - (K - 1)
    vw1 = true_w - (K - 1)

    def pass1(s):
        r0 = pl.multiple_of(s * S, S)
        accs = conv_strip(x_ref, r0, w1_ref)
        accumulate_stats(accs, strip_mask(r0, vh1, vw1))
        for co in range(cout):
            y1_ref[co, pl.ds(r0, S), :] = accs[co]

    strip_loop(n_strips1, pass1)

    _, rstd1 = finalize_stats(float(vh1 * vw1))          # mu1 cancels (see note)
    scale1 = [g1_ref[c] * rstd1[c] for c in range(cout)]

    # ---- pass 2: conv2 strips (BN1 scale folded into input) + BN2 stats -----
    zero_stats()
    vh2 = true_h - 2 * (K - 1)
    vw2 = true_w - 2 * (K - 1)

    def pass2(s):
        r0 = pl.multiple_of(s * S, S)
        accs = conv_strip(y1_ref, r0, w2_ref, in_scale=scale1)
        accumulate_stats(accs, strip_mask(r0, vh2, vw2))
        for co in range(cout):
            o_ref[co, pl.ds(r0, S), :] = accs[co]

    strip_loop(n_strips2, pass2)

    mu2, rstd2 = finalize_stats(float(vh2 * vw2))

    # ---- pass 3: in-place BN2 normalization of the output strips ------------
    a2 = [g2_ref[c] * rstd2[c] for c in range(cout)]
    c2 = [b2_ref[c] - mu2[c] * a2[c] for c in range(cout)]

    def pass3(s):
        r0 = pl.multiple_of(s * S, S)
        for co in range(cout):
            v = o_ref[co, pl.ds(r0, S), :]
            o_ref[co, pl.ds(r0, S), :] = (v * a2[co] + c2[co]).astype(o_ref.dtype)

    strip_loop(n_strips2, pass3)


def model_forward(x, w1, w2, g1, b1, g2, b2):
    """x: (1, C, H, W) fp32 (NCHW, like PyTorch). Returns (1, C, H-4, W-4)."""
    n, c, h, w = x.shape
    assert n == 1, "kernel is written for batch=1 (as in the reference module)"
    assert h > 2 * (K - 1) and w > 2 * (K - 1)

    n2 = -(-(h - 2 * (K - 1)) // S)   # conv2 output strips
    n1 = n2 + 1                       # conv1 strips (covers conv2's 2-row halo)
    r1 = n1 * S                       # y1 scratch rows
    r2 = n2 * S                       # output rows (rows trimmed in wrapper)
    hp_x = r1 + 8                     # padded input rows (>= n1*S + 2)
    wp = -(-w // 128) * 128           # lane-pad W -> lane-dense loads/stores
    xp = jnp.pad(x[0].astype(jnp.float32),
                 ((0, 0), (0, hp_x - h), (0, wp - w)))

    vmem_bytes = 4 * wp * c * (hp_x + r1 + r2 + 4) + (1 << 20)
    vmem_limit = int(min(max(2 * vmem_bytes, 16 << 20), 64 << 20))

    kernel = functools.partial(fused_conv_bn_kernel, true_h=h, true_w=w,
                               n_strips1=n1, n_strips2=n2)
    out = pl.pallas_call(
        kernel,
        out_shape=jax.ShapeDtypeStruct((c, r2, wp), jnp.float32),
        in_specs=[
            pl.BlockSpec(memory_space=pltpu.MemorySpace.VMEM),   # x (C,Hx,Wp)
            pl.BlockSpec(memory_space=pltpu.MemorySpace.SMEM),   # w1 flat (81,)
            pl.BlockSpec(memory_space=pltpu.MemorySpace.SMEM),   # w2 flat (81,)
            pl.BlockSpec(memory_space=pltpu.MemorySpace.SMEM),   # gamma1 (C,)
            pl.BlockSpec(memory_space=pltpu.MemorySpace.SMEM),   # beta1  (C,)
            pl.BlockSpec(memory_space=pltpu.MemorySpace.SMEM),   # gamma2 (C,)
            pl.BlockSpec(memory_space=pltpu.MemorySpace.SMEM),   # beta2  (C,)
        ],
        out_specs=pl.BlockSpec(memory_space=pltpu.MemorySpace.VMEM),
        scratch_shapes=[
            pltpu.VMEM((c, r1, wp), jnp.float32),    # y1 (conv1 output)
            pltpu.VMEM((c, 1, wp), jnp.float32),     # per-lane BN sum partials
            pltpu.VMEM((c, 1, wp), jnp.float32),     # per-lane BN sumsq partials
        ],
        compiler_params=pltpu.CompilerParams(vmem_limit_bytes=vmem_limit),
    )(xp,
      w1.reshape(-1).astype(jnp.float32),
      w2.reshape(-1).astype(jnp.float32),
      g1.astype(jnp.float32), b1.astype(jnp.float32),
      g2.astype(jnp.float32), b2.astype(jnp.float32))
    # trim padded rows and the padded / wrap-garbage columns
    return out[:, :h - 2 * (K - 1), :w - 2 * (K - 1)][None]


def reference_forward(x, w1, w2, g1, b1, g2, b2):
    """Pure-JAX reference (lax conv + training-mode BN) for verification."""
    def conv(t, w):
        return jax.lax.conv_general_dilated(
            t, w, (1, 1), "VALID",
            dimension_numbers=("NCHW", "OIHW", "NCHW"),
            precision=jax.lax.Precision.HIGHEST)

    def bn(t, g, b):
        mu = t.mean(axis=(0, 2, 3), keepdims=True)
        var = ((t - mu) ** 2).mean(axis=(0, 2, 3), keepdims=True)
        return ((t - mu) * jax.lax.rsqrt(var + EPS)
                * g.reshape(1, -1, 1, 1) + b.reshape(1, -1, 1, 1))

    y = bn(conv(x, w1), g1, b1)
    y = bn(conv(y, w2), g2, b2)
    return y


if __name__ == "__main__":
    key = jax.random.PRNGKey(0)
    kx, k1, k2 = jax.random.split(key, 3)

    C = 3
    H = W = 32  # small stand-in for the module's 224x224 input
    x = jax.random.normal(kx, (1, C, H, W), dtype=jnp.float32)

    # Deterministic parameter init (synthetic; shapes match the PyTorch module)
    fan_in = C * K * K
    bound = 1.0 / (fan_in ** 0.5)
    w1 = jax.random.uniform(k1, (C, C, K, K), jnp.float32, -bound, bound)
    w2 = jax.random.uniform(k2, (C, C, K, K), jnp.float32, -bound, bound)
    g1 = jnp.ones((C,), jnp.float32)
    b1 = jnp.zeros((C,), jnp.float32)
    g2 = jnp.ones((C,), jnp.float32)
    b2 = jnp.zeros((C,), jnp.float32)

    out = model_forward(x, w1, w2, g1, b1, g2, b2)
    out = jax.block_until_ready(out)

    ref = jax.block_until_ready(reference_forward(x, w1, w2, g1, b1, g2, b2))
    assert out.shape == (1, C, H - 4, W - 4), out.shape
    assert jnp.allclose(out, ref, atol=1e-4, rtol=1e-4), float(
        jnp.max(jnp.abs(out - ref)))

    print("KERNEL_OK")
</pallas_src>

<mosaic_0001>
module attributes {stable_mosaic.version = 11 : i64} {
  func.func @fused_conv_bn_kernel(%arg0: memref<3x48x128xf32, #tpu.memory_space<vmem>>, %arg1: memref<81xf32, #tpu.memory_space<smem>>, %arg2: memref<81xf32, #tpu.memory_space<smem>>, %arg3: memref<3xf32, #tpu.memory_space<smem>>, %arg4: memref<3xf32, #tpu.memory_space<smem>>, %arg5: memref<3xf32, #tpu.memory_space<smem>>, %arg6: memref<3xf32, #tpu.memory_space<smem>>, %arg7: memref<3x32x128xf32, #tpu.memory_space<vmem>>, %arg8: memref<3x40x128xf32, #tpu.memory_space<vmem>>, %arg9: memref<3x1x128xf32, #tpu.memory_space<vmem>>, %arg10: memref<3x1x128xf32, #tpu.memory_space<vmem>>) attributes {dimension_semantics = [], scalar_prefetch = 0 : i64, scratch_operands = 3 : i64, tpu.core_type = #tpu.core_type<tc>} {
    %0 = tpu.iota {dimensions = array<i32: 0>} : vector<8x128xi32>
    %1 = tpu.iota {dimensions = array<i32: 1>} : vector<8x128xi32>
    %cst = arith.constant 0.000000e+00 : f32
    %2 = vector.broadcast %cst : f32 to vector<1x128xf32>
    %c0 = arith.constant 0 : index
    %c0_0 = arith.constant 0 : index
    %c0_1 = arith.constant 0 : index
    %3 = vector.load %arg9[%c0, %c0_0, %c0_1] : memref<3x1x128xf32, #tpu.memory_space<vmem>>, vector<1x1x128xf32>
    %4 = vector.shape_cast %3 : vector<1x1x128xf32> to vector<1x128xf32>
    %5 = vector.shape_cast %2 : vector<1x128xf32> to vector<1x1x128xf32>
    tpu.vector_store %arg9[%c0, %c0_0, %c0_1], %5 {strides = array<i32>} : memref<3x1x128xf32, #tpu.memory_space<vmem>>, vector<1x1x128xf32>,
    %cst_2 = arith.constant 0.000000e+00 : f32
    %6 = vector.broadcast %cst_2 : f32 to vector<1x128xf32>
    %c0_3 = arith.constant 0 : index
    %c0_4 = arith.constant 0 : index
    %c0_5 = arith.constant 0 : index
    %7 = vector.load %arg10[%c0_3, %c0_4, %c0_5] : memref<3x1x128xf32, #tpu.memory_space<vmem>>, vector<1x1x128xf32>
    %8 = vector.shape_cast %7 : vector<1x1x128xf32> to vector<1x128xf32>
    %9 = vector.shape_cast %6 : vector<1x128xf32> to vector<1x1x128xf32>
    tpu.vector_store %arg10[%c0_3, %c0_4, %c0_5], %9 {strides = array<i32>} : memref<3x1x128xf32, #tpu.memory_space<vmem>>, vector<1x1x128xf32>,
    %cst_6 = arith.constant 0.000000e+00 : f32
    %10 = vector.broadcast %cst_6 : f32 to vector<1x128xf32>
    %c1 = arith.constant 1 : index
    %c0_7 = arith.constant 0 : index
    %c0_8 = arith.constant 0 : index
    %11 = vector.load %arg9[%c1, %c0_7, %c0_8] : memref<3x1x128xf32, #tpu.memory_space<vmem>>, vector<1x1x128xf32>
    %12 = vector.shape_cast %11 : vector<1x1x128xf32> to vector<1x128xf32>
    %13 = vector.shape_cast %10 : vector<1x128xf32> to vector<1x1x128xf32>
    tpu.vector_store %arg9[%c1, %c0_7, %c0_8], %13 {strides = array<i32>} : memref<3x1x128xf32, #tpu.memory_space<vmem>>, vector<1x1x128xf32>,
    %cst_9 = arith.constant 0.000000e+00 : f32
    %14 = vector.broadcast %cst_9 : f32 to vector<1x128xf32>
    %c1_10 = arith.constant 1 : index
    %c0_11 = arith.constant 0 : index
    %c0_12 = arith.constant 0 : index
    %15 = vector.load %arg10[%c1_10, %c0_11, %c0_12] : memref<3x1x128xf32, #tpu.memory_space<vmem>>, vector<1x1x128xf32>
    %16 = vector.shape_cast %15 : vector<1x1x128xf32> to vector<1x128xf32>
    %17 = vector.shape_cast %14 : vector<1x128xf32> to vector<1x1x128xf32>
    tpu.vector_store %arg10[%c1_10, %c0_11, %c0_12], %17 {strides = array<i32>} : memref<3x1x128xf32, #tpu.memory_space<vmem>>, vector<1x1x128xf32>,
    %cst_13 = arith.constant 0.000000e+00 : f32
    %18 = vector.broadcast %cst_13 : f32 to vector<1x128xf32>
    %c2 = arith.constant 2 : index
    %c0_14 = arith.constant 0 : index
    %c0_15 = arith.constant 0 : index
    %19 = vector.load %arg9[%c2, %c0_14, %c0_15] : memref<3x1x128xf32, #tpu.memory_space<vmem>>, vector<1x1x128xf32>
    %20 = vector.shape_cast %19 : vector<1x1x128xf32> to vector<1x128xf32>
    %21 = vector.shape_cast %18 : vector<1x128xf32> to vector<1x1x128xf32>
    tpu.vector_store %arg9[%c2, %c0_14, %c0_15], %21 {strides = array<i32>} : memref<3x1x128xf32, #tpu.memory_space<vmem>>, vector<1x1x128xf32>,
    %cst_16 = arith.constant 0.000000e+00 : f32
    %22 = vector.broadcast %cst_16 : f32 to vector<1x128xf32>
    %c2_17 = arith.constant 2 : index
    %c0_18 = arith.constant 0 : index
    %c0_19 = arith.constant 0 : index
    %23 = vector.load %arg10[%c2_17, %c0_18, %c0_19] : memref<3x1x128xf32, #tpu.memory_space<vmem>>, vector<1x1x128xf32>
    %24 = vector.shape_cast %23 : vector<1x1x128xf32> to vector<1x128xf32>
    %25 = vector.shape_cast %22 : vector<1x128xf32> to vector<1x1x128xf32>
    tpu.vector_store %arg10[%c2_17, %c0_18, %c0_19], %25 {strides = array<i32>} : memref<3x1x128xf32, #tpu.memory_space<vmem>>, vector<1x1x128xf32>,
    %c0_i32 = arith.constant 0 : i32
    %c5_i32 = arith.constant 5 : i32
    %26 = arith.addi %c0_i32, %c5_i32 : i32
    %c1_i32 = arith.constant 1 : i32
    scf.for %arg11 = %c0_i32 to %26 step %c1_i32  : i32 {
      %c8_i32 = arith.constant 8 : i32
      %182 = arith.muli %arg11, %c8_i32 : i32
      %183 = tpu.assume_multiple %182, 8 : i32
      %c0_127 = arith.constant 0 : index
      %184 = arith.index_cast %183 : i32 to index
      %c0_128 = arith.constant 0 : index
      %185 = vector.load %arg0[%c0_127, %184, %c0_128] : memref<3x48x128xf32, #tpu.memory_space<vmem>>, vector<1x10x128xf32>
      %186 = vector.shape_cast %185 : vector<1x10x128xf32> to vector<10x128xf32>
      %187 = vector.extract_strided_slice %186 {offsets = [0, 0], sizes = [8, 128], strides = [1, 1]} : vector<10x128xf32> to vector<8x128xf32>
      %c0_129 = arith.constant 0 : index
      %188 = memref.load %arg1[%c0_129] : memref<81xf32, #tpu.memory_space<smem>>
      %189 = vector.broadcast %188 : f32 to vector<8x128xf32>
      %190 = arith.mulf %189, %187 : vector<8x128xf32>
      %c27 = arith.constant 27 : index
      %191 = memref.load %arg1[%c27] : memref<81xf32, #tpu.memory_space<smem>>
      %192 = vector.broadcast %191 : f32 to vector<8x128xf32>
      %193 = arith.mulf %192, %187 : vector<8x128xf32>
      %c54 = arith.constant 54 : index
      %194 = memref.load %arg1[%c54] : memref<81xf32, #tpu.memory_space<smem>>
      %195 = vector.broadcast %194 : f32 to vector<8x128xf32>
      %196 = arith.mulf %195, %187 : vector<8x128xf32>
      %197 = vector.extract_strided_slice %186 {offsets = [1, 0], sizes = [8, 128], strides = [1, 1]} : vector<10x128xf32> to vector<8x128xf32>
      %c3 = arith.constant 3 : index
      %198 = memref.load %arg1[%c3] : memref<81xf32, #tpu.memory_space<smem>>
      %199 = vector.broadcast %198 : f32 to vector<8x128xf32>
      %200 = arith.mulf %199, %197 : vector<8x128xf32>
      %201 = arith.addf %190, %200 : vector<8x128xf32>
      %c30 = arith.constant 30 : index
      %202 = memref.load %arg1[%c30] : memref<81xf32, #tpu.memory_space<smem>>
      %203 = vector.broadcast %202 : f32 to vector<8x128xf32>
      %204 = arith.mulf %203, %197 : vector<8x128xf32>
      %205 = arith.addf %193, %204 : vector<8x128xf32>
      %c57 = arith.constant 57 : index
      %206 = memref.load %arg1[%c57] : memref<81xf32, #tpu.memory_space<smem>>
      %207 = vector.broadcast %206 : f32 to vector<8x128xf32>
      %208 = arith.mulf %207, %197 : vector<8x128xf32>
      %209 = arith.addf %196, %208 : vector<8x128xf32>
      %210 = vector.extract_strided_slice %186 {offsets = [2, 0], sizes = [8, 128], strides = [1, 1]} : vector<10x128xf32> to vector<8x128xf32>
      %c6 = arith.constant 6 : index
      %211 = memref.load %arg1[%c6] : memref<81xf32, #tpu.memory_space<smem>>
      %212 = vector.broadcast %211 : f32 to vector<8x128xf32>
      %213 = arith.mulf %212, %210 : vector<8x128xf32>
      %214 = arith.addf %201, %213 : vector<8x128xf32>
      %c33 = arith.constant 33 : index
      %215 = memref.load %arg1[%c33] : memref<81xf32, #tpu.memory_space<smem>>
      %216 = vector.broadcast %215 : f32 to vector<8x128xf32>
      %217 = arith.mulf %216, %210 : vector<8x128xf32>
      %218 = arith.addf %205, %217 : vector<8x128xf32>
      %c60 = arith.constant 60 : index
      %219 = memref.load %arg1[%c60] : memref<81xf32, #tpu.memory_space<smem>>
      %220 = vector.broadcast %219 : f32 to vector<8x128xf32>
      %221 = arith.mulf %220, %210 : vector<8x128xf32>
      %222 = arith.addf %209, %221 : vector<8x128xf32>
      %c127_i32 = arith.constant 127 : i32
      %223 = tpu.dynamic_rotate %186 by %c127_i32 dim 1 : vector<10x128xf32>, i32 -> vector<10x128xf32>
      %224 = vector.extract_strided_slice %223 {offsets = [0, 0], sizes = [8, 128], strides = [1, 1]} : vector<10x128xf32> to vector<8x128xf32>
      %c1_130 = arith.constant 1 : index
      %225 = memref.load %arg1[%c1_130] : memref<81xf32, #tpu.memory_space<smem>>
      %226 = vector.broadcast %225 : f32 to vector<8x128xf32>
      %227 = arith.mulf %226, %224 : vector<8x128xf32>
      %228 = arith.addf %214, %227 : vector<8x128xf32>
      %c28 = arith.constant 28 : index
      %229 = memref.load %arg1[%c28] : memref<81xf32, #tpu.memory_space<smem>>
      %230 = vector.broadcast %229 : f32 to vector<8x128xf32>
      %231 = arith.mulf %230, %224 : vector<8x128xf32>
      %232 = arith.addf %218, %231 : vector<8x128xf32>
      %c55 = arith.constant 55 : index
      %233 = memref.load %arg1[%c55] : memref<81xf32, #tpu.memory_space<smem>>
      %234 = vector.broadcast %233 : f32 to vector<8x128xf32>
      %235 = arith.mulf %234, %224 : vector<8x128xf32>
      %236 = arith.addf %222, %235 : vector<8x128xf32>
      %237 = vector.extract_strided_slice %223 {offsets = [1, 0], sizes = [8, 128], strides = [1, 1]} : vector<10x128xf32> to vector<8x128xf32>
      %c4 = arith.constant 4 : index
      %238 = memref.load %arg1[%c4] : memref<81xf32, #tpu.memory_space<smem>>
      %239 = vector.broadcast %238 : f32 to vector<8x128xf32>
      %240 = arith.mulf %239, %237 : vector<8x128xf32>
      %241 = arith.addf %228, %240 : vector<8x128xf32>
      %c31 = arith.constant 31 : index
      %242 = memref.load %arg1[%c31] : memref<81xf32, #tpu.memory_space<smem>>
      %243 = vector.broadcast %242 : f32 to vector<8x128xf32>
      %244 = arith.mulf %243, %237 : vector<8x128xf32>
      %245 = arith.addf %232, %244 : vector<8x128xf32>
      %c58 = arith.constant 58 : index
      %246 = memref.load %arg1[%c58] : memref<81xf32, #tpu.memory_space<smem>>
      %247 = vector.broadcast %246 : f32 to vector<8x128xf32>
      %248 = arith.mulf %247, %237 : vector<8x128xf32>
      %249 = arith.addf %236, %248 : vector<8x128xf32>
      %250 = vector.extract_strided_slice %223 {offsets = [2, 0], sizes = [8, 128], strides = [1, 1]} : vector<10x128xf32> to vector<8x128xf32>
      %c7 = arith.constant 7 : index
      %251 = memref.load %arg1[%c7] : memref<81xf32, #tpu.memory_space<smem>>
      %252 = vector.broadcast %251 : f32 to vector<8x128xf32>
      %253 = arith.mulf %252, %250 : vector<8x128xf32>
      %254 = arith.addf %241, %253 : vector<8x128xf32>
      %c34 = arith.constant 34 : index
      %255 = memref.load %arg1[%c34] : memref<81xf32, #tpu.memory_space<smem>>
      %256 = vector.broadcast %255 : f32 to vector<8x128xf32>
      %257 = arith.mulf %256, %250 : vector<8x128xf32>
      %258 = arith.addf %245, %257 : vector<8x128xf32>
      %c61 = arith.constant 61 : index
      %259 = memref.load %arg1[%c61] : memref<81xf32, #tpu.memory_space<smem>>
      %260 = vector.broadcast %259 : f32 to vector<8x128xf32>
      %261 = arith.mulf %260, %250 : vector<8x128xf32>
      %262 = arith.addf %249, %261 : vector<8x128xf32>
      %c126_i32 = arith.constant 126 : i32
      %263 = tpu.dynamic_rotate %186 by %c126_i32 dim 1 : vector<10x128xf32>, i32 -> vector<10x128xf32>
      %264 = vector.extract_strided_slice %263 {offsets = [0, 0], sizes = [8, 128], strides = [1, 1]} : vector<10x128xf32> to vector<8x128xf32>
      %c2_131 = arith.constant 2 : index
      %265 = memref.load %arg1[%c2_131] : memref<81xf32, #tpu.memory_space<smem>>
      %266 = vector.broadcast %265 : f32 to vector<8x128xf32>
      %267 = arith.mulf %266, %264 : vector<8x128xf32>
      %268 = arith.addf %254, %267 : vector<8x128xf32>
      %c29 = arith.constant 29 : index
      %269 = memref.load %arg1[%c29] : memref<81xf32, #tpu.memory_space<smem>>
      %270 = vector.broadcast %269 : f32 to vector<8x128xf32>
      %271 = arith.mulf %270, %264 : vector<8x128xf32>
      %272 = arith.addf %258, %271 : vector<8x128xf32>
      %c56 = arith.constant 56 : index
      %273 = memref.load %arg1[%c56] : memref<81xf32, #tpu.memory_space<smem>>
      %274 = vector.broadcast %273 : f32 to vector<8x128xf32>
      %275 = arith.mulf %274, %264 : vector<8x128xf32>
      %276 = arith.addf %262, %275 : vector<8x128xf32>
      %277 = vector.extract_strided_slice %263 {offsets = [1, 0], sizes = [8, 128], strides = [1, 1]} : vector<10x128xf32> to vector<8x128xf32>
      %c5 = arith.constant 5 : index
      %278 = memref.load %arg1[%c5] : memref<81xf32, #tpu.memory_space<smem>>
      %279 = vector.broadcast %278 : f32 to vector<8x128xf32>
      %280 = arith.mulf %279, %277 : vector<8x128xf32>
      %281 = arith.addf %268, %280 : vector<8x128xf32>
      %c32 = arith.constant 32 : index
      %282 = memref.load %arg1[%c32] : memref<81xf32, #tpu.memory_space<smem>>
      %283 = vector.broadcast %282 : f32 to vector<8x128xf32>
      %284 = arith.mulf %283, %277 : vector<8x128xf32>
      %285 = arith.addf %272, %284 : vector<8x128xf32>
      %c59 = arith.constant 59 : index
      %286 = memref.load %arg1[%c59] : memref<81xf32, #tpu.memory_space<smem>>
      %287 = vector.broadcast %286 : f32 to vector<8x128xf32>
      %288 = arith.mulf %287, %277 : vector<8x128xf32>
      %289 = arith.addf %276, %288 : vector<8x128xf32>
      %290 = vector.extract_strided_slice %263 {offsets = [2, 0], sizes = [8, 128], strides = [1, 1]} : vector<10x128xf32> to vector<8x128xf32>
      %c8 = arith.constant 8 : index
      %291 = memref.load %arg1[%c8] : memref<81xf32, #tpu.memory_space<smem>>
      %292 = vector.broadcast %291 : f32 to vector<8x128xf32>
      %293 = arith.mulf %292, %290 : vector<8x128xf32>
      %294 = arith.addf %281, %293 : vector<8x128xf32>
      %c35 = arith.constant 35 : index
      %295 = memref.load %arg1[%c35] : memref<81xf32, #tpu.memory_space<smem>>
      %296 = vector.broadcast %295 : f32 to vector<8x128xf32>
      %297 = arith.mulf %296, %290 : vector<8x128xf32>
      %298 = arith.addf %285, %297 : vector<8x128xf32>
      %c62 = arith.constant 62 : index
      %299 = memref.load %arg1[%c62] : memref<81xf32, #tpu.memory_space<smem>>
      %300 = vector.broadcast %299 : f32 to vector<8x128xf32>
      %301 = arith.mulf %300, %290 : vector<8x128xf32>
      %302 = arith.addf %289, %301 : vector<8x128xf32>
      %c1_132 = arith.constant 1 : index
      %303 = arith.index_cast %183 : i32 to index
      %c0_133 = arith.constant 0 : index
      %304 = vector.load %arg0[%c1_132, %303, %c0_133] : memref<3x48x128xf32, #tpu.memory_space<vmem>>, vector<1x10x128xf32>
      %305 = vector.shape_cast %304 : vector<1x10x128xf32> to vector<10x128xf32>
      %306 = vector.extract_strided_slice %305 {offsets = [0, 0], sizes = [8, 128], strides = [1, 1]} : vector<10x128xf32> to vector<8x128xf32>
      %c9 = arith.constant 9 : index
      %307 = memref.load %arg1[%c9] : memref<81xf32, #tpu.memory_space<smem>>
      %308 = vector.broadcast %307 : f32 to vector<8x128xf32>
      %309 = arith.mulf %308, %306 : vector<8x128xf32>
      %310 = arith.addf %294, %309 : vector<8x128xf32>
      %c36 = arith.constant 36 : index
      %311 = memref.load %arg1[%c36] : memref<81xf32, #tpu.memory_space<smem>>
      %312 = vector.broadcast %311 : f32 to vector<8x128xf32>
      %313 = arith.mulf %312, %306 : vector<8x128xf32>
      %314 = arith.addf %298, %313 : vector<8x128xf32>
      %c63 = arith.constant 63 : index
      %315 = memref.load %arg1[%c63] : memref<81xf32, #tpu.memory_space<smem>>
      %316 = vector.broadcast %315 : f32 to vector<8x128xf32>
      %317 = arith.mulf %316, %306 : vector<8x128xf32>
      %318 = arith.addf %302, %317 : vector<8x128xf32>
      %319 = vector.extract_strided_slice %305 {offsets = [1, 0], sizes = [8, 128], strides = [1, 1]} : vector<10x128xf32> to vector<8x128xf32>
      %c12 = arith.constant 12 : index
      %320 = memref.load %arg1[%c12] : memref<81xf32, #tpu.memory_space<smem>>
      %321 = vector.broadcast %320 : f32 to vector<8x128xf32>
      %322 = arith.mulf %321, %319 : vector<8x128xf32>
      %323 = arith.addf %310, %322 : vector<8x128xf32>
      %c39 = arith.constant 39 : index
      %324 = memref.load %arg1[%c39] : memref<81xf32, #tpu.memory_space<smem>>
      %325 = vector.broadcast %324 : f32 to vector<8x128xf32>
      %326 = arith.mulf %325, %319 : vector<8x128xf32>
      %327 = arith.addf %314, %326 : vector<8x128xf32>
      %c66 = arith.constant 66 : index
      %328 = memref.load %arg1[%c66] : memref<81xf32, #tpu.memory_space<smem>>
      %329 = vector.broadcast %328 : f32 to vector<8x128xf32>
      %330 = arith.mulf %329, %319 : vector<8x128xf32>
      %331 = arith.addf %318, %330 : vector<8x128xf32>
      %332 = vector.extract_strided_slice %305 {offsets = [2, 0], sizes = [8, 128], strides = [1, 1]} : vector<10x128xf32> to vector<8x128xf32>
      %c15 = arith.constant 15 : index
      %333 = memref.load %arg1[%c15] : memref<81xf32, #tpu.memory_space<smem>>
      %334 = vector.broadcast %333 : f32 to vector<8x128xf32>
      %335 = arith.mulf %334, %332 : vector<8x128xf32>
      %336 = arith.addf %323, %335 : vector<8x128xf32>
      %c42 = arith.constant 42 : index
      %337 = memref.load %arg1[%c42] : memref<81xf32, #tpu.memory_space<smem>>
      %338 = vector.broadcast %337 : f32 to vector<8x128xf32>
      %339 = arith.mulf %338, %332 : vector<8x128xf32>
      %340 = arith.addf %327, %339 : vector<8x128xf32>
      %c69 = arith.constant 69 : index
      %341 = memref.load %arg1[%c69] : memref<81xf32, #tpu.memory_space<smem>>
      %342 = vector.broadcast %341 : f32 to vector<8x128xf32>
      %343 = arith.mulf %342, %332 : vector<8x128xf32>
      %344 = arith.addf %331, %343 : vector<8x128xf32>
      %c127_i32_134 = arith.constant 127 : i32
      %345 = tpu.dynamic_rotate %305 by %c127_i32_134 dim 1 : vector<10x128xf32>, i32 -> vector<10x128xf32>
      %346 = vector.extract_strided_slice %345 {offsets = [0, 0], sizes = [8, 128], strides = [1, 1]} : vector<10x128xf32> to vector<8x128xf32>
      %c10 = arith.constant 10 : index
      %347 = memref.load %arg1[%c10] : memref<81xf32, #tpu.memory_space<smem>>
      %348 = vector.broadcast %347 : f32 to vector<8x128xf32>
      %349 = arith.mulf %348, %346 : vector<8x128xf32>
      %350 = arith.addf %336, %349 : vector<8x128xf32>
      %c37 = arith.constant 37 : index
      %351 = memref.load %arg1[%c37] : memref<81xf32, #tpu.memory_space<smem>>
      %352 = vector.broadcast %351 : f32 to vector<8x128xf32>
      %353 = arith.mulf %352, %346 : vector<8x128xf32>
      %354 = arith.addf %340, %353 : vector<8x128xf32>
      %c64 = arith.constant 64 : index
      %355 = memref.load %arg1[%c64] : memref<81xf32, #tpu.memory_space<smem>>
      %356 = vector.broadcast %355 : f32 to vector<8x128xf32>
      %357 = arith.mulf %356, %346 : vector<8x128xf32>
      %358 = arith.addf %344, %357 : vector<8x128xf32>
      %359 = vector.extract_strided_slice %345 {offsets = [1, 0], sizes = [8, 128], strides = [1, 1]} : vector<10x128xf32> to vector<8x128xf32>
      %c13 = arith.constant 13 : index
      %360 = memref.load %arg1[%c13] : memref<81xf32, #tpu.memory_space<smem>>
      %361 = vector.broadcast %360 : f32 to vector<8x128xf32>
      %362 = arith.mulf %361, %359 : vector<8x128xf32>
      %363 = arith.addf %350, %362 : vector<8x128xf32>
      %c40 = arith.constant 40 : index
      %364 = memref.load %arg1[%c40] : memref<81xf32, #tpu.memory_space<smem>>
      %365 = vector.broadcast %364 : f32 to vector<8x128xf32>
      %366 = arith.mulf %365, %359 : vector<8x128xf32>
      %367 = arith.addf %354, %366 : vector<8x128xf32>
      %c67 = arith.constant 67 : index
      %368 = memref.load %arg1[%c67] : memref<81xf32, #tpu.memory_space<smem>>
      %369 = vector.broadcast %368 : f32 to vector<8x128xf32>
      %370 = arith.mulf %369, %359 : vector<8x128xf32>
      %371 = arith.addf %358, %370 : vector<8x128xf32>
      %372 = vector.extract_strided_slice %345 {offsets = [2, 0], sizes = [8, 128], strides = [1, 1]} : vector<10x128xf32> to vector<8x128xf32>
      %c16 = arith.constant 16 : index
      %373 = memref.load %arg1[%c16] : memref<81xf32, #tpu.memory_space<smem>>
      %374 = vector.broadcast %373 : f32 to vector<8x128xf32>
      %375 = arith.mulf %374, %372 : vector<8x128xf32>
      %376 = arith.addf %363, %375 : vector<8x128xf32>
      %c43 = arith.constant 43 : index
      %377 = memref.load %arg1[%c43] : memref<81xf32, #tpu.memory_space<smem>>
      %378 = vector.broadcast %377 : f32 to vector<8x128xf32>
      %379 = arith.mulf %378, %372 : vector<8x128xf32>
      %380 = arith.addf %367, %379 : vector<8x128xf32>
      %c70 = arith.constant 70 : index
      %381 = memref.load %arg1[%c70] : memref<81xf32, #tpu.memory_space<smem>>
      %382 = vector.broadcast %381 : f32 to vector<8x128xf32>
      %383 = arith.mulf %382, %372 : vector<8x128xf32>
      %384 = arith.addf %371, %383 : vector<8x128xf32>
      %c126_i32_135 = arith.constant 126 : i32
      %385 = tpu.dynamic_rotate %305 by %c126_i32_135 dim 1 : vector<10x128xf32>, i32 -> vector<10x128xf32>
      %386 = vector.extract_strided_slice %385 {offsets = [0, 0], sizes = [8, 128], strides = [1, 1]} : vector<10x128xf32> to vector<8x128xf32>
      %c11 = arith.constant 11 : index
      %387 = memref.load %arg1[%c11] : memref<81xf32, #tpu.memory_space<smem>>
      %388 = vector.broadcast %387 : f32 to vector<8x128xf32>
      %389 = arith.mulf %388, %386 : vector<8x128xf32>
      %390 = arith.addf %376, %389 : vector<8x128xf32>
      %c38 = arith.constant 38 : index
      %391 = memref.load %arg1[%c38] : memref<81xf32, #tpu.memory_space<smem>>
      %392 = vector.broadcast %391 : f32 to vector<8x128xf32>
      %393 = arith.mulf %392, %386 : vector<8x128xf32>
      %394 = arith.addf %380, %393 : vector<8x128xf32>
      %c65 = arith.constant 65 : index
      %395 = memref.load %arg1[%c65] : memref<81xf32, #tpu.memory_space<smem>>
      %396 = vector.broadcast %395 : f32 to vector<8x128xf32>
      %397 = arith.mulf %396, %386 : vector<8x128xf32>
      %398 = arith.addf %384, %397 : vector<8x128xf32>
      %399 = vector.extract_strided_slice %385 {offsets = [1, 0], sizes = [8, 128], strides = [1, 1]} : vector<10x128xf32> to vector<8x128xf32>
      %c14 = arith.constant 14 : index
      %400 = memref.load %arg1[%c14] : memref<81xf32, #tpu.memory_space<smem>>
      %401 = vector.broadcast %400 : f32 to vector<8x128xf32>
      %402 = arith.mulf %401, %399 : vector<8x128xf32>
      %403 = arith.addf %390, %402 : vector<8x128xf32>
      %c41 = arith.constant 41 : index
      %404 = memref.load %arg1[%c41] : memref<81xf32, #tpu.memory_space<smem>>
      %405 = vector.broadcast %404 : f32 to vector<8x128xf32>
      %406 = arith.mulf %405, %399 : vector<8x128xf32>
      %407 = arith.addf %394, %406 : vector<8x128xf32>
      %c68 = arith.constant 68 : index
      %408 = memref.load %arg1[%c68] : memref<81xf32, #tpu.memory_space<smem>>
      %409 = vector.broadcast %408 : f32 to vector<8x128xf32>
      %410 = arith.mulf %409, %399 : vector<8x128xf32>
      %411 = arith.addf %398, %410 : vector<8x128xf32>
      %412 = vector.extract_strided_slice %385 {offsets = [2, 0], sizes = [8, 128], strides = [1, 1]} : vector<10x128xf32> to vector<8x128xf32>
      %c17 = arith.constant 17 : index
      %413 = memref.load %arg1[%c17] : memref<81xf32, #tpu.memory_space<smem>>
      %414 = vector.broadcast %413 : f32 to vector<8x128xf32>
      %415 = arith.mulf %414, %412 : vector<8x128xf32>
      %416 = arith.addf %403, %415 : vector<8x128xf32>
      %c44 = arith.constant 44 : index
      %417 = memref.load %arg1[%c44] : memref<81xf32, #tpu.memory_space<smem>>
      %418 = vector.broadcast %417 : f32 to vector<8x128xf32>
      %419 = arith.mulf %418, %412 : vector<8x128xf32>
      %420 = arith.addf %407, %419 : vector<8x128xf32>
      %c71 = arith.constant 71 : index
      %421 = memref.load %arg1[%c71] : memref<81xf32, #tpu.memory_space<smem>>
      %422 = vector.broadcast %421 : f32 to vector<8x128xf32>
      %423 = arith.mulf %422, %412 : vector<8x128xf32>
      %424 = arith.addf %411, %423 : vector<8x128xf32>
      %c2_136 = arith.constant 2 : index
      %425 = arith.index_cast %183 : i32 to index
      %c0_137 = arith.constant 0 : index
      %426 = vector.load %arg0[%c2_136, %425, %c0_137] : memref<3x48x128xf32, #tpu.memory_space<vmem>>, vector<1x10x128xf32>
      %427 = vector.shape_cast %426 : vector<1x10x128xf32> to vector<10x128xf32>
      %428 = vector.extract_strided_slice %427 {offsets = [0, 0], sizes = [8, 128], strides = [1, 1]} : vector<10x128xf32> to vector<8x128xf32>
      %c18 = arith.constant 18 : index
      %429 = memref.load %arg1[%c18] : memref<81xf32, #tpu.memory_space<smem>>
      %430 = vector.broadcast %429 : f32 to vector<8x128xf32>
      %431 = arith.mulf %430, %428 : vector<8x128xf32>
      %432 = arith.addf %416, %431 : vector<8x128xf32>
      %c45 = arith.constant 45 : index
      %433 = memref.load %arg1[%c45] : memref<81xf32, #tpu.memory_space<smem>>
      %434 = vector.broadcast %433 : f32 to vector<8x128xf32>
      %435 = arith.mulf %434, %428 : vector<8x128xf32>
      %436 = arith.addf %420, %435 : vector<8x128xf32>
      %c72 = arith.constant 72 : index
      %437 = memref.load %arg1[%c72] : memref<81xf32, #tpu.memory_space<smem>>
      %438 = vector.broadcast %437 : f32 to vector<8x128xf32>
      %439 = arith.mulf %438, %428 : vector<8x128xf32>
      %440 = arith.addf %424, %439 : vector<8x128xf32>
      %441 = vector.extract_strided_slice %427 {offsets = [1, 0], sizes = [8, 128], strides = [1, 1]} : vector<10x128xf32> to vector<8x128xf32>
      %c21 = arith.constant 21 : index
      %442 = memref.load %arg1[%c21] : memref<81xf32, #tpu.memory_space<smem>>
      %443 = vector.broadcast %442 : f32 to vector<8x128xf32>
      %444 = arith.mulf %443, %441 : vector<8x128xf32>
      %445 = arith.addf %432, %444 : vector<8x128xf32>
      %c48 = arith.constant 48 : index
      %446 = memref.load %arg1[%c48] : memref<81xf32, #tpu.memory_space<smem>>
      %447 = vector.broadcast %446 : f32 to vector<8x128xf32>
      %448 = arith.mulf %447, %441 : vector<8x128xf32>
      %449 = arith.addf %436, %448 : vector<8x128xf32>
      %c75 = arith.constant 75 : index
      %450 = memref.load %arg1[%c75] : memref<81xf32, #tpu.memory_space<smem>>
      %451 = vector.broadcast %450 : f32 to vector<8x128xf32>
      %452 = arith.mulf %451, %441 : vector<8x128xf32>
      %453 = arith.addf %440, %452 : vector<8x128xf32>
      %454 = vector.extract_strided_slice %427 {offsets = [2, 0], sizes = [8, 128], strides = [1, 1]} : vector<10x128xf32> to vector<8x128xf32>
      %c24 = arith.constant 24 : index
      %455 = memref.load %arg1[%c24] : memref<81xf32, #tpu.memory_space<smem>>
      %456 = vector.broadcast %455 : f32 to vector<8x128xf32>
      %457 = arith.mulf %456, %454 : vector<8x128xf32>
      %458 = arith.addf %445, %457 : vector<8x128xf32>
      %c51 = arith.constant 51 : index
      %459 = memref.load %arg1[%c51] : memref<81xf32, #tpu.memory_space<smem>>
      %460 = vector.broadcast %459 : f32 to vector<8x128xf32>
      %461 = arith.mulf %460, %454 : vector<8x128xf32>
      %462 = arith.addf %449, %461 : vector<8x128xf32>
      %c78 = arith.constant 78 : index
      %463 = memref.load %arg1[%c78] : memref<81xf32, #tpu.memory_space<smem>>
      %464 = vector.broadcast %463 : f32 to vector<8x128xf32>
      %465 = arith.mulf %464, %454 : vector<8x128xf32>
      %466 = arith.addf %453, %465 : vector<8x128xf32>
      %c127_i32_138 = arith.constant 127 : i32
      %467 = tpu.dynamic_rotate %427 by %c127_i32_138 dim 1 : vector<10x128xf32>, i32 -> vector<10x128xf32>
      %468 = vector.extract_strided_slice %467 {offsets = [0, 0], sizes = [8, 128], strides = [1, 1]} : vector<10x128xf32> to vector<8x128xf32>
      %c19 = arith.constant 19 : index
      %469 = memref.load %arg1[%c19] : memref<81xf32, #tpu.memory_space<smem>>
      %470 = vector.broadcast %469 : f32 to vector<8x128xf32>
      %471 = arith.mulf %470, %468 : vector<8x128xf32>
      %472 = arith.addf %458, %471 : vector<8x128xf32>
      %c46 = arith.constant 46 : index
      %473 = memref.load %arg1[%c46] : memref<81xf32, #tpu.memory_space<smem>>
      %474 = vector.broadcast %473 : f32 to vector<8x128xf32>
      %475 = arith.mulf %474, %468 : vector<8x128xf32>
      %476 = arith.addf %462, %475 : vector<8x128xf32>
      %c73 = arith.constant 73 : index
      %477 = memref.load %arg1[%c73] : memref<81xf32, #tpu.memory_space<smem>>
      %478 = vector.broadcast %477 : f32 to vector<8x128xf32>
      %479 = arith.mulf %478, %468 : vector<8x128xf32>
      %480 = arith.addf %466, %479 : vector<8x128xf32>
      %481 = vector.extract_strided_slice %467 {offsets = [1, 0], sizes = [8, 128], strides = [1, 1]} : vector<10x128xf32> to vector<8x128xf32>
      %c22 = arith.constant 22 : index
      %482 = memref.load %arg1[%c22] : memref<81xf32, #tpu.memory_space<smem>>
      %483 = vector.broadcast %482 : f32 to vector<8x128xf32>
      %484 = arith.mulf %483, %481 : vector<8x128xf32>
      %485 = arith.addf %472, %484 : vector<8x128xf32>
      %c49 = arith.constant 49 : index
      %486 = memref.load %arg1[%c49] : memref<81xf32, #tpu.memory_space<smem>>
      %487 = vector.broadcast %486 : f32 to vector<8x128xf32>
      %488 = arith.mulf %487, %481 : vector<8x128xf32>
      %489 = arith.addf %476, %488 : vector<8x128xf32>
      %c76 = arith.constant 76 : index
      %490 = memref.load %arg1[%c76] : memref<81xf32, #tpu.memory_space<smem>>
      %491 = vector.broadcast %490 : f32 to vector<8x128xf32>
      %492 = arith.mulf %491, %481 : vector<8x128xf32>
      %493 = arith.addf %480, %492 : vector<8x128xf32>
      %494 = vector.extract_strided_slice %467 {offsets = [2, 0], sizes = [8, 128], strides = [1, 1]} : vector<10x128xf32> to vector<8x128xf32>
      %c25 = arith.constant 25 : index
      %495 = memref.load %arg1[%c25] : memref<81xf32, #tpu.memory_space<smem>>
      %496 = vector.broadcast %495 : f32 to vector<8x128xf32>
      %497 = arith.mulf %496, %494 : vector<8x128xf32>
      %498 = arith.addf %485, %497 : vector<8x128xf32>
      %c52 = arith.constant 52 : index
      %499 = memref.load %arg1[%c52] : memref<81xf32, #tpu.memory_space<smem>>
      %500 = vector.broadcast %499 : f32 to vector<8x128xf32>
      %501 = arith.mulf %500, %494 : vector<8x128xf32>
      %502 = arith.addf %489, %501 : vector<8x128xf32>
      %c79 = arith.constant 79 : index
      %503 = memref.load %arg1[%c79] : memref<81xf32, #tpu.memory_space<smem>>
      %504 = vector.broadcast %503 : f32 to vector<8x128xf32>
      %505 = arith.mulf %504, %494 : vector<8x128xf32>
      %506 = arith.addf %493, %505 : vector<8x128xf32>
      %c126_i32_139 = arith.constant 126 : i32
      %507 = tpu.dynamic_rotate %427 by %c126_i32_139 dim 1 : vector<10x128xf32>, i32 -> vector<10x128xf32>
      %508 = vector.extract_strided_slice %507 {offsets = [0, 0], sizes = [8, 128], strides = [1, 1]} : vector<10x128xf32> to vector<8x128xf32>
      %c20 = arith.constant 20 : index
      %509 = memref.load %arg1[%c20] : memref<81xf32, #tpu.memory_space<smem>>
      %510 = vector.broadcast %509 : f32 to vector<8x128xf32>
      %511 = arith.mulf %510, %508 : vector<8x128xf32>
      %512 = arith.addf %498, %511 : vector<8x128xf32>
      %c47 = arith.constant 47 : index
      %513 = memref.load %arg1[%c47] : memref<81xf32, #tpu.memory_space<smem>>
      %514 = vector.broadcast %513 : f32 to vector<8x128xf32>
      %515 = arith.mulf %514, %508 : vector<8x128xf32>
      %516 = arith.addf %502, %515 : vector<8x128xf32>
      %c74 = arith.constant 74 : index
      %517 = memref.load %arg1[%c74] : memref<81xf32, #tpu.memory_space<smem>>
      %518 = vector.broadcast %517 : f32 to vector<8x128xf32>
      %519 = arith.mulf %518, %508 : vector<8x128xf32>
      %520 = arith.addf %506, %519 : vector<8x128xf32>
      %521 = vector.extract_strided_slice %507 {offsets = [1, 0], sizes = [8, 128], strides = [1, 1]} : vector<10x128xf32> to vector<8x128xf32>
      %c23 = arith.constant 23 : index
      %522 = memref.load %arg1[%c23] : memref<81xf32, #tpu.memory_space<smem>>
      %523 = vector.broadcast %522 : f32 to vector<8x128xf32>
      %524 = arith.mulf %523, %521 : vector<8x128xf32>
      %525 = arith.addf %512, %524 : vector<8x128xf32>
      %c50 = arith.constant 50 : index
      %526 = memref.load %arg1[%c50] : memref<81xf32, #tpu.memory_space<smem>>
      %527 = vector.broadcast %526 : f32 to vector<8x128xf32>
      %528 = arith.mulf %527, %521 : vector<8x128xf32>
      %529 = arith.addf %516, %528 : vector<8x128xf32>
      %c77 = arith.constant 77 : index
      %530 = memref.load %arg1[%c77] : memref<81xf32, #tpu.memory_space<smem>>
      %531 = vector.broadcast %530 : f32 to vector<8x128xf32>
      %532 = arith.mulf %531, %521 : vector<8x128xf32>
      %533 = arith.addf %520, %532 : vector<8x128xf32>
      %534 = vector.extract_strided_slice %507 {offsets = [2, 0], sizes = [8, 128], strides = [1, 1]} : vector<10x128xf32> to vector<8x128xf32>
      %c26 = arith.constant 26 : index
      %535 = memref.load %arg1[%c26] : memref<81xf32, #tpu.memory_space<smem>>
      %536 = vector.broadcast %535 : f32 to vector<8x128xf32>
      %537 = arith.mulf %536, %534 : vector<8x128xf32>
      %538 = arith.addf %525, %537 : vector<8x128xf32>
      %c53 = arith.constant 53 : index
      %539 = memref.load %arg1[%c53] : memref<81xf32, #tpu.memory_space<smem>>
      %540 = vector.broadcast %539 : f32 to vector<8x128xf32>
      %541 = arith.mulf %540, %534 : vector<8x128xf32>
      %542 = arith.addf %529, %541 : vector<8x128xf32>
      %c80 = arith.constant 80 : index
      %543 = memref.load %arg1[%c80] : memref<81xf32, #tpu.memory_space<smem>>
      %544 = vector.broadcast %543 : f32 to vector<8x128xf32>
      %545 = arith.mulf %544, %534 : vector<8x128xf32>
      %546 = arith.addf %533, %545 : vector<8x128xf32>
      %c30_i32 = arith.constant 30 : i32
      %547 = arith.subi %c30_i32, %183 : i32
      %548 = vector.broadcast %547 : i32 to vector<8x128xi32>
      %549 = arith.cmpi slt, %0, %548 : vector<8x128xi32>
      %c30_i32_140 = arith.constant 30 : i32
      %550 = vector.broadcast %c30_i32_140 : i32 to vector<8x128xi32>
      %551 = arith.cmpi slt, %1, %550 : vector<8x128xi32>
      %552 = arith.andi %549, %551 : vector<8x128xi1>
      %cst_141 = arith.constant 0.000000e+00 : f32
      %553 = vector.broadcast %cst_141 : f32 to vector<8x128xf32>
      %554 = arith.select %552, %538, %553 : vector<8x128xi1>, vector<8x128xf32>
      %c0_142 = arith.constant 0 : index
      %c0_143 = arith.constant 0 : index
      %c0_144 = arith.constant 0 : index
      %555 = vector.load %arg9[%c0_142, %c0_143, %c0_144] : memref<3x1x128xf32, #tpu.memory_space<vmem>>, vector<1x1x128xf32>
      %556 = vector.shape_cast %555 : vector<1x1x128xf32> to vector<1x128xf32>
      %cst_145 = arith.constant dense<0.000000e+00> : vector<128xf32>
      %557 = vector.multi_reduction <add>, %554, %cst_145 [0] : vector<8x128xf32> to vector<128xf32>
      %558 = vector.shape_cast %557 : vector<128xf32> to vector<1x128xf32>
      %559 = arith.addf %556, %558 : vector<1x128xf32>
      %c0_146 = arith.constant 0 : index
      %c0_147 = arith.constant 0 : index
      %c0_148 = arith.constant 0 : index
      %560 = vector.load %arg9[%c0_146, %c0_147, %c0_148] : memref<3x1x128xf32, #tpu.memory_space<vmem>>, vector<1x1x128xf32>
      %561 = vector.shape_cast %560 : vector<1x1x128xf32> to vector<1x128xf32>
      %562 = vector.shape_cast %559 : vector<1x128xf32> to vector<1x1x128xf32>
      tpu.vector_store %arg9[%c0_146, %c0_147, %c0_148], %562 {strides = array<i32>} : memref<3x1x128xf32, #tpu.memory_space<vmem>>, vector<1x1x128xf32>,
      %c0_149 = arith.constant 0 : index
      %c0_150 = arith.constant 0 : index
      %c0_151 = arith.constant 0 : index
      %563 = vector.load %arg10[%c0_149, %c0_150, %c0_151] : memref<3x1x128xf32, #tpu.memory_space<vmem>>, vector<1x1x128xf32>
      %564 = vector.shape_cast %563 : vector<1x1x128xf32> to vector<1x128xf32>
      %565 = arith.mulf %554, %554 : vector<8x128xf32>
      %cst_152 = arith.constant dense<0.000000e+00> : vector<128xf32>
      %566 = vector.multi_reduction <add>, %565, %cst_152 [0] : vector<8x128xf32> to vector<128xf32>
      %567 = vector.shape_cast %566 : vector<128xf32> to vector<1x128xf32>
      %568 = arith.addf %564, %567 : vector<1x128xf32>
      %c0_153 = arith.constant 0 : index
      %c0_154 = arith.constant 0 : index
      %c0_155 = arith.constant 0 : index
      %569 = vector.load %arg10[%c0_153, %c0_154, %c0_155] : memref<3x1x128xf32, #tpu.memory_space<vmem>>, vector<1x1x128xf32>
      %570 = vector.shape_cast %569 : vector<1x1x128xf32> to vector<1x128xf32>
      %571 = vector.shape_cast %568 : vector<1x128xf32> to vector<1x1x128xf32>
      tpu.vector_store %arg10[%c0_153, %c0_154, %c0_155], %571 {strides = array<i32>} : memref<3x1x128xf32, #tpu.memory_space<vmem>>, vector<1x1x128xf32>,
      %cst_156 = arith.constant 0.000000e+00 : f32
      %572 = vector.broadcast %cst_156 : f32 to vector<8x128xf32>
      %573 = arith.select %552, %542, %572 : vector<8x128xi1>, vector<8x128xf32>
      %c1_157 = arith.constant 1 : index
      %c0_158 = arith.constant 0 : index
      %c0_159 = arith.constant 0 : index
      %574 = vector.load %arg9[%c1_157, %c0_158, %c0_159] : memref<3x1x128xf32, #tpu.memory_space<vmem>>, vector<1x1x128xf32>
      %575 = vector.shape_cast %574 : vector<1x1x128xf32> to vector<1x128xf32>
      %cst_160 = arith.constant dense<0.000000e+00> : vector<128xf32>
      %576 = vector.multi_reduction <add>, %573, %cst_160 [0] : vector<8x128xf32> to vector<128xf32>
      %577 = vector.shape_cast %576 : vector<128xf32> to vector<1x128xf32>
      %578 = arith.addf %575, %577 : vector<1x128xf32>
      %c1_161 = arith.constant 1 : index
      %c0_162 = arith.constant 0 : index
      %c0_163 = arith.constant 0 : index
      %579 = vector.load %arg9[%c1_161, %c0_162, %c0_163] : memref<3x1x128xf32, #tpu.memory_space<vmem>>, vector<1x1x128xf32>
      %580 = vector.shape_cast %579 : vector<1x1x128xf32> to vector<1x128xf32>
      %581 = vector.shape_cast %578 : vector<1x128xf32> to vector<1x1x128xf32>
      tpu.vector_store %arg9[%c1_161, %c0_162, %c0_163], %581 {strides = array<i32>} : memref<3x1x128xf32, #tpu.memory_space<vmem>>, vector<1x1x128xf32>,
      %c1_164 = arith.constant 1 : index
      %c0_165 = arith.constant 0 : index
      %c0_166 = arith.constant 0 : index
      %582 = vector.load %arg10[%c1_164, %c0_165, %c0_166] : memref<3x1x128xf32, #tpu.memory_space<vmem>>, vector<1x1x128xf32>
      %583 = vector.shape_cast %582 : vector<1x1x128xf32> to vector<1x128xf32>
      %584 = arith.mulf %573, %573 : vector<8x128xf32>
      %cst_167 = arith.constant dense<0.000000e+00> : vector<128xf32>
      %585 = vector.multi_reduction <add>, %584, %cst_167 [0] : vector<8x128xf32> to vector<128xf32>
      %586 = vector.shape_cast %585 : vector<128xf32> to vector<1x128xf32>
      %587 = arith.addf %583, %586 : vector<1x128xf32>
      %c1_168 = arith.constant 1 : index
      %c0_169 = arith.constant 0 : index
      %c0_170 = arith.constant 0 : index
      %588 = vector.load %arg10[%c1_168, %c0_169, %c0_170] : memref<3x1x128xf32, #tpu.memory_space<vmem>>, vector<1x1x128xf32>
      %589 = vector.shape_cast %588 : vector<1x1x128xf32> to vector<1x128xf32>
      %590 = vector.shape_cast %587 : vector<1x128xf32> to vector<1x1x128xf32>
      tpu.vector_store %arg10[%c1_168, %c0_169, %c0_170], %590 {strides = array<i32>} : memref<3x1x128xf32, #tpu.memory_space<vmem>>, vector<1x1x128xf32>,
      %cst_171 = arith.constant 0.000000e+00 : f32
      %591 = vector.broadcast %cst_171 : f32 to vector<8x128xf32>
      %592 = arith.select %552, %546, %591 : vector<8x128xi1>, vector<8x128xf32>
      %c2_172 = arith.constant 2 : index
      %c0_173 = arith.constant 0 : index
      %c0_174 = arith.constant 0 : index
      %593 = vector.load %arg9[%c2_172, %c0_173, %c0_174] : memref<3x1x128xf32, #tpu.memory_space<vmem>>, vector<1x1x128xf32>
      %594 = vector.shape_cast %593 : vector<1x1x128xf32> to vector<1x128xf32>
      %cst_175 = arith.constant dense<0.000000e+00> : vector<128xf32>
      %595 = vector.multi_reduction <add>, %592, %cst_175 [0] : vector<8x128xf32> to vector<128xf32>
      %596 = vector.shape_cast %595 : vector<128xf32> to vector<1x128xf32>
      %597 = arith.addf %594, %596 : vector<1x128xf32>
      %c2_176 = arith.constant 2 : index
      %c0_177 = arith.constant 0 : index
      %c0_178 = arith.constant 0 : index
      %598 = vector.load %arg9[%c2_176, %c0_177, %c0_178] : memref<3x1x128xf32, #tpu.memory_space<vmem>>, vector<1x1x128xf32>
      %599 = vector.shape_cast %598 : vector<1x1x128xf32> to vector<1x128xf32>
      %600 = vector.shape_cast %597 : vector<1x128xf32> to vector<1x1x128xf32>
      tpu.vector_store %arg9[%c2_176, %c0_177, %c0_178], %600 {strides = array<i32>} : memref<3x1x128xf32, #tpu.memory_space<vmem>>, vector<1x1x128xf32>,
      %c2_179 = arith.constant 2 : index
      %c0_180 = arith.constant 0 : index
      %c0_181 = arith.constant 0 : index
      %601 = vector.load %arg10[%c2_179, %c0_180, %c0_181] : memref<3x1x128xf32, #tpu.memory_space<vmem>>, vector<1x1x128xf32>
      %602 = vector.shape_cast %601 : vector<1x1x128xf32> to vector<1x128xf32>
      %603 = arith.mulf %592, %592 : vector<8x128xf32>
      %cst_182 = arith.constant dense<0.000000e+00> : vector<128xf32>
      %604 = vector.multi_reduction <add>, %603, %cst_182 [0] : vector<8x128xf32> to vector<128xf32>
      %605 = vector.shape_cast %604 : vector<128xf32> to vector<1x128xf32>
      %606 = arith.addf %602, %605 : vector<1x128xf32>
      %c2_183 = arith.constant 2 : index
      %c0_184 = arith.constant 0 : index
      %c0_185 = arith.constant 0 : index
      %607 = vector.load %arg10[%c2_183, %c0_184, %c0_185] : memref<3x1x128xf32, #tpu.memory_space<vmem>>, vector<1x1x128xf32>
      %608 = vector.shape_cast %607 : vector<1x1x128xf32> to vector<1x128xf32>
      %609 = vector.shape_cast %606 : vector<1x128xf32> to vector<1x1x128xf32>
      tpu.vector_store %arg10[%c2_183, %c0_184, %c0_185], %609 {strides = array<i32>} : memref<3x1x128xf32, #tpu.memory_space<vmem>>, vector<1x1x128xf32>,
      %c0_186 = arith.constant 0 : index
      %610 = arith.index_cast %183 : i32 to index
      %c0_187 = arith.constant 0 : index
      %611 = vector.load %arg8[%c0_186, %610, %c0_187] : memref<3x40x128xf32, #tpu.memory_space<vmem>>, vector<1x8x128xf32>
      %612 = vector.shape_cast %611 : vector<1x8x128xf32> to vector<8x128xf32>
      %613 = vector.shape_cast %538 : vector<8x128xf32> to vector<1x8x128xf32>
      tpu.vector_store %arg8[%c0_186, %610, %c0_187], %613 {strides = array<i32>} : memref<3x40x128xf32, #tpu.memory_space<vmem>>, vector<1x8x128xf32>,
      %c1_188 = arith.constant 1 : index
      %614 = arith.index_cast %183 : i32 to index
      %c0_189 = arith.constant 0 : index
      %615 = vector.load %arg8[%c1_188, %614, %c0_189] : memref<3x40x128xf32, #tpu.memory_space<vmem>>, vector<1x8x128xf32>
      %616 = vector.shape_cast %615 : vector<1x8x128xf32> to vector<8x128xf32>
      %617 = vector.shape_cast %542 : vector<8x128xf32> to vector<1x8x128xf32>
      tpu.vector_store %arg8[%c1_188, %614, %c0_189], %617 {strides = array<i32>} : memref<3x40x128xf32, #tpu.memory_space<vmem>>, vector<1x8x128xf32>,
      %c2_190 = arith.constant 2 : index
      %618 = arith.index_cast %183 : i32 to index
      %c0_191 = arith.constant 0 : index
      %619 = vector.load %arg8[%c2_190, %618, %c0_191] : memref<3x40x128xf32, #tpu.memory_space<vmem>>, vector<1x8x128xf32>
      %620 = vector.shape_cast %619 : vector<1x8x128xf32> to vector<8x128xf32>
      %621 = vector.shape_cast %546 : vector<8x128xf32> to vector<1x8x128xf32>
      tpu.vector_store %arg8[%c2_190, %618, %c0_191], %621 {strides = array<i32>} : memref<3x40x128xf32, #tpu.memory_space<vmem>>, vector<1x8x128xf32>,
    }
    %c5_i32_20 = arith.constant 5 : i32
    %c0_21 = arith.constant 0 : index
    %c0_22 = arith.constant 0 : index
    %c0_23 = arith.constant 0 : index
    %27 = vector.load %arg9[%c0_21, %c0_22, %c0_23] : memref<3x1x128xf32, #tpu.memory_space<vmem>>, vector<1x1x128xf32>
    %28 = vector.shape_cast %27 : vector<1x1x128xf32> to vector<1x128xf32>
    %29 = vector.shape_cast %28 : vector<1x128xf32> to vector<1x1x128xf32>
    %cst_24 = arith.constant dense<0.000000e+00> : vector<1xf32>
    %30 = vector.multi_reduction <add>, %29, %cst_24 [1, 2] : vector<1x1x128xf32> to vector<1xf32>
    %31 = vector.shape_cast %30 : vector<1xf32> to vector<1x1x1xf32>
    %32 = vector.extract %31[0, 0, 0] : f32 from vector<1x1x1xf32>
    %cst_25 = arith.constant 9.000000e+02 : f32
    %33 = arith.divf %32, %cst_25 : f32
    %c0_26 = arith.constant 0 : index
    %c0_27 = arith.constant 0 : index
    %c0_28 = arith.constant 0 : index
    %34 = vector.load %arg10[%c0_26, %c0_27, %c0_28] : memref<3x1x128xf32, #tpu.memory_space<vmem>>, vector<1x1x128xf32>
    %35 = vector.shape_cast %34 : vector<1x1x128xf32> to vector<1x128xf32>
    %36 = vector.shape_cast %35 : vector<1x128xf32> to vector<1x1x128xf32>
    %cst_29 = arith.constant dense<0.000000e+00> : vector<1xf32>
    %37 = vector.multi_reduction <add>, %36, %cst_29 [1, 2] : vector<1x1x128xf32> to vector<1xf32>
    %38 = vector.shape_cast %37 : vector<1xf32> to vector<1x1x1xf32>
    %39 = vector.extract %38[0, 0, 0] : f32 from vector<1x1x1xf32>
    %cst_30 = arith.constant 9.000000e+02 : f32
    %40 = arith.divf %39, %cst_30 : f32
    %41 = arith.mulf %33, %33 : f32
    %42 = arith.subf %40, %41 : f32
    %cst_31 = arith.constant 9.99999974E-6 : f32
    %43 = arith.addf %42, %cst_31 : f32
    %44 = math.rsqrt %43 : f32
    %c1_32 = arith.constant 1 : index
    %c0_33 = arith.constant 0 : index
    %c0_34 = arith.constant 0 : index
    %45 = vector.load %arg9[%c1_32, %c0_33, %c0_34] : memref<3x1x128xf32, #tpu.memory_space<vmem>>, vector<1x1x128xf32>
    %46 = vector.shape_cast %45 : vector<1x1x128xf32> to vector<1x128xf32>
    %47 = vector.shape_cast %46 : vector<1x128xf32> to vector<1x1x128xf32>
    %cst_35 = arith.constant dense<0.000000e+00> : vector<1xf32>
    %48 = vector.multi_reduction <add>, %47, %cst_35 [1, 2] : vector<1x1x128xf32> to vector<1xf32>
    %49 = vector.shape_cast %48 : vector<1xf32> to vector<1x1x1xf32>
    %50 = vector.extract %49[0, 0, 0] : f32 from vector<1x1x1xf32>
    %cst_36 = arith.constant 9.000000e+02 : f32
    %51 = arith.divf %50, %cst_36 : f32
    %c1_37 = arith.constant 1 : index
    %c0_38 = arith.constant 0 : index
    %c0_39 = arith.constant 0 : index
    %52 = vector.load %arg10[%c1_37, %c0_38, %c0_39] : memref<3x1x128xf32, #tpu.memory_space<vmem>>, vector<1x1x128xf32>
    %53 = vector.shape_cast %52 : vector<1x1x128xf32> to vector<1x128xf32>
    %54 = vector.shape_cast %53 : vector<1x128xf32> to vector<1x1x128xf32>
    %cst_40 = arith.constant dense<0.000000e+00> : vector<1xf32>
    %55 = vector.multi_reduction <add>, %54, %cst_40 [1, 2] : vector<1x1x128xf32> to vector<1xf32>
    %56 = vector.shape_cast %55 : vector<1xf32> to vector<1x1x1xf32>
    %57 = vector.extract %56[0, 0, 0] : f32 from vector<1x1x1xf32>
    %cst_41 = arith.constant 9.000000e+02 : f32
    %58 = arith.divf %57, %cst_41 : f32
    %59 = arith.mulf %51, %51 : f32
    %60 = arith.subf %58, %59 : f32
    %cst_42 = arith.constant 9.99999974E-6 : f32
    %61 = arith.addf %60, %cst_42 : f32
    %62 = math.rsqrt %61 : f32
    %c2_43 = arith.constant 2 : index
    %c0_44 = arith.constant 0 : index
    %c0_45 = arith.constant 0 : index
    %63 = vector.load %arg9[%c2_43, %c0_44, %c0_45] : memref<3x1x128xf32, #tpu.memory_space<vmem>>, vector<1x1x128xf32>
    %64 = vector.shape_cast %63 : vector<1x1x128xf32> to vector<1x128xf32>
    %65 = vector.shape_cast %64 : vector<1x128xf32> to vector<1x1x128xf32>
    %cst_46 = arith.constant dense<0.000000e+00> : vector<1xf32>
    %66 = vector.multi_reduction <add>, %65, %cst_46 [1, 2] : vector<1x1x128xf32> to vector<1xf32>
    %67 = vector.shape_cast %66 : vector<1xf32> to vector<1x1x1xf32>
    %68 = vector.extract %67[0, 0, 0] : f32 from vector<1x1x1xf32>
    %cst_47 = arith.constant 9.000000e+02 : f32
    %69 = arith.divf %68, %cst_47 : f32
    %c2_48 = arith.constant 2 : index
    %c0_49 = arith.constant 0 : index
    %c0_50 = arith.constant 0 : index
    %70 = vector.load %arg10[%c2_48, %c0_49, %c0_50] : memref<3x1x128xf32, #tpu.memory_space<vmem>>, vector<1x1x128xf32>
    %71 = vector.shape_cast %70 : vector<1x1x128xf32> to vector<1x128xf32>
    %72 = vector.shape_cast %71 : vector<1x128xf32> to vector<1x1x128xf32>
    %cst_51 = arith.constant dense<0.000000e+00> : vector<1xf32>
    %73 = vector.multi_reduction <add>, %72, %cst_51 [1, 2] : vector<1x1x128xf32> to vector<1xf32>
    %74 = vector.shape_cast %73 : vector<1xf32> to vector<1x1x1xf32>
    %75 = vector.extract %74[0, 0, 0] : f32 from vector<1x1x1xf32>
    %cst_52 = arith.constant 9.000000e+02 : f32
    %76 = arith.divf %75, %cst_52 : f32
    %77 = arith.mulf %69, %69 : f32
    %78 = arith.subf %76, %77 : f32
    %cst_53 = arith.constant 9.99999974E-6 : f32
    %79 = arith.addf %78, %cst_53 : f32
    %80 = math.rsqrt %79 : f32
    %c0_54 = arith.constant 0 : index
    %81 = memref.load %arg3[%c0_54] : memref<3xf32, #tpu.memory_space<smem>>
    %82 = arith.mulf %81, %44 : f32
    %c1_55 = arith.constant 1 : index
    %83 = memref.load %arg3[%c1_55] : memref<3xf32, #tpu.memory_space<smem>>
    %84 = arith.mulf %83, %62 : f32
    %c2_56 = arith.constant 2 : index
    %85 = memref.load %arg3[%c2_56] : memref<3xf32, #tpu.memory_space<smem>>
    %86 = arith.mulf %85, %80 : f32
    %cst_57 = arith.constant 0.000000e+00 : f32
    %87 = vector.broadcast %cst_57 : f32 to vector<1x128xf32>
    %c0_58 = arith.constant 0 : index
    %c0_59 = arith.constant 0 : index
    %c0_60 = arith.constant 0 : index
    %88 = vector.load %arg9[%c0_58, %c0_59, %c0_60] : memref<3x1x128xf32, #tpu.memory_space<vmem>>, vector<1x1x128xf32>
    %89 = vector.shape_cast %88 : vector<1x1x128xf32> to vector<1x128xf32>
    %90 = vector.shape_cast %87 : vector<1x128xf32> to vector<1x1x128xf32>
    tpu.vector_store %arg9[%c0_58, %c0_59, %c0_60], %90 {strides = array<i32>} : memref<3x1x128xf32, #tpu.memory_space<vmem>>, vector<1x1x128xf32>,
    %cst_61 = arith.constant 0.000000e+00 : f32
    %91 = vector.broadcast %cst_61 : f32 to vector<1x128xf32>
    %c0_62 = arith.constant 0 : index
    %c0_63 = arith.constant 0 : index
    %c0_64 = arith.constant 0 : index
    %92 = vector.load %arg10[%c0_62, %c0_63, %c0_64] : memref<3x1x128xf32, #tpu.memory_space<vmem>>, vector<1x1x128xf32>
    %93 = vector.shape_cast %92 : vector<1x1x128xf32> to vector<1x128xf32>
    %94 = vector.shape_cast %91 : vector<1x128xf32> to vector<1x1x128xf32>
    tpu.vector_store %arg10[%c0_62, %c0_63, %c0_64], %94 {strides = array<i32>} : memref<3x1x128xf32, #tpu.memory_space<vmem>>, vector<1x1x128xf32>,
    %cst_65 = arith.constant 0.000000e+00 : f32
    %95 = vector.broadcast %cst_65 : f32 to vector<1x128xf32>
    %c1_66 = arith.constant 1 : index
    %c0_67 = arith.constant 0 : index
    %c0_68 = arith.constant 0 : index
    %96 = vector.load %arg9[%c1_66, %c0_67, %c0_68] : memref<3x1x128xf32, #tpu.memory_space<vmem>>, vector<1x1x128xf32>
    %97 = vector.shape_cast %96 : vector<1x1x128xf32> to vector<1x128xf32>
    %98 = vector.shape_cast %95 : vector<1x128xf32> to vector<1x1x128xf32>
    tpu.vector_store %arg9[%c1_66, %c0_67, %c0_68], %98 {strides = array<i32>} : memref<3x1x128xf32, #tpu.memory_space<vmem>>, vector<1x1x128xf32>,
    %cst_69 = arith.constant 0.000000e+00 : f32
    %99 = vector.broadcast %cst_69 : f32 to vector<1x128xf32>
    %c1_70 = arith.constant 1 : index
    %c0_71 = arith.constant 0 : index
    %c0_72 = arith.constant 0 : index
    %100 = vector.load %arg10[%c1_70, %c0_71, %c0_72] : memref<3x1x128xf32, #tpu.memory_space<vmem>>, vector<1x1x128xf32>
    %101 = vector.shape_cast %100 : vector<1x1x128xf32> to vector<1x128xf32>
    %102 = vector.shape_cast %99 : vector<1x128xf32> to vector<1x1x128xf32>
    tpu.vector_store %arg10[%c1_70, %c0_71, %c0_72], %102 {strides = array<i32>} : memref<3x1x128xf32, #tpu.memory_space<vmem>>, vector<1x1x128xf32>,
    %cst_73 = arith.constant 0.000000e+00 : f32
    %103 = vector.broadcast %cst_73 : f32 to vector<1x128xf32>
    %c2_74 = arith.constant 2 : index
    %c0_75 = arith.constant 0 : index
    %c0_76 = arith.constant 0 : index
    %104 = vector.load %arg9[%c2_74, %c0_75, %c0_76] : memref<3x1x128xf32, #tpu.memory_space<vmem>>, vector<1x1x128xf32>
    %105 = vector.shape_cast %104 : vector<1x1x128xf32> to vector<1x128xf32>
    %106 = vector.shape_cast %103 : vector<1x128xf32> to vector<1x1x128xf32>
    tpu.vector_store %arg9[%c2_74, %c0_75, %c0_76], %106 {strides = array<i32>} : memref<3x1x128xf32, #tpu.memory_space<vmem>>, vector<1x1x128xf32>,
    %cst_77 = arith.constant 0.000000e+00 : f32
    %107 = vector.broadcast %cst_77 : f32 to vector<1x128xf32>
    %c2_78 = arith.constant 2 : index
    %c0_79 = arith.constant 0 : index
    %c0_80 = arith.constant 0 : index
    %108 = vector.load %arg10[%c2_78, %c0_79, %c0_80] : memref<3x1x128xf32, #tpu.memory_space<vmem>>, vector<1x1x128xf32>
    %109 = vector.shape_cast %108 : vector<1x1x128xf32> to vector<1x128xf32>
    %110 = vector.shape_cast %107 : vector<1x128xf32> to vector<1x1x128xf32>
    tpu.vector_store %arg10[%c2_78, %c0_79, %c0_80], %110 {strides = array<i32>} : memref<3x1x128xf32, #tpu.memory_space<vmem>>, vector<1x1x128xf32>,
    %c0_i32_81 = arith.constant 0 : i32
    %c4_i32 = arith.constant 4 : i32
    %111 = arith.addi %c0_i32_81, %c4_i32 : i32
    %c1_i32_82 = arith.constant 1 : i32
    scf.for %arg11 = %c0_i32_81 to %111 step %c1_i32_82  : i32 {
      %c8_i32 = arith.constant 8 : i32
      %182 = arith.muli %arg11, %c8_i32 : i32
      %183 = tpu.assume_multiple %182, 8 : i32
      %c0_127 = arith.constant 0 : index
      %184 = arith.index_cast %183 : i32 to index
      %c0_128 = arith.constant 0 : index
      %185 = vector.load %arg8[%c0_127, %184, %c0_128] : memref<3x40x128xf32, #tpu.memory_space<vmem>>, vector<1x10x128xf32>
      %186 = vector.shape_cast %185 : vector<1x10x128xf32> to vector<10x128xf32>
      %187 = vector.broadcast %82 : f32 to vector<10x128xf32>
      %188 = arith.mulf %186, %187 : vector<10x128xf32>
      %189 = vector.extract_strided_slice %188 {offsets = [0, 0], sizes = [8, 128], strides = [1, 1]} : vector<10x128xf32> to vector<8x128xf32>
      %c0_129 = arith.constant 0 : index
      %190 = memref.load %arg2[%c0_129] : memref<81xf32, #tpu.memory_space<smem>>
      %191 = vector.broadcast %190 : f32 to vector<8x128xf32>
      %192 = arith.mulf %191, %189 : vector<8x128xf32>
      %c27 = arith.constant 27 : index
      %193 = memref.load %arg2[%c27] : memref<81xf32, #tpu.memory_space<smem>>
      %194 = vector.broadcast %193 : f32 to vector<8x128xf32>
      %195 = arith.mulf %194, %189 : vector<8x128xf32>
      %c54 = arith.constant 54 : index
      %196 = memref.load %arg2[%c54] : memref<81xf32, #tpu.memory_space<smem>>
      %197 = vector.broadcast %196 : f32 to vector<8x128xf32>
      %198 = arith.mulf %197, %189 : vector<8x128xf32>
      %199 = vector.extract_strided_slice %188 {offsets = [1, 0], sizes = [8, 128], strides = [1, 1]} : vector<10x128xf32> to vector<8x128xf32>
      %c3 = arith.constant 3 : index
      %200 = memref.load %arg2[%c3] : memref<81xf32, #tpu.memory_space<smem>>
      %201 = vector.broadcast %200 : f32 to vector<8x128xf32>
      %202 = arith.mulf %201, %199 : vector<8x128xf32>
      %203 = arith.addf %192, %202 : vector<8x128xf32>
      %c30 = arith.constant 30 : index
      %204 = memref.load %arg2[%c30] : memref<81xf32, #tpu.memory_space<smem>>
      %205 = vector.broadcast %204 : f32 to vector<8x128xf32>
      %206 = arith.mulf %205, %199 : vector<8x128xf32>
      %207 = arith.addf %195, %206 : vector<8x128xf32>
      %c57 = arith.constant 57 : index
      %208 = memref.load %arg2[%c57] : memref<81xf32, #tpu.memory_space<smem>>
      %209 = vector.broadcast %208 : f32 to vector<8x128xf32>
      %210 = arith.mulf %209, %199 : vector<8x128xf32>
      %211 = arith.addf %198, %210 : vector<8x128xf32>
      %212 = vector.extract_strided_slice %188 {offsets = [2, 0], sizes = [8, 128], strides = [1, 1]} : vector<10x128xf32> to vector<8x128xf32>
      %c6 = arith.constant 6 : index
      %213 = memref.load %arg2[%c6] : memref<81xf32, #tpu.memory_space<smem>>
      %214 = vector.broadcast %213 : f32 to vector<8x128xf32>
      %215 = arith.mulf %214, %212 : vector<8x128xf32>
      %216 = arith.addf %203, %215 : vector<8x128xf32>
      %c33 = arith.constant 33 : index
      %217 = memref.load %arg2[%c33] : memref<81xf32, #tpu.memory_space<smem>>
      %218 = vector.broadcast %217 : f32 to vector<8x128xf32>
      %219 = arith.mulf %218, %212 : vector<8x128xf32>
      %220 = arith.addf %207, %219 : vector<8x128xf32>
      %c60 = arith.constant 60 : index
      %221 = memref.load %arg2[%c60] : memref<81xf32, #tpu.memory_space<smem>>
      %222 = vector.broadcast %221 : f32 to vector<8x128xf32>
      %223 = arith.mulf %222, %212 : vector<8x128xf32>
      %224 = arith.addf %211, %223 : vector<8x128xf32>
      %c127_i32 = arith.constant 127 : i32
      %225 = tpu.dynamic_rotate %188 by %c127_i32 dim 1 : vector<10x128xf32>, i32 -> vector<10x128xf32>
      %226 = vector.extract_strided_slice %225 {offsets = [0, 0], sizes = [8, 128], strides = [1, 1]} : vector<10x128xf32> to vector<8x128xf32>
      %c1_130 = arith.constant 1 : index
      %227 = memref.load %arg2[%c1_130] : memref<81xf32, #tpu.memory_space<smem>>
      %228 = vector.broadcast %227 : f32 to vector<8x128xf32>
      %229 = arith.mulf %228, %226 : vector<8x128xf32>
      %230 = arith.addf %216, %229 : vector<8x128xf32>
      %c28 = arith.constant 28 : index
      %231 = memref.load %arg2[%c28] : memref<81xf32, #tpu.memory_space<smem>>
      %232 = vector.broadcast %231 : f32 to vector<8x128xf32>
      %233 = arith.mulf %232, %226 : vector<8x128xf32>
      %234 = arith.addf %220, %233 : vector<8x128xf32>
      %c55 = arith.constant 55 : index
      %235 = memref.load %arg2[%c55] : memref<81xf32, #tpu.memory_space<smem>>
      %236 = vector.broadcast %235 : f32 to vector<8x128xf32>
      %237 = arith.mulf %236, %226 : vector<8x128xf32>
      %238 = arith.addf %224, %237 : vector<8x128xf32>
      %239 = vector.extract_strided_slice %225 {offsets = [1, 0], sizes = [8, 128], strides = [1, 1]} : vector<10x128xf32> to vector<8x128xf32>
      %c4 = arith.constant 4 : index
      %240 = memref.load %arg2[%c4] : memref<81xf32, #tpu.memory_space<smem>>
      %241 = vector.broadcast %240 : f32 to vector<8x128xf32>
      %242 = arith.mulf %241, %239 : vector<8x128xf32>
      %243 = arith.addf %230, %242 : vector<8x128xf32>
      %c31 = arith.constant 31 : index
      %244 = memref.load %arg2[%c31] : memref<81xf32, #tpu.memory_space<smem>>
      %245 = vector.broadcast %244 : f32 to vector<8x128xf32>
      %246 = arith.mulf %245, %239 : vector<8x128xf32>
      %247 = arith.addf %234, %246 : vector<8x128xf32>
      %c58 = arith.constant 58 : index
      %248 = memref.load %arg2[%c58] : memref<81xf32, #tpu.memory_space<smem>>
      %249 = vector.broadcast %248 : f32 to vector<8x128xf32>
      %250 = arith.mulf %249, %239 : vector<8x128xf32>
      %251 = arith.addf %238, %250 : vector<8x128xf32>
      %252 = vector.extract_strided_slice %225 {offsets = [2, 0], sizes = [8, 128], strides = [1, 1]} : vector<10x128xf32> to vector<8x128xf32>
      %c7 = arith.constant 7 : index
      %253 = memref.load %arg2[%c7] : memref<81xf32, #tpu.memory_space<smem>>
      %254 = vector.broadcast %253 : f32 to vector<8x128xf32>
      %255 = arith.mulf %254, %252 : vector<8x128xf32>
      %256 = arith.addf %243, %255 : vector<8x128xf32>
      %c34 = arith.constant 34 : index
      %257 = memref.load %arg2[%c34] : memref<81xf32, #tpu.memory_space<smem>>
      %258 = vector.broadcast %257 : f32 to vector<8x128xf32>
      %259 = arith.mulf %258, %252 : vector<8x128xf32>
      %260 = arith.addf %247, %259 : vector<8x128xf32>
      %c61 = arith.constant 61 : index
      %261 = memref.load %arg2[%c61] : memref<81xf32, #tpu.memory_space<smem>>
      %262 = vector.broadcast %261 : f32 to vector<8x128xf32>
      %263 = arith.mulf %262, %252 : vector<8x128xf32>
      %264 = arith.addf %251, %263 : vector<8x128xf32>
      %c126_i32 = arith.constant 126 : i32
      %265 = tpu.dynamic_rotate %188 by %c126_i32 dim 1 : vector<10x128xf32>, i32 -> vector<10x128xf32>
      %266 = vector.extract_strided_slice %265 {offsets = [0, 0], sizes = [8, 128], strides = [1, 1]} : vector<10x128xf32> to vector<8x128xf32>
      %c2_131 = arith.constant 2 : index
      %267 = memref.load %arg2[%c2_131] : memref<81xf32, #tpu.memory_space<smem>>
      %268 = vector.broadcast %267 : f32 to vector<8x128xf32>
      %269 = arith.mulf %268, %266 : vector<8x128xf32>
      %270 = arith.addf %256, %269 : vector<8x128xf32>
      %c29 = arith.constant 29 : index
      %271 = memref.load %arg2[%c29] : memref<81xf32, #tpu.memory_space<smem>>
      %272 = vector.broadcast %271 : f32 to vector<8x128xf32>
      %273 = arith.mulf %272, %266 : vector<8x128xf32>
      %274 = arith.addf %260, %273 : vector<8x128xf32>
      %c56 = arith.constant 56 : index
      %275 = memref.load %arg2[%c56] : memref<81xf32, #tpu.memory_space<smem>>
      %276 = vector.broadcast %275 : f32 to vector<8x128xf32>
      %277 = arith.mulf %276, %266 : vector<8x128xf32>
      %278 = arith.addf %264, %277 : vector<8x128xf32>
      %279 = vector.extract_strided_slice %265 {offsets = [1, 0], sizes = [8, 128], strides = [1, 1]} : vector<10x128xf32> to vector<8x128xf32>
      %c5 = arith.constant 5 : index
      %280 = memref.load %arg2[%c5] : memref<81xf32, #tpu.memory_space<smem>>
      %281 = vector.broadcast %280 : f32 to vector<8x128xf32>
      %282 = arith.mulf %281, %279 : vector<8x128xf32>
      %283 = arith.addf %270, %282 : vector<8x128xf32>
      %c32 = arith.constant 32 : index
      %284 = memref.load %arg2[%c32] : memref<81xf32, #tpu.memory_space<smem>>
      %285 = vector.broadcast %284 : f32 to vector<8x128xf32>
      %286 = arith.mulf %285, %279 : vector<8x128xf32>
      %287 = arith.addf %274, %286 : vector<8x128xf32>
      %c59 = arith.constant 59 : index
      %288 = memref.load %arg2[%c59] : memref<81xf32, #tpu.memory_space<smem>>
      %289 = vector.broadcast %288 : f32 to vector<8x128xf32>
      %290 = arith.mulf %289, %279 : vector<8x128xf32>
      %291 = arith.addf %278, %290 : vector<8x128xf32>
      %292 = vector.extract_strided_slice %265 {offsets = [2, 0], sizes = [8, 128], strides = [1, 1]} : vector<10x128xf32> to vector<8x128xf32>
      %c8 = arith.constant 8 : index
      %293 = memref.load %arg2[%c8] : memref<81xf32, #tpu.memory_space<smem>>
      %294 = vector.broadcast %293 : f32 to vector<8x128xf32>
      %295 = arith.mulf %294, %292 : vector<8x128xf32>
      %296 = arith.addf %283, %295 : vector<8x128xf32>
      %c35 = arith.constant 35 : index
      %297 = memref.load %arg2[%c35] : memref<81xf32, #tpu.memory_space<smem>>
      %298 = vector.broadcast %297 : f32 to vector<8x128xf32>
      %299 = arith.mulf %298, %292 : vector<8x128xf32>
      %300 = arith.addf %287, %299 : vector<8x128xf32>
      %c62 = arith.constant 62 : index
      %301 = memref.load %arg2[%c62] : memref<81xf32, #tpu.memory_space<smem>>
      %302 = vector.broadcast %301 : f32 to vector<8x128xf32>
      %303 = arith.mulf %302, %292 : vector<8x128xf32>
      %304 = arith.addf %291, %303 : vector<8x128xf32>
      %c1_132 = arith.constant 1 : index
      %305 = arith.index_cast %183 : i32 to index
      %c0_133 = arith.constant 0 : index
      %306 = vector.load %arg8[%c1_132, %305, %c0_133] : memref<3x40x128xf32, #tpu.memory_space<vmem>>, vector<1x10x128xf32>
      %307 = vector.shape_cast %306 : vector<1x10x128xf32> to vector<10x128xf32>
      %308 = vector.broadcast %84 : f32 to vector<10x128xf32>
      %309 = arith.mulf %307, %308 : vector<10x128xf32>
      %310 = vector.extract_strided_slice %309 {offsets = [0, 0], sizes = [8, 128], strides = [1, 1]} : vector<10x128xf32> to vector<8x128xf32>
      %c9 = arith.constant 9 : index
      %311 = memref.load %arg2[%c9] : memref<81xf32, #tpu.memory_space<smem>>
      %312 = vector.broadcast %311 : f32 to vector<8x128xf32>
      %313 = arith.mulf %312, %310 : vector<8x128xf32>
      %314 = arith.addf %296, %313 : vector<8x128xf32>
      %c36 = arith.constant 36 : index
      %315 = memref.load %arg2[%c36] : memref<81xf32, #tpu.memory_space<smem>>
      %316 = vector.broadcast %315 : f32 to vector<8x128xf32>
      %317 = arith.mulf %316, %310 : vector<8x128xf32>
      %318 = arith.addf %300, %317 : vector<8x128xf32>
      %c63 = arith.constant 63 : index
      %319 = memref.load %arg2[%c63] : memref<81xf32, #tpu.memory_space<smem>>
      %320 = vector.broadcast %319 : f32 to vector<8x128xf32>
      %321 = arith.mulf %320, %310 : vector<8x128xf32>
      %322 = arith.addf %304, %321 : vector<8x128xf32>
      %323 = vector.extract_strided_slice %309 {offsets = [1, 0], sizes = [8, 128], strides = [1, 1]} : vector<10x128xf32> to vector<8x128xf32>
      %c12 = arith.constant 12 : index
      %324 = memref.load %arg2[%c12] : memref<81xf32, #tpu.memory_space<smem>>
      %325 = vector.broadcast %324 : f32 to vector<8x128xf32>
      %326 = arith.mulf %325, %323 : vector<8x128xf32>
      %327 = arith.addf %314, %326 : vector<8x128xf32>
      %c39 = arith.constant 39 : index
      %328 = memref.load %arg2[%c39] : memref<81xf32, #tpu.memory_space<smem>>
      %329 = vector.broadcast %328 : f32 to vector<8x128xf32>
      %330 = arith.mulf %329, %323 : vector<8x128xf32>
      %331 = arith.addf %318, %330 : vector<8x128xf32>
      %c66 = arith.constant 66 : index
      %332 = memref.load %arg2[%c66] : memref<81xf32, #tpu.memory_space<smem>>
      %333 = vector.broadcast %332 : f32 to vector<8x128xf32>
      %334 = arith.mulf %333, %323 : vector<8x128xf32>
      %335 = arith.addf %322, %334 : vector<8x128xf32>
      %336 = vector.extract_strided_slice %309 {offsets = [2, 0], sizes = [8, 128], strides = [1, 1]} : vector<10x128xf32> to vector<8x128xf32>
      %c15 = arith.constant 15 : index
      %337 = memref.load %arg2[%c15] : memref<81xf32, #tpu.memory_space<smem>>
      %338 = vector.broadcast %337 : f32 to vector<8x128xf32>
      %339 = arith.mulf %338, %336 : vector<8x128xf32>
      %340 = arith.addf %327, %339 : vector<8x128xf32>
      %c42 = arith.constant 42 : index
      %341 = memref.load %arg2[%c42] : memref<81xf32, #tpu.memory_space<smem>>
      %342 = vector.broadcast %341 : f32 to vector<8x128xf32>
      %343 = arith.mulf %342, %336 : vector<8x128xf32>
      %344 = arith.addf %331, %343 : vector<8x128xf32>
      %c69 = arith.constant 69 : index
      %345 = memref.load %arg2[%c69] : memref<81xf32, #tpu.memory_space<smem>>
      %346 = vector.broadcast %345 : f32 to vector<8x128xf32>
      %347 = arith.mulf %346, %336 : vector<8x128xf32>
      %348 = arith.addf %335, %347 : vector<8x128xf32>
      %c127_i32_134 = arith.constant 127 : i32
      %349 = tpu.dynamic_rotate %309 by %c127_i32_134 dim 1 : vector<10x128xf32>, i32 -> vector<10x128xf32>
      %350 = vector.extract_strided_slice %349 {offsets = [0, 0], sizes = [8, 128], strides = [1, 1]} : vector<10x128xf32> to vector<8x128xf32>
      %c10 = arith.constant 10 : index
      %351 = memref.load %arg2[%c10] : memref<81xf32, #tpu.memory_space<smem>>
      %352 = vector.broadcast %351 : f32 to vector<8x128xf32>
      %353 = arith.mulf %352, %350 : vector<8x128xf32>
      %354 = arith.addf %340, %353 : vector<8x128xf32>
      %c37 = arith.constant 37 : index
      %355 = memref.load %arg2[%c37] : memref<81xf32, #tpu.memory_space<smem>>
      %356 = vector.broadcast %355 : f32 to vector<8x128xf32>
      %357 = arith.mulf %356, %350 : vector<8x128xf32>
      %358 = arith.addf %344, %357 : vector<8x128xf32>
      %c64 = arith.constant 64 : index
      %359 = memref.load %arg2[%c64] : memref<81xf32, #tpu.memory_space<smem>>
      %360 = vector.broadcast %359 : f32 to vector<8x128xf32>
      %361 = arith.mulf %360, %350 : vector<8x128xf32>
      %362 = arith.addf %348, %361 : vector<8x128xf32>
      %363 = vector.extract_strided_slice %349 {offsets = [1, 0], sizes = [8, 128], strides = [1, 1]} : vector<10x128xf32> to vector<8x128xf32>
      %c13 = arith.constant 13 : index
      %364 = memref.load %arg2[%c13] : memref<81xf32, #tpu.memory_space<smem>>
      %365 = vector.broadcast %364 : f32 to vector<8x128xf32>
      %366 = arith.mulf %365, %363 : vector<8x128xf32>
      %367 = arith.addf %354, %366 : vector<8x128xf32>
      %c40 = arith.constant 40 : index
      %368 = memref.load %arg2[%c40] : memref<81xf32, #tpu.memory_space<smem>>
      %369 = vector.broadcast %368 : f32 to vector<8x128xf32>
      %370 = arith.mulf %369, %363 : vector<8x128xf32>
      %371 = arith.addf %358, %370 : vector<8x128xf32>
      %c67 = arith.constant 67 : index
      %372 = memref.load %arg2[%c67] : memref<81xf32, #tpu.memory_space<smem>>
      %373 = vector.broadcast %372 : f32 to vector<8x128xf32>
      %374 = arith.mulf %373, %363 : vector<8x128xf32>
      %375 = arith.addf %362, %374 : vector<8x128xf32>
      %376 = vector.extract_strided_slice %349 {offsets = [2, 0], sizes = [8, 128], strides = [1, 1]} : vector<10x128xf32> to vector<8x128xf32>
      %c16 = arith.constant 16 : index
      %377 = memref.load %arg2[%c16] : memref<81xf32, #tpu.memory_space<smem>>
      %378 = vector.broadcast %377 : f32 to vector<8x128xf32>
      %379 = arith.mulf %378, %376 : vector<8x128xf32>
      %380 = arith.addf %367, %379 : vector<8x128xf32>
      %c43 = arith.constant 43 : index
      %381 = memref.load %arg2[%c43] : memref<81xf32, #tpu.memory_space<smem>>
      %382 = vector.broadcast %381 : f32 to vector<8x128xf32>
      %383 = arith.mulf %382, %376 : vector<8x128xf32>
      %384 = arith.addf %371, %383 : vector<8x128xf32>
      %c70 = arith.constant 70 : index
      %385 = memref.load %arg2[%c70] : memref<81xf32, #tpu.memory_space<smem>>
      %386 = vector.broadcast %385 : f32 to vector<8x128xf32>
      %387 = arith.mulf %386, %376 : vector<8x128xf32>
      %388 = arith.addf %375, %387 : vector<8x128xf32>
      %c126_i32_135 = arith.constant 126 : i32
      %389 = tpu.dynamic_rotate %309 by %c126_i32_135 dim 1 : vector<10x128xf32>, i32 -> vector<10x128xf32>
      %390 = vector.extract_strided_slice %389 {offsets = [0, 0], sizes = [8, 128], strides = [1, 1]} : vector<10x128xf32> to vector<8x128xf32>
      %c11 = arith.constant 11 : index
      %391 = memref.load %arg2[%c11] : memref<81xf32, #tpu.memory_space<smem>>
      %392 = vector.broadcast %391 : f32 to vector<8x128xf32>
      %393 = arith.mulf %392, %390 : vector<8x128xf32>
      %394 = arith.addf %380, %393 : vector<8x128xf32>
      %c38 = arith.constant 38 : index
      %395 = memref.load %arg2[%c38] : memref<81xf32, #tpu.memory_space<smem>>
      %396 = vector.broadcast %395 : f32 to vector<8x128xf32>
      %397 = arith.mulf %396, %390 : vector<8x128xf32>
      %398 = arith.addf %384, %397 : vector<8x128xf32>
      %c65 = arith.constant 65 : index
      %399 = memref.load %arg2[%c65] : memref<81xf32, #tpu.memory_space<smem>>
      %400 = vector.broadcast %399 : f32 to vector<8x128xf32>
      %401 = arith.mulf %400, %390 : vector<8x128xf32>
      %402 = arith.addf %388, %401 : vector<8x128xf32>
      %403 = vector.extract_strided_slice %389 {offsets = [1, 0], sizes = [8, 128], strides = [1, 1]} : vector<10x128xf32> to vector<8x128xf32>
      %c14 = arith.constant 14 : index
      %404 = memref.load %arg2[%c14] : memref<81xf32, #tpu.memory_space<smem>>
      %405 = vector.broadcast %404 : f32 to vector<8x128xf32>
      %406 = arith.mulf %405, %403 : vector<8x128xf32>
      %407 = arith.addf %394, %406 : vector<8x128xf32>
      %c41 = arith.constant 41 : index
      %408 = memref.load %arg2[%c41] : memref<81xf32, #tpu.memory_space<smem>>
      %409 = vector.broadcast %408 : f32 to vector<8x128xf32>
      %410 = arith.mulf %409, %403 : vector<8x128xf32>
      %411 = arith.addf %398, %410 : vector<8x128xf32>
      %c68 = arith.constant 68 : index
      %412 = memref.load %arg2[%c68] : memref<81xf32, #tpu.memory_space<smem>>
      %413 = vector.broadcast %412 : f32 to vector<8x128xf32>
      %414 = arith.mulf %413, %403 : vector<8x128xf32>
      %415 = arith.addf %402, %414 : vector<8x128xf32>
      %416 = vector.extract_strided_slice %389 {offsets = [2, 0], sizes = [8, 128], strides = [1, 1]} : vector<10x128xf32> to vector<8x128xf32>
      %c17 = arith.constant 17 : index
      %417 = memref.load %arg2[%c17] : memref<81xf32, #tpu.memory_space<smem>>
      %418 = vector.broadcast %417 : f32 to vector<8x128xf32>
      %419 = arith.mulf %418, %416 : vector<8x128xf32>
      %420 = arith.addf %407, %419 : vector<8x128xf32>
      %c44 = arith.constant 44 : index
      %421 = memref.load %arg2[%c44] : memref<81xf32, #tpu.memory_space<smem>>
      %422 = vector.broadcast %421 : f32 to vector<8x128xf32>
      %423 = arith.mulf %422, %416 : vector<8x128xf32>
      %424 = arith.addf %411, %423 : vector<8x128xf32>
      %c71 = arith.constant 71 : index
      %425 = memref.load %arg2[%c71] : memref<81xf32, #tpu.memory_space<smem>>
      %426 = vector.broadcast %425 : f32 to vector<8x128xf32>
      %427 = arith.mulf %426, %416 : vector<8x128xf32>
      %428 = arith.addf %415, %427 : vector<8x128xf32>
      %c2_136 = arith.constant 2 : index
      %429 = arith.index_cast %183 : i32 to index
      %c0_137 = arith.constant 0 : index
      %430 = vector.load %arg8[%c2_136, %429, %c0_137] : memref<3x40x128xf32, #tpu.memory_space<vmem>>, vector<1x10x128xf32>
      %431 = vector.shape_cast %430 : vector<1x10x128xf32> to vector<10x128xf32>
      %432 = vector.broadcast %86 : f32 to vector<10x128xf32>
      %433 = arith.mulf %431, %432 : vector<10x128xf32>
      %434 = vector.extract_strided_slice %433 {offsets = [0, 0], sizes = [8, 128], strides = [1, 1]} : vector<10x128xf32> to vector<8x128xf32>
      %c18 = arith.constant 18 : index
      %435 = memref.load %arg2[%c18] : memref<81xf32, #tpu.memory_space<smem>>
      %436 = vector.broadcast %435 : f32 to vector<8x128xf32>
      %437 = arith.mulf %436, %434 : vector<8x128xf32>
      %438 = arith.addf %420, %437 : vector<8x128xf32>
      %c45 = arith.constant 45 : index
      %439 = memref.load %arg2[%c45] : memref<81xf32, #tpu.memory_space<smem>>
      %440 = vector.broadcast %439 : f32 to vector<8x128xf32>
      %441 = arith.mulf %440, %434 : vector<8x128xf32>
      %442 = arith.addf %424, %441 : vector<8x128xf32>
      %c72 = arith.constant 72 : index
      %443 = memref.load %arg2[%c72] : memref<81xf32, #tpu.memory_space<smem>>
      %444 = vector.broadcast %443 : f32 to vector<8x128xf32>
      %445 = arith.mulf %444, %434 : vector<8x128xf32>
      %446 = arith.addf %428, %445 : vector<8x128xf32>
      %447 = vector.extract_strided_slice %433 {offsets = [1, 0], sizes = [8, 128], strides = [1, 1]} : vector<10x128xf32> to vector<8x128xf32>
      %c21 = arith.constant 21 : index
      %448 = memref.load %arg2[%c21] : memref<81xf32, #tpu.memory_space<smem>>
      %449 = vector.broadcast %448 : f32 to vector<8x128xf32>
      %450 = arith.mulf %449, %447 : vector<8x128xf32>
      %451 = arith.addf %438, %450 : vector<8x128xf32>
      %c48 = arith.constant 48 : index
      %452 = memref.load %arg2[%c48] : memref<81xf32, #tpu.memory_space<smem>>
      %453 = vector.broadcast %452 : f32 to vector<8x128xf32>
      %454 = arith.mulf %453, %447 : vector<8x128xf32>
      %455 = arith.addf %442, %454 : vector<8x128xf32>
      %c75 = arith.constant 75 : index
      %456 = memref.load %arg2[%c75] : memref<81xf32, #tpu.memory_space<smem>>
      %457 = vector.broadcast %456 : f32 to vector<8x128xf32>
      %458 = arith.mulf %457, %447 : vector<8x128xf32>
      %459 = arith.addf %446, %458 : vector<8x128xf32>
      %460 = vector.extract_strided_slice %433 {offsets = [2, 0], sizes = [8, 128], strides = [1, 1]} : vector<10x128xf32> to vector<8x128xf32>
      %c24 = arith.constant 24 : index
      %461 = memref.load %arg2[%c24] : memref<81xf32, #tpu.memory_space<smem>>
      %462 = vector.broadcast %461 : f32 to vector<8x128xf32>
      %463 = arith.mulf %462, %460 : vector<8x128xf32>
      %464 = arith.addf %451, %463 : vector<8x128xf32>
      %c51 = arith.constant 51 : index
      %465 = memref.load %arg2[%c51] : memref<81xf32, #tpu.memory_space<smem>>
      %466 = vector.broadcast %465 : f32 to vector<8x128xf32>
      %467 = arith.mulf %466, %460 : vector<8x128xf32>
      %468 = arith.addf %455, %467 : vector<8x128xf32>
      %c78 = arith.constant 78 : index
      %469 = memref.load %arg2[%c78] : memref<81xf32, #tpu.memory_space<smem>>
      %470 = vector.broadcast %469 : f32 to vector<8x128xf32>
      %471 = arith.mulf %470, %460 : vector<8x128xf32>
      %472 = arith.addf %459, %471 : vector<8x128xf32>
      %c127_i32_138 = arith.constant 127 : i32
      %473 = tpu.dynamic_rotate %433 by %c127_i32_138 dim 1 : vector<10x128xf32>, i32 -> vector<10x128xf32>
      %474 = vector.extract_strided_slice %473 {offsets = [0, 0], sizes = [8, 128], strides = [1, 1]} : vector<10x128xf32> to vector<8x128xf32>
      %c19 = arith.constant 19 : index
      %475 = memref.load %arg2[%c19] : memref<81xf32, #tpu.memory_space<smem>>
      %476 = vector.broadcast %475 : f32 to vector<8x128xf32>
      %477 = arith.mulf %476, %474 : vector<8x128xf32>
      %478 = arith.addf %464, %477 : vector<8x128xf32>
      %c46 = arith.constant 46 : index
      %479 = memref.load %arg2[%c46] : memref<81xf32, #tpu.memory_space<smem>>
      %480 = vector.broadcast %479 : f32 to vector<8x128xf32>
      %481 = arith.mulf %480, %474 : vector<8x128xf32>
      %482 = arith.addf %468, %481 : vector<8x128xf32>
      %c73 = arith.constant 73 : index
      %483 = memref.load %arg2[%c73] : memref<81xf32, #tpu.memory_space<smem>>
      %484 = vector.broadcast %483 : f32 to vector<8x128xf32>
      %485 = arith.mulf %484, %474 : vector<8x128xf32>
      %486 = arith.addf %472, %485 : vector<8x128xf32>
      %487 = vector.extract_strided_slice %473 {offsets = [1, 0], sizes = [8, 128], strides = [1, 1]} : vector<10x128xf32> to vector<8x128xf32>
      %c22 = arith.constant 22 : index
      %488 = memref.load %arg2[%c22] : memref<81xf32, #tpu.memory_space<smem>>
      %489 = vector.broadcast %488 : f32 to vector<8x128xf32>
      %490 = arith.mulf %489, %487 : vector<8x128xf32>
      %491 = arith.addf %478, %490 : vector<8x128xf32>
      %c49 = arith.constant 49 : index
      %492 = memref.load %arg2[%c49] : memref<81xf32, #tpu.memory_space<smem>>
      %493 = vector.broadcast %492 : f32 to vector<8x128xf32>
      %494 = arith.mulf %493, %487 : vector<8x128xf32>
      %495 = arith.addf %482, %494 : vector<8x128xf32>
      %c76 = arith.constant 76 : index
      %496 = memref.load %arg2[%c76] : memref<81xf32, #tpu.memory_space<smem>>
      %497 = vector.broadcast %496 : f32 to vector<8x128xf32>
      %498 = arith.mulf %497, %487 : vector<8x128xf32>
      %499 = arith.addf %486, %498 : vector<8x128xf32>
      %500 = vector.extract_strided_slice %473 {offsets = [2, 0], sizes = [8, 128], strides = [1, 1]} : vector<10x128xf32> to vector<8x128xf32>
      %c25 = arith.constant 25 : index
      %501 = memref.load %arg2[%c25] : memref<81xf32, #tpu.memory_space<smem>>
      %502 = vector.broadcast %501 : f32 to vector<8x128xf32>
      %503 = arith.mulf %502, %500 : vector<8x128xf32>
      %504 = arith.addf %491, %503 : vector<8x128xf32>
      %c52 = arith.constant 52 : index
      %505 = memref.load %arg2[%c52] : memref<81xf32, #tpu.memory_space<smem>>
      %506 = vector.broadcast %505 : f32 to vector<8x128xf32>
      %507 = arith.mulf %506, %500 : vector<8x128xf32>
      %508 = arith.addf %495, %507 : vector<8x128xf32>
      %c79 = arith.constant 79 : index
      %509 = memref.load %arg2[%c79] : memref<81xf32, #tpu.memory_space<smem>>
      %510 = vector.broadcast %509 : f32 to vector<8x128xf32>
      %511 = arith.mulf %510, %500 : vector<8x128xf32>
      %512 = arith.addf %499, %511 : vector<8x128xf32>
      %c126_i32_139 = arith.constant 126 : i32
      %513 = tpu.dynamic_rotate %433 by %c126_i32_139 dim 1 : vector<10x128xf32>, i32 -> vector<10x128xf32>
      %514 = vector.extract_strided_slice %513 {offsets = [0, 0], sizes = [8, 128], strides = [1, 1]} : vector<10x128xf32> to vector<8x128xf32>
      %c20 = arith.constant 20 : index
      %515 = memref.load %arg2[%c20] : memref<81xf32, #tpu.memory_space<smem>>
      %516 = vector.broadcast %515 : f32 to vector<8x128xf32>
      %517 = arith.mulf %516, %514 : vector<8x128xf32>
      %518 = arith.addf %504, %517 : vector<8x128xf32>
      %c47 = arith.constant 47 : index
      %519 = memref.load %arg2[%c47] : memref<81xf32, #tpu.memory_space<smem>>
      %520 = vector.broadcast %519 : f32 to vector<8x128xf32>
      %521 = arith.mulf %520, %514 : vector<8x128xf32>
      %522 = arith.addf %508, %521 : vector<8x128xf32>
      %c74 = arith.constant 74 : index
      %523 = memref.load %arg2[%c74] : memref<81xf32, #tpu.memory_space<smem>>
      %524 = vector.broadcast %523 : f32 to vector<8x128xf32>
      %525 = arith.mulf %524, %514 : vector<8x128xf32>
      %526 = arith.addf %512, %525 : vector<8x128xf32>
      %527 = vector.extract_strided_slice %513 {offsets = [1, 0], sizes = [8, 128], strides = [1, 1]} : vector<10x128xf32> to vector<8x128xf32>
      %c23 = arith.constant 23 : index
      %528 = memref.load %arg2[%c23] : memref<81xf32, #tpu.memory_space<smem>>
      %529 = vector.broadcast %528 : f32 to vector<8x128xf32>
      %530 = arith.mulf %529, %527 : vector<8x128xf32>
      %531 = arith.addf %518, %530 : vector<8x128xf32>
      %c50 = arith.constant 50 : index
      %532 = memref.load %arg2[%c50] : memref<81xf32, #tpu.memory_space<smem>>
      %533 = vector.broadcast %532 : f32 to vector<8x128xf32>
      %534 = arith.mulf %533, %527 : vector<8x128xf32>
      %535 = arith.addf %522, %534 : vector<8x128xf32>
      %c77 = arith.constant 77 : index
      %536 = memref.load %arg2[%c77] : memref<81xf32, #tpu.memory_space<smem>>
      %537 = vector.broadcast %536 : f32 to vector<8x128xf32>
      %538 = arith.mulf %537, %527 : vector<8x128xf32>
      %539 = arith.addf %526, %538 : vector<8x128xf32>
      %540 = vector.extract_strided_slice %513 {offsets = [2, 0], sizes = [8, 128], strides = [1, 1]} : vector<10x128xf32> to vector<8x128xf32>
      %c26 = arith.constant 26 : index
      %541 = memref.load %arg2[%c26] : memref<81xf32, #tpu.memory_space<smem>>
      %542 = vector.broadcast %541 : f32 to vector<8x128xf32>
      %543 = arith.mulf %542, %540 : vector<8x128xf32>
      %544 = arith.addf %531, %543 : vector<8x128xf32>
      %c53 = arith.constant 53 : index
      %545 = memref.load %arg2[%c53] : memref<81xf32, #tpu.memory_space<smem>>
      %546 = vector.broadcast %545 : f32 to vector<8x128xf32>
      %547 = arith.mulf %546, %540 : vector<8x128xf32>
      %548 = arith.addf %535, %547 : vector<8x128xf32>
      %c80 = arith.constant 80 : index
      %549 = memref.load %arg2[%c80] : memref<81xf32, #tpu.memory_space<smem>>
      %550 = vector.broadcast %549 : f32 to vector<8x128xf32>
      %551 = arith.mulf %550, %540 : vector<8x128xf32>
      %552 = arith.addf %539, %551 : vector<8x128xf32>
      %c28_i32 = arith.constant 28 : i32
      %553 = arith.subi %c28_i32, %183 : i32
      %554 = vector.broadcast %553 : i32 to vector<8x128xi32>
      %555 = arith.cmpi slt, %0, %554 : vector<8x128xi32>
      %c28_i32_140 = arith.constant 28 : i32
      %556 = vector.broadcast %c28_i32_140 : i32 to vector<8x128xi32>
      %557 = arith.cmpi slt, %1, %556 : vector<8x128xi32>
      %558 = arith.andi %555, %557 : vector<8x128xi1>
      %cst_141 = arith.constant 0.000000e+00 : f32
      %559 = vector.broadcast %cst_141 : f32 to vector<8x128xf32>
      %560 = arith.select %558, %544, %559 : vector<8x128xi1>, vector<8x128xf32>
      %c0_142 = arith.constant 0 : index
      %c0_143 = arith.constant 0 : index
      %c0_144 = arith.constant 0 : index
      %561 = vector.load %arg9[%c0_142, %c0_143, %c0_144] : memref<3x1x128xf32, #tpu.memory_space<vmem>>, vector<1x1x128xf32>
      %562 = vector.shape_cast %561 : vector<1x1x128xf32> to vector<1x128xf32>
      %cst_145 = arith.constant dense<0.000000e+00> : vector<128xf32>
      %563 = vector.multi_reduction <add>, %560, %cst_145 [0] : vector<8x128xf32> to vector<128xf32>
      %564 = vector.shape_cast %563 : vector<128xf32> to vector<1x128xf32>
      %565 = arith.addf %562, %564 : vector<1x128xf32>
      %c0_146 = arith.constant 0 : index
      %c0_147 = arith.constant 0 : index
      %c0_148 = arith.constant 0 : index
      %566 = vector.load %arg9[%c0_146, %c0_147, %c0_148] : memref<3x1x128xf32, #tpu.memory_space<vmem>>, vector<1x1x128xf32>
      %567 = vector.shape_cast %566 : vector<1x1x128xf32> to vector<1x128xf32>
      %568 = vector.shape_cast %565 : vector<1x128xf32> to vector<1x1x128xf32>
      tpu.vector_store %arg9[%c0_146, %c0_147, %c0_148], %568 {strides = array<i32>} : memref<3x1x128xf32, #tpu.memory_space<vmem>>, vector<1x1x128xf32>,
      %c0_149 = arith.constant 0 : index
      %c0_150 = arith.constant 0 : index
      %c0_151 = arith.constant 0 : index
      %569 = vector.load %arg10[%c0_149, %c0_150, %c0_151] : memref<3x1x128xf32, #tpu.memory_space<vmem>>, vector<1x1x128xf32>
      %570 = vector.shape_cast %569 : vector<1x1x128xf32> to vector<1x128xf32>
      %571 = arith.mulf %560, %560 : vector<8x128xf32>
      %cst_152 = arith.constant dense<0.000000e+00> : vector<128xf32>
      %572 = vector.multi_reduction <add>, %571, %cst_152 [0] : vector<8x128xf32> to vector<128xf32>
      %573 = vector.shape_cast %572 : vector<128xf32> to vector<1x128xf32>
      %574 = arith.addf %570, %573 : vector<1x128xf32>
      %c0_153 = arith.constant 0 : index
      %c0_154 = arith.constant 0 : index
      %c0_155 = arith.constant 0 : index
      %575 = vector.load %arg10[%c0_153, %c0_154, %c0_155] : memref<3x1x128xf32, #tpu.memory_space<vmem>>, vector<1x1x128xf32>
      %576 = vector.shape_cast %575 : vector<1x1x128xf32> to vector<1x128xf32>
      %577 = vector.shape_cast %574 : vector<1x128xf32> to vector<1x1x128xf32>
      tpu.vector_store %arg10[%c0_153, %c0_154, %c0_155], %577 {strides = array<i32>} : memref<3x1x128xf32, #tpu.memory_space<vmem>>, vector<1x1x128xf32>,
      %cst_156 = arith.constant 0.000000e+00 : f32
      %578 = vector.broadcast %cst_156 : f32 to vector<8x128xf32>
      %579 = arith.select %558, %548, %578 : vector<8x128xi1>, vector<8x128xf32>
      %c1_157 = arith.constant 1 : index
      %c0_158 = arith.constant 0 : index
      %c0_159 = arith.constant 0 : index
      %580 = vector.load %arg9[%c1_157, %c0_158, %c0_159] : memref<3x1x128xf32, #tpu.memory_space<vmem>>, vector<1x1x128xf32>
      %581 = vector.shape_cast %580 : vector<1x1x128xf32> to vector<1x128xf32>
      %cst_160 = arith.constant dense<0.000000e+00> : vector<128xf32>
      %582 = vector.multi_reduction <add>, %579, %cst_160 [0] : vector<8x128xf32> to vector<128xf32>
      %583 = vector.shape_cast %582 : vector<128xf32> to vector<1x128xf32>
      %584 = arith.addf %581, %583 : vector<1x128xf32>
      %c1_161 = arith.constant 1 : index
      %c0_162 = arith.constant 0 : index
      %c0_163 = arith.constant 0 : index
      %585 = vector.load %arg9[%c1_161, %c0_162, %c0_163] : memref<3x1x128xf32, #tpu.memory_space<vmem>>, vector<1x1x128xf32>
      %586 = vector.shape_cast %585 : vector<1x1x128xf32> to vector<1x128xf32>
      %587 = vector.shape_cast %584 : vector<1x128xf32> to vector<1x1x128xf32>
      tpu.vector_store %arg9[%c1_161, %c0_162, %c0_163], %587 {strides = array<i32>} : memref<3x1x128xf32, #tpu.memory_space<vmem>>, vector<1x1x128xf32>,
      %c1_164 = arith.constant 1 : index
      %c0_165 = arith.constant 0 : index
      %c0_166 = arith.constant 0 : index
      %588 = vector.load %arg10[%c1_164, %c0_165, %c0_166] : memref<3x1x128xf32, #tpu.memory_space<vmem>>, vector<1x1x128xf32>
      %589 = vector.shape_cast %588 : vector<1x1x128xf32> to vector<1x128xf32>
      %590 = arith.mulf %579, %579 : vector<8x128xf32>
      %cst_167 = arith.constant dense<0.000000e+00> : vector<128xf32>
      %591 = vector.multi_reduction <add>, %590, %cst_167 [0] : vector<8x128xf32> to vector<128xf32>
      %592 = vector.shape_cast %591 : vector<128xf32> to vector<1x128xf32>
      %593 = arith.addf %589, %592 : vector<1x128xf32>
      %c1_168 = arith.constant 1 : index
      %c0_169 = arith.constant 0 : index
      %c0_170 = arith.constant 0 : index
      %594 = vector.load %arg10[%c1_168, %c0_169, %c0_170] : memref<3x1x128xf32, #tpu.memory_space<vmem>>, vector<1x1x128xf32>
      %595 = vector.shape_cast %594 : vector<1x1x128xf32> to vector<1x128xf32>
      %596 = vector.shape_cast %593 : vector<1x128xf32> to vector<1x1x128xf32>
      tpu.vector_store %arg10[%c1_168, %c0_169, %c0_170], %596 {strides = array<i32>} : memref<3x1x128xf32, #tpu.memory_space<vmem>>, vector<1x1x128xf32>,
      %cst_171 = arith.constant 0.000000e+00 : f32
      %597 = vector.broadcast %cst_171 : f32 to vector<8x128xf32>
      %598 = arith.select %558, %552, %597 : vector<8x128xi1>, vector<8x128xf32>
      %c2_172 = arith.constant 2 : index
      %c0_173 = arith.constant 0 : index
      %c0_174 = arith.constant 0 : index
      %599 = vector.load %arg9[%c2_172, %c0_173, %c0_174] : memref<3x1x128xf32, #tpu.memory_space<vmem>>, vector<1x1x128xf32>
      %600 = vector.shape_cast %599 : vector<1x1x128xf32> to vector<1x128xf32>
      %cst_175 = arith.constant dense<0.000000e+00> : vector<128xf32>
      %601 = vector.multi_reduction <add>, %598, %cst_175 [0] : vector<8x128xf32> to vector<128xf32>
      %602 = vector.shape_cast %601 : vector<128xf32> to vector<1x128xf32>
      %603 = arith.addf %600, %602 : vector<1x128xf32>
      %c2_176 = arith.constant 2 : index
      %c0_177 = arith.constant 0 : index
      %c0_178 = arith.constant 0 : index
      %604 = vector.load %arg9[%c2_176, %c0_177, %c0_178] : memref<3x1x128xf32, #tpu.memory_space<vmem>>, vector<1x1x128xf32>
      %605 = vector.shape_cast %604 : vector<1x1x128xf32> to vector<1x128xf32>
      %606 = vector.shape_cast %603 : vector<1x128xf32> to vector<1x1x128xf32>
      tpu.vector_store %arg9[%c2_176, %c0_177, %c0_178], %606 {strides = array<i32>} : memref<3x1x128xf32, #tpu.memory_space<vmem>>, vector<1x1x128xf32>,
      %c2_179 = arith.constant 2 : index
      %c0_180 = arith.constant 0 : index
      %c0_181 = arith.constant 0 : index
      %607 = vector.load %arg10[%c2_179, %c0_180, %c0_181] : memref<3x1x128xf32, #tpu.memory_space<vmem>>, vector<1x1x128xf32>
      %608 = vector.shape_cast %607 : vector<1x1x128xf32> to vector<1x128xf32>
      %609 = arith.mulf %598, %598 : vector<8x128xf32>
      %cst_182 = arith.constant dense<0.000000e+00> : vector<128xf32>
      %610 = vector.multi_reduction <add>, %609, %cst_182 [0] : vector<8x128xf32> to vector<128xf32>
      %611 = vector.shape_cast %610 : vector<128xf32> to vector<1x128xf32>
      %612 = arith.addf %608, %611 : vector<1x128xf32>
      %c2_183 = arith.constant 2 : index
      %c0_184 = arith.constant 0 : index
      %c0_185 = arith.constant 0 : index
      %613 = vector.load %arg10[%c2_183, %c0_184, %c0_185] : memref<3x1x128xf32, #tpu.memory_space<vmem>>, vector<1x1x128xf32>
      %614 = vector.shape_cast %613 : vector<1x1x128xf32> to vector<1x128xf32>
      %615 = vector.shape_cast %612 : vector<1x128xf32> to vector<1x1x128xf32>
      tpu.vector_store %arg10[%c2_183, %c0_184, %c0_185], %615 {strides = array<i32>} : memref<3x1x128xf32, #tpu.memory_space<vmem>>, vector<1x1x128xf32>,
      %c0_186 = arith.constant 0 : index
      %616 = arith.index_cast %183 : i32 to index
      %c0_187 = arith.constant 0 : index
      %617 = vector.load %arg7[%c0_186, %616, %c0_187] : memref<3x32x128xf32, #tpu.memory_space<vmem>>, vector<1x8x128xf32>
      %618 = vector.shape_cast %617 : vector<1x8x128xf32> to vector<8x128xf32>
      %619 = vector.shape_cast %544 : vector<8x128xf32> to vector<1x8x128xf32>
      tpu.vector_store %arg7[%c0_186, %616, %c0_187], %619 {strides = array<i32>} : memref<3x32x128xf32, #tpu.memory_space<vmem>>, vector<1x8x128xf32>,
      %c1_188 = arith.constant 1 : index
      %620 = arith.index_cast %183 : i32 to index
      %c0_189 = arith.constant 0 : index
      %621 = vector.load %arg7[%c1_188, %620, %c0_189] : memref<3x32x128xf32, #tpu.memory_space<vmem>>, vector<1x8x128xf32>
      %622 = vector.shape_cast %621 : vector<1x8x128xf32> to vector<8x128xf32>
      %623 = vector.shape_cast %548 : vector<8x128xf32> to vector<1x8x128xf32>
      tpu.vector_store %arg7[%c1_188, %620, %c0_189], %623 {strides = array<i32>} : memref<3x32x128xf32, #tpu.memory_space<vmem>>, vector<1x8x128xf32>,
      %c2_190 = arith.constant 2 : index
      %624 = arith.index_cast %183 : i32 to index
      %c0_191 = arith.constant 0 : index
      %625 = vector.load %arg7[%c2_190, %624, %c0_191] : memref<3x32x128xf32, #tpu.memory_space<vmem>>, vector<1x8x128xf32>
      %626 = vector.shape_cast %625 : vector<1x8x128xf32> to vector<8x128xf32>
      %627 = vector.shape_cast %552 : vector<8x128xf32> to vector<1x8x128xf32>
      tpu.vector_store %arg7[%c2_190, %624, %c0_191], %627 {strides = array<i32>} : memref<3x32x128xf32, #tpu.memory_space<vmem>>, vector<1x8x128xf32>,
    }
    %c4_i32_83 = arith.constant 4 : i32
    %c0_84 = arith.constant 0 : index
    %c0_85 = arith.constant 0 : index
    %c0_86 = arith.constant 0 : index
    %112 = vector.load %arg9[%c0_84, %c0_85, %c0_86] : memref<3x1x128xf32, #tpu.memory_space<vmem>>, vector<1x1x128xf32>
    %113 = vector.shape_cast %112 : vector<1x1x128xf32> to vector<1x128xf32>
    %114 = vector.shape_cast %113 : vector<1x128xf32> to vector<1x1x128xf32>
    %cst_87 = arith.constant dense<0.000000e+00> : vector<1xf32>
    %115 = vector.multi_reduction <add>, %114, %cst_87 [1, 2] : vector<1x1x128xf32> to vector<1xf32>
    %116 = vector.shape_cast %115 : vector<1xf32> to vector<1x1x1xf32>
    %117 = vector.extract %116[0, 0, 0] : f32 from vector<1x1x1xf32>
    %cst_88 = arith.constant 7.840000e+02 : f32
    %118 = arith.divf %117, %cst_88 : f32
    %c0_89 = arith.constant 0 : index
    %c0_90 = arith.constant 0 : index
    %c0_91 = arith.constant 0 : index
    %119 = vector.load %arg10[%c0_89, %c0_90, %c0_91] : memref<3x1x128xf32, #tpu.memory_space<vmem>>, vector<1x1x128xf32>
    %120 = vector.shape_cast %119 : vector<1x1x128xf32> to vector<1x128xf32>
    %121 = vector.shape_cast %120 : vector<1x128xf32> to vector<1x1x128xf32>
    %cst_92 = arith.constant dense<0.000000e+00> : vector<1xf32>
    %122 = vector.multi_reduction <add>, %121, %cst_92 [1, 2] : vector<1x1x128xf32> to vector<1xf32>
    %123 = vector.shape_cast %122 : vector<1xf32> to vector<1x1x1xf32>
    %124 = vector.extract %123[0, 0, 0] : f32 from vector<1x1x1xf32>
    %cst_93 = arith.constant 7.840000e+02 : f32
    %125 = arith.divf %124, %cst_93 : f32
    %126 = arith.mulf %118, %118 : f32
    %127 = arith.subf %125, %126 : f32
    %cst_94 = arith.constant 9.99999974E-6 : f32
    %128 = arith.addf %127, %cst_94 : f32
    %129 = math.rsqrt %128 : f32
    %c1_95 = arith.constant 1 : index
    %c0_96 = arith.constant 0 : index
    %c0_97 = arith.constant 0 : index
    %130 = vector.load %arg9[%c1_95, %c0_96, %c0_97] : memref<3x1x128xf32, #tpu.memory_space<vmem>>, vector<1x1x128xf32>
    %131 = vector.shape_cast %130 : vector<1x1x128xf32> to vector<1x128xf32>
    %132 = vector.shape_cast %131 : vector<1x128xf32> to vector<1x1x128xf32>
    %cst_98 = arith.constant dense<0.000000e+00> : vector<1xf32>
    %133 = vector.multi_reduction <add>, %132, %cst_98 [1, 2] : vector<1x1x128xf32> to vector<1xf32>
    %134 = vector.shape_cast %133 : vector<1xf32> to vector<1x1x1xf32>
    %135 = vector.extract %134[0, 0, 0] : f32 from vector<1x1x1xf32>
    %cst_99 = arith.constant 7.840000e+02 : f32
    %136 = arith.divf %135, %cst_99 : f32
    %c1_100 = arith.constant 1 : index
    %c0_101 = arith.constant 0 : index
    %c0_102 = arith.constant 0 : index
    %137 = vector.load %arg10[%c1_100, %c0_101, %c0_102] : memref<3x1x128xf32, #tpu.memory_space<vmem>>, vector<1x1x128xf32>
    %138 = vector.shape_cast %137 : vector<1x1x128xf32> to vector<1x128xf32>
    %139 = vector.shape_cast %138 : vector<1x128xf32> to vector<1x1x128xf32>
    %cst_103 = arith.constant dense<0.000000e+00> : vector<1xf32>
    %140 = vector.multi_reduction <add>, %139, %cst_103 [1, 2] : vector<1x1x128xf32> to vector<1xf32>
    %141 = vector.shape_cast %140 : vector<1xf32> to vector<1x1x1xf32>
    %142 = vector.extract %141[0, 0, 0] : f32 from vector<1x1x1xf32>
    %cst_104 = arith.constant 7.840000e+02 : f32
    %143 = arith.divf %142, %cst_104 : f32
    %144 = arith.mulf %136, %136 : f32
    %145 = arith.subf %143, %144 : f32
    %cst_105 = arith.constant 9.99999974E-6 : f32
    %146 = arith.addf %145, %cst_105 : f32
    %147 = math.rsqrt %146 : f32
    %c2_106 = arith.constant 2 : index
    %c0_107 = arith.constant 0 : index
    %c0_108 = arith.constant 0 : index
    %148 = vector.load %arg9[%c2_106, %c0_107, %c0_108] : memref<3x1x128xf32, #tpu.memory_space<vmem>>, vector<1x1x128xf32>
    %149 = vector.shape_cast %148 : vector<1x1x128xf32> to vector<1x128xf32>
    %150 = vector.shape_cast %149 : vector<1x128xf32> to vector<1x1x128xf32>
    %cst_109 = arith.constant dense<0.000000e+00> : vector<1xf32>
    %151 = vector.multi_reduction <add>, %150, %cst_109 [1, 2] : vector<1x1x128xf32> to vector<1xf32>
    %152 = vector.shape_cast %151 : vector<1xf32> to vector<1x1x1xf32>
    %153 = vector.extract %152[0, 0, 0] : f32 from vector<1x1x1xf32>
    %cst_110 = arith.constant 7.840000e+02 : f32
    %154 = arith.divf %153, %cst_110 : f32
    %c2_111 = arith.constant 2 : index
    %c0_112 = arith.constant 0 : index
    %c0_113 = arith.constant 0 : index
    %155 = vector.load %arg10[%c2_111, %c0_112, %c0_113] : memref<3x1x128xf32, #tpu.memory_space<vmem>>, vector<1x1x128xf32>
    %156 = vector.shape_cast %155 : vector<1x1x128xf32> to vector<1x128xf32>
    %157 = vector.shape_cast %156 : vector<1x128xf32> to vector<1x1x128xf32>
    %cst_114 = arith.constant dense<0.000000e+00> : vector<1xf32>
    %158 = vector.multi_reduction <add>, %157, %cst_114 [1, 2] : vector<1x1x128xf32> to vector<1xf32>
    %159 = vector.shape_cast %158 : vector<1xf32> to vector<1x1x1xf32>
    %160 = vector.extract %159[0, 0, 0] : f32 from vector<1x1x1xf32>
    %cst_115 = arith.constant 7.840000e+02 : f32
    %161 = arith.divf %160, %cst_115 : f32
    %162 = arith.mulf %154, %154 : f32
    %163 = arith.subf %161, %162 : f32
    %cst_116 = arith.constant 9.99999974E-6 : f32
    %164 = arith.addf %163, %cst_116 : f32
    %165 = math.rsqrt %164 : f32
    %c0_117 = arith.constant 0 : index
    %166 = memref.load %arg5[%c0_117] : memref<3xf32, #tpu.memory_space<smem>>
    %167 = arith.mulf %166, %129 : f32
    %c1_118 = arith.constant 1 : index
    %168 = memref.load %arg5[%c1_118] : memref<3xf32, #tpu.memory_space<smem>>
    %169 = arith.mulf %168, %147 : f32
    %c2_119 = arith.constant 2 : index
    %170 = memref.load %arg5[%c2_119] : memref<3xf32, #tpu.memory_space<smem>>
    %171 = arith.mulf %170, %165 : f32
    %c0_120 = arith.constant 0 : index
    %172 = memref.load %arg6[%c0_120] : memref<3xf32, #tpu.memory_space<smem>>
    %173 = arith.mulf %118, %167 : f32
    %174 = arith.subf %172, %173 : f32
    %c1_121 = arith.constant 1 : index
    %175 = memref.load %arg6[%c1_121] : memref<3xf32, #tpu.memory_space<smem>>
    %176 = arith.mulf %136, %169 : f32
    %177 = arith.subf %175, %176 : f32
    %c2_122 = arith.constant 2 : index
    %178 = memref.load %arg6[%c2_122] : memref<3xf32, #tpu.memory_space<smem>>
    %179 = arith.mulf %154, %171 : f32
    %180 = arith.subf %178, %179 : f32
    %c0_i32_123 = arith.constant 0 : i32
    %c4_i32_124 = arith.constant 4 : i32
    %181 = arith.addi %c0_i32_123, %c4_i32_124 : i32
    %c1_i32_125 = arith.constant 1 : i32
    scf.for %arg11 = %c0_i32_123 to %181 step %c1_i32_125  : i32 {
      %c8_i32 = arith.constant 8 : i32
      %182 = arith.muli %arg11, %c8_i32 : i32
      %183 = tpu.assume_multiple %182, 8 : i32
      %c0_127 = arith.constant 0 : index
      %184 = arith.index_cast %183 : i32 to index
      %c0_128 = arith.constant 0 : index
      %185 = vector.load %arg7[%c0_127, %184, %c0_128] : memref<3x32x128xf32, #tpu.memory_space<vmem>>, vector<1x8x128xf32>
      %186 = vector.shape_cast %185 : vector<1x8x128xf32> to vector<8x128xf32>
      %187 = vector.broadcast %167 : f32 to vector<8x128xf32>
      %188 = arith.mulf %186, %187 : vector<8x128xf32>
      %189 = vector.broadcast %174 : f32 to vector<8x128xf32>
      %190 = arith.addf %188, %189 : vector<8x128xf32>
      %c0_129 = arith.constant 0 : index
      %191 = arith.index_cast %183 : i32 to index
      %c0_130 = arith.constant 0 : index
      %192 = vector.load %arg7[%c0_129, %191, %c0_130] : memref<3x32x128xf32, #tpu.memory_space<vmem>>, vector<1x8x128xf32>
      %193 = vector.shape_cast %192 : vector<1x8x128xf32> to vector<8x128xf32>
      %194 = vector.shape_cast %190 : vector<8x128xf32> to vector<1x8x128xf32>
      tpu.vector_store %arg7[%c0_129, %191, %c0_130], %194 {strides = array<i32>} : memref<3x32x128xf32, #tpu.memory_space<vmem>>, vector<1x8x128xf32>,
      %c1_131 = arith.constant 1 : index
      %195 = arith.index_cast %183 : i32 to index
      %c0_132 = arith.constant 0 : index
      %196 = vector.load %arg7[%c1_131, %195, %c0_132] : memref<3x32x128xf32, #tpu.memory_space<vmem>>, vector<1x8x128xf32>
      %197 = vector.shape_cast %196 : vector<1x8x128xf32> to vector<8x128xf32>
      %198 = vector.broadcast %169 : f32 to vector<8x128xf32>
      %199 = arith.mulf %197, %198 : vector<8x128xf32>
      %200 = vector.broadcast %177 : f32 to vector<8x128xf32>
      %201 = arith.addf %199, %200 : vector<8x128xf32>
      %c1_133 = arith.constant 1 : index
      %202 = arith.index_cast %183 : i32 to index
      %c0_134 = arith.constant 0 : index
      %203 = vector.load %arg7[%c1_133, %202, %c0_134] : memref<3x32x128xf32, #tpu.memory_space<vmem>>, vector<1x8x128xf32>
      %204 = vector.shape_cast %203 : vector<1x8x128xf32> to vector<8x128xf32>
      %205 = vector.shape_cast %201 : vector<8x128xf32> to vector<1x8x128xf32>
      tpu.vector_store %arg7[%c1_133, %202, %c0_134], %205 {strides = array<i32>} : memref<3x32x128xf32, #tpu.memory_space<vmem>>, vector<1x8x128xf32>,
      %c2_135 = arith.constant 2 : index
      %206 = arith.index_cast %183 : i32 to index
      %c0_136 = arith.constant 0 : index
      %207 = vector.load %arg7[%c2_135, %206, %c0_136] : memref<3x32x128xf32, #tpu.memory_space<vmem>>, vector<1x8x128xf32>
      %208 = vector.shape_cast %207 : vector<1x8x128xf32> to vector<8x128xf32>
      %209 = vector.broadcast %171 : f32 to vector<8x128xf32>
      %210 = arith.mulf %208, %209 : vector<8x128xf32>
      %211 = vector.broadcast %180 : f32 to vector<8x128xf32>
      %212 = arith.addf %210, %211 : vector<8x128xf32>
      %c2_137 = arith.constant 2 : index
      %213 = arith.index_cast %183 : i32 to index
      %c0_138 = arith.constant 0 : index
      %214 = vector.load %arg7[%c2_137, %213, %c0_138] : memref<3x32x128xf32, #tpu.memory_space<vmem>>, vector<1x8x128xf32>
      %215 = vector.shape_cast %214 : vector<1x8x128xf32> to vector<8x128xf32>
      %216 = vector.shape_cast %212 : vector<8x128xf32> to vector<1x8x128xf32>
      tpu.vector_store %arg7[%c2_137, %213, %c0_138], %216 {strides = array<i32>} : memref<3x32x128xf32, #tpu.memory_space<vmem>>, vector<1x8x128xf32>,
    }
    %c4_i32_126 = arith.constant 4 : i32
    return
  }
}

</mosaic_0001>

<llo_original>
// kernel: tpu_custom_call.1
$region0: #{tpu_custom_call.1}
  #allocation0 [shape = 'u32[]', space=smem, size = 0x4, offset = 0x4, fixed_abs, tag = 'smem constant byte address 0x4 - core index']
  #allocation1 [shape = 'u32[72,128]{1,0:T(1,128)}', space=vmem, size = 0x9000, scoped, tag = 'internal scratch']
  #allocation2 [shape = 'f32[3,40,128]{2,1,0:T(8,128)}', space=vmem, size = 0xf000, scoped, tag = 'scratch operand']
  #allocation3 [shape = 'f32[3,1,128]{2,1,0:T(1,128)}', space=vmem, size = 0x600, scoped, tag = 'scratch operand']
  #allocation4 [shape = 'f32[3,1,128]{2,1,0:T(1,128)}', space=vmem, size = 0x600, scoped, tag = 'scratch operand']
  %s0 = inlined_call_operand.hbm [shape: f32[3,48,128], index: 0, kind: input, shape index: {}]
  %s1 = inlined_call_operand.hbm [shape: f32[81], index: 1, kind: input, shape index: {}]
  %s2 = inlined_call_operand.vmem [shape: f32[81], index: 2, kind: input, shape index: {}]
  %s3 = inlined_call_operand.vmem [shape: f32[3], index: 3, kind: input, shape index: {}]
  %s4 = inlined_call_operand.vmem [shape: f32[3], index: 4, kind: input, shape index: {}]
  %s5 = inlined_call_operand.vmem [shape: f32[3], index: 5, kind: input, shape index: {}]
  %s6 = inlined_call_operand.vmem [shape: f32[3], index: 6, kind: input, shape index: {}]
  %s7 = inlined_call_operand.hbm [shape: f32[3,32,128], index: 7, kind: output, shape index: {}]
  %s8 = sld [smem:[#allocation0]]
  $region87: #{tpu_custom_call.1} parent=0
    _
  %s10 = ssub.s32 1, %s8
  %s11 = scalar_select 0, %s10, %s8
  $region1: #{tpu_custom_call.1} parent=0
    #allocation5 [shape = 'u8[73728]{0}', space=vmem, size = 0x12000, scoped, tag = 'input window, operand 0, single buffered']
    #allocation6 [shape = 's32[1]{0}', space=sflag, size = 0x4, scoped, tag = 'scoped memory for tpu_custom_call.1']
    #allocation7 [shape = 's32[1]{0}', space=sflag, size = 0x4, scoped, tag = 'scoped memory for tpu_custom_call.1']
    #allocation8 [shape = 's32[1]{0}', space=sflag, size = 0x4, scoped, tag = 'scoped memory for tpu_custom_call.1']
    #allocation9 [shape = 's32[1]{0}', space=sflag, size = 0x4, scoped, tag = 'scoped memory for tpu_custom_call.1']
    #allocation10 [shape = 'u8[512]{0}', space=smem, size = 0x200, scoped, tag = 'input window, operand 1, single buffered']
    #allocation11 [shape = 'u8[512]{0}', space=smem, size = 0x200, scoped, tag = 'input window, operand 2, single buffered']
    #allocation12 [shape = 'u8[512]{0}', space=smem, size = 0x200, scoped, tag = 'input window, operand 3, single buffered']
    #allocation13 [shape = 's32[1]{0}', space=sflag, size = 0x4, scoped, tag = 'scoped memory for tpu_custom_call.1']
    #allocation14 [shape = 'u8[512]{0}', space=smem, size = 0x200, scoped, tag = 'input window, operand 4, single buffered']
    #allocation15 [shape = 'u8[512]{0}', space=smem, size = 0x200, scoped, tag = 'input window, operand 5, single buffered']
    #allocation16 [shape = 's32[1]{0}', space=sflag, size = 0x4, scoped, tag = 'scoped memory for tpu_custom_call.1']
    #allocation17 [shape = 'u8[512]{0}', space=smem, size = 0x200, scoped, tag = 'input window, operand 6, single buffered']
    #allocation18 [shape = 'u8[49152]{0}', space=vmem, size = 0xc000, scoped, tag = 'output window, operand 0, single buffered']
    %12 = vsyncpa [#allocation6], 0
    %13 = vsyncpa [#allocation8], 0
    %14 = vsyncpa [#allocation9], 0
    %15 = vsyncpa [#allocation13], 0
    %16 = vsyncpa [#allocation16], 0
    %17 = vsyncpa [#allocation7], 0
    // Predicated region
    $region2: #{tpu_custom_call.1} parent=1 // pred_check
      _
    $region3: #{tpu_custom_call.1} parent=1 // pred_check_branch
      %19 = sbr.rel (0) target = $region5
    $region4: #{tpu_custom_call.1} parent=1 // pred_region
      %21 = vsyncadd [#allocation6], 0
      %s22 = sshll.u32 %s0, 4
      %s23 = int_to_ptr.hbm [resolvable:$true] %s22
      %s24 = sshll.u32 [#allocation5], 4
      %s25 = int_to_ptr.vmem [resolvable:$true] %s24
      %30 = dma.hbm_to_vmem [thread:$0]  %s23, 2304, %s25, [#allocation6], 128, 128, 8
    $region5: #{tpu_custom_call.1} parent=1 // pred_fallthru
      _
    // Predicated region
    $region6: #{tpu_custom_call.1} parent=1 // pred_check
      _
    $region7: #{tpu_custom_call.1} parent=1 // pred_check_branch
      %32 = sbr.rel (0) target = $region9
    $region8: #{tpu_custom_call.1} parent=1 // pred_region
      %34 = vsyncadd [#allocation8], 0
      %s36 = sshll.u32 %s1, 4
      %s37 = int_to_ptr.hbm [resolvable:$true] %s36
      %39 = dma.hbm_to_smem %s37, 16, [#allocation10], [#allocation8]
    $region9: #{tpu_custom_call.1} parent=1 // pred_fallthru
      _
    // Predicated region
    $region10: #{tpu_custom_call.1} parent=1 // pred_check
      _
    $region11: #{tpu_custom_call.1} parent=1 // pred_check_branch
      %41 = sbr.rel (0) target = $region13
    $region12: #{tpu_custom_call.1} parent=1 // pred_region
      %43 = vsyncadd [#allocation9], 0
      %s45 = sshll.u32 %s2, 4
      %s46 = int_to_ptr.vmem [resolvable:$true] %s45
      %48 = dma.vmem_to_smem %s46, 16, [#allocation11], [#allocation9]
    $region13: #{tpu_custom_call.1} parent=1 // pred_fallthru
      _
    // Predicated region
    $region14: #{tpu_custom_call.1} parent=1 // pred_check
      _
    $region15: #{tpu_custom_call.1} parent=1 // pred_check_branch
      %50 = sbr.rel (0) target = $region17
    $region16: #{tpu_custom_call.1} parent=1 // pred_region
      %52 = vsyncadd [#allocation13], 0
      %s54 = sshll.u32 %s3, 4
      %s55 = int_to_ptr.vmem [resolvable:$true] %s54
      %57 = dma.vmem_to_smem %s55, 16, [#allocation12], [#allocation13]
    $region17: #{tpu_custom_call.1} parent=1 // pred_fallthru
      _
    // Predicated region
    $region18: #{tpu_custom_call.1} parent=1 // pred_check
      _
    $region19: #{tpu_custom_call.1} parent=1 // pred_check_branch
      %59 = sbr.rel (0) target = $region21
    $region20: #{tpu_custom_call.1} parent=1 // pred_region
      %61 = vsyncadd [#allocation13], 0
      %s63 = sshll.u32 %s4, 4
      %s64 = int_to_ptr.vmem [resolvable:$true] %s63
      %66 = dma.vmem_to_smem %s64, 16, [#allocation14], [#allocation13]
    $region21: #{tpu_custom_call.1} parent=1 // pred_fallthru
      _
    // Predicated region
    $region22: #{tpu_custom_call.1} parent=1 // pred_check
      _
    $region23: #{tpu_custom_call.1} parent=1 // pred_check_branch
      %68 = sbr.rel (0) target = $region25
    $region24: #{tpu_custom_call.1} parent=1 // pred_region
      %70 = vsyncadd [#allocation16], 0
      %s72 = sshll.u32 %s5, 4
      %s73 = int_to_ptr.vmem [resolvable:$true] %s72
      %75 = dma.vmem_to_smem %s73, 16, [#allocation15], [#allocation16]
    $region25: #{tpu_custom_call.1} parent=1 // pred_fallthru
      _
    // Predicated region
    $region26: #{tpu_custom_call.1} parent=1 // pred_check
      _
    $region27: #{tpu_custom_call.1} parent=1 // pred_check_branch
      %77 = sbr.rel (0) target = $region29
    $region28: #{tpu_custom_call.1} parent=1 // pred_region
      %79 = vsyncadd [#allocation16], 0
      %s81 = sshll.u32 %s6, 4
      %s82 = int_to_ptr.vmem [resolvable:$true] %s81
      %84 = dma.vmem_to_smem %s82, 16, [#allocation17], [#allocation16]
    $region29: #{tpu_custom_call.1} parent=1 // pred_fallthru
      _
    // Predicated region
    $region30: #{tpu_custom_call.1} parent=1 // pred_check
      _
    $region31: #{tpu_custom_call.1} parent=1 // pred_check_branch
      %86 = sbr.rel (0) target = $region33
    $region32: #{tpu_custom_call.1} parent=1 // pred_region
      %88 = dma.done [#allocation6], 2304
    $region33: #{tpu_custom_call.1} parent=1 // pred_fallthru
      _
    // Predicated region
    $region34: #{tpu_custom_call.1} parent=1 // pred_check
      _
    $region35: #{tpu_custom_call.1} parent=1 // pred_check_branch
      %90 = sbr.rel (0) target = $region37
    $region36: #{tpu_custom_call.1} parent=1 // pred_region
      %92 = dma.done [#allocation8], 16
    $region37: #{tpu_custom_call.1} parent=1 // pred_fallthru
      _
    // Predicated region
    $region38: #{tpu_custom_call.1} parent=1 // pred_check
      _
    $region39: #{tpu_custom_call.1} parent=1 // pred_check_branch
      %94 = sbr.rel (0) target = $region41
    $region40: #{tpu_custom_call.1} parent=1 // pred_region
      %96 = dma.done [#allocation9], 16
    $region41: #{tpu_custom_call.1} parent=1 // pred_fallthru
      _
    // Predicated region
    $region42: #{tpu_custom_call.1} parent=1 // pred_check
      _
    $region43: #{tpu_custom_call.1} parent=1 // pred_check_branch
      %98 = sbr.rel (0) target = $region45
    $region44: #{tpu_custom_call.1} parent=1 // pred_region
      %100 = dma.done [#allocation13], 16
    $region45: #{tpu_custom_call.1} parent=1 // pred_fallthru
      _
    // Predicated region
    $region46: #{tpu_custom_call.1} parent=1 // pred_check
      _
    $region47: #{tpu_custom_call.1} parent=1 // pred_check_branch
      %102 = sbr.rel (0) target = $region49
    $region48: #{tpu_custom_call.1} parent=1 // pred_region
      %104 = dma.done [#allocation13], 16
    $region49: #{tpu_custom_call.1} parent=1 // pred_fallthru
      _
    // Predicated region
    $region50: #{tpu_custom_call.1} parent=1 // pred_check
      _
    $region51: #{tpu_custom_call.1} parent=1 // pred_check_branch
      %106 = sbr.rel (0) target = $region53
    $region52: #{tpu_custom_call.1} parent=1 // pred_region
      %108 = dma.done [#allocation16], 16
    $region53: #{tpu_custom_call.1} parent=1 // pred_fallthru
      _
    // Predicated region
    $region54: #{tpu_custom_call.1} parent=1 // pred_check
      _
    $region55: #{tpu_custom_call.1} parent=1 // pred_check_branch
      %110 = sbr.rel (0) target = $region57
    $region56: #{tpu_custom_call.1} parent=1 // pred_region
      %112 = dma.done [#allocation16], 16
    $region57: #{tpu_custom_call.1} parent=1 // pred_fallthru
      _
    %113 = sfence
    %v114 = vlaneseq
    %v115 = vshrl.u32 %v114, 7
    %v116 = vlaneseq
    %v117 = vand.u32 %v116, 127
    %118 = vst [vmem:[#allocation3] sm:$0x1] 0.0
    %119 = vst [vmem:[#allocation4] sm:$0x1] 0.0
    %s120 = scalar_lea.vmem [#allocation3], 1
    %121 = vst [vmem:[%s120] sm:$0x1] 0.0
    %s122 = scalar_lea.vmem [#allocation4], 1
    %123 = vst [vmem:[%s122] sm:$0x1] 0.0
    %s124 = scalar_lea.vmem [#allocation3], 2
    %125 = vst [vmem:[%s124] sm:$0x1] 0.0
    %s126 = scalar_lea.vmem [#allocation4], 2
    %127 = vst [vmem:[%s126] sm:$0x1] 0.0
    loop: start=0, step=1, limit=5
    $region58: #{tpu_custom_call.1} parent=1 // loop_pre_header
      _
    $region59: #{tpu_custom_call.1} parent=1 // loop_header
      %s129 = sphi 0, %s133
      %p130 = scmp.ge.s32.totalorder %s129, 5
    $region60: #{tpu_custom_call.1} parent=1 // loop_header_branch
      %132 = sbr.rel (%p130) target = $region64
    $region61: #{tpu_custom_call.1} parent=1 // loop_body
      %s134 = smul.u32 %s129, 8
      %s135 = scalar_lea.vmem [#allocation5], %s134
      %v136 = vld [vmem:[%s135] sm:$0xff]
      %v137 = vld [vmem:[%s135 + $0x8] sm:$0x3]
      %s138 = sld [smem:[#allocation10]]
      %v139 = vstv %s138
      %v140 = vmul.f32 %v139, %v136
      %s141 = sld [smem:[#allocation10 + $0x1b]]
      %v142 = vstv %s141
      %v143 = vmul.f32 %v142, %v136
      %s144 = sld [smem:[#allocation10 + $0x36]]
      %v145 = vstv %s144
      %v146 = vmul.f32 %v145, %v136
      %s147 = sld [smem:[#allocation10 + $0x3]]
      %v148 = vstv %s147
      %v149 = vmul.f32 %v148, %v136
      %v150 = vmul.f32 %v148, %v137
      %vm153 = vcmask 1046528
      %v154 = vrot.slane %v149, 1
      %v155 = vrot.slane %v150, 1
      %v156 = vsel %vm153, %v154, %v155
      %v158 = vadd.f32 %v140, %v156
      %s159 = sld [smem:[#allocation10 + $0x1e]]
      %v160 = vstv %s159
      %v161 = vmul.f32 %v160, %v136
      %v162 = vmul.f32 %v160, %v137
      %v165 = vrot.slane %v161, 1
      %v166 = vrot.slane %v162, 1
      %v167 = vsel %vm153, %v165, %v166
      %v169 = vadd.f32 %v143, %v167
      %s170 = sld [smem:[#allocation10 + $0x39]]
      %v171 = vstv %s170
      %v172 = vmul.f32 %v171, %v136
      %v173 = vmul.f32 %v171, %v137
      %v176 = vrot.slane %v172, 1
      %v177 = vrot.slane %v173, 1
      %v178 = vsel %vm153, %v176, %v177
      %v180 = vadd.f32 %v146, %v178
      %s181 = sld [smem:[#allocation10 + $0x6]]
      %v182 = vstv %s181
      %v183 = vmul.f32 %v182, %v136
      %v184 = vmul.f32 %v182, %v137
      %vm187 = vcmask 1045504
      %v188 = vrot.slane %v183, 2
      %v189 = vrot.slane %v184, 2
      %v190 = vsel %vm187, %v188, %v189
      %v192 = vadd.f32 %v158, %v190
      %s193 = sld [smem:[#allocation10 + $0x21]]
      %v194 = vstv %s193
      %v195 = vmul.f32 %v194, %v136
      %v196 = vmul.f32 %v194, %v137
      %v199 = vrot.slane %v195, 2
      %v200 = vrot.slane %v196, 2
      %v201 = vsel %vm187, %v199, %v200
      %v203 = vadd.f32 %v169, %v201
      %s204 = sld [smem:[#allocation10 + $0x3c]]
      %v205 = vstv %s204
      %v206 = vmul.f32 %v205, %v136
      %v207 = vmul.f32 %v205, %v137
      %v210 = vrot.slane %v206, 2
      %v211 = vrot.slane %v207, 2
      %v212 = vsel %vm187, %v210, %v211
      %v214 = vadd.f32 %v180, %v212
      %215 = vrot.lane.b32.xlu0 %v136, 127
      %v216 = vpop.permute.xlu0 %215
      %217 = vrot.lane.b32.xlu0 %v137, 127
      %v218 = vpop.permute.xlu0 %217
      %s219 = sld [smem:[#allocation10 + $0x1]]
      %v220 = vstv %s219
      %v221 = vmul.f32 %v220, %v216
      %v222 = vadd.f32 %v192, %v221
      %s223 = sld [smem:[#allocation10 + $0x1c]]
      %v224 = vstv %s223
      %v225 = vmul.f32 %v224, %v216
      %v226 = vadd.f32 %v203, %v225
      %s227 = sld [smem:[#allocation10 + $0x37]]
      %v228 = vstv %s227
      %v229 = vmul.f32 %v228, %v216
      %v230 = vadd.f32 %v214, %v229
      %s231 = sld [smem:[#allocation10 + $0x4]]
      %v232 = vstv %s231
      %v233 = vmul.f32 %v232, %v216
      %v234 = vmul.f32 %v232, %v218
      %v237 = vrot.slane %v233, 1
      %v238 = vrot.slane %v234, 1
      %v239 = vsel %vm153, %v237, %v238
      %v241 = vadd.f32 %v222, %v239
      %s242 = sld [smem:[#allocation10 + $0x1f]]
      %v243 = vstv %s242
      %v244 = vmul.f32 %v243, %v216
      %v245 = vmul.f32 %v243, %v218
      %v248 = vrot.slane %v244, 1
      %v249 = vrot.slane %v245, 1
      %v250 = vsel %vm153, %v248, %v249
      %v252 = vadd.f32 %v226, %v250
      %s253 = sld [smem:[#allocation10 + $0x3a]]
      %v254 = vstv %s253
      %v255 = vmul.f32 %v254, %v216
      %v256 = vmul.f32 %v254, %v218
      %v259 = vrot.slane %v255, 1
      %v260 = vrot.slane %v256, 1
      %v261 = vsel %vm153, %v259, %v260
      %v263 = vadd.f32 %v230, %v261
      %s264 = sld [smem:[#allocation10 + $0x7]]
      %v265 = vstv %s264
      %v266 = vmul.f32 %v265, %v216
      %v267 = vmul.f32 %v265, %v218
      %v270 = vrot.slane %v266, 2
      %v271 = vrot.slane %v267, 2
      %v272 = vsel %vm187, %v270, %v271
      %v274 = vadd.f32 %v241, %v272
      %s275 = sld [smem:[#allocation10 + $0x22]]
      %v276 = vstv %s275
      %v277 = vmul.f32 %v276, %v216
      %v278 = vmul.f32 %v276, %v218
      %v281 = vrot.slane %v277, 2
      %v282 = vrot.slane %v278, 2
      %v283 = vsel %vm187, %v281, %v282
      %v285 = vadd.f32 %v252, %v283
      %s286 = sld [smem:[#allocation10 + $0x3d]]
      %v287 = vstv %s286
      %v288 = vmul.f32 %v287, %v216
      %v289 = vmul.f32 %v287, %v218
      %v292 = vrot.slane %v288, 2
      %v293 = vrot.slane %v289, 2
      %v294 = vsel %vm187, %v292, %v293
      %v296 = vadd.f32 %v263, %v294
      %297 = vrot.lane.b32.xlu0 %v136, 126
      %v298 = vpop.permute.xlu0 %297
      %299 = vrot.lane.b32.xlu0 %v137, 126
      %v300 = vpop.permute.xlu0 %299
      %s301 = sld [smem:[#allocation10 + $0x2]]
      %v302 = vstv %s301
      %v303 = vmul.f32 %v302, %v298
      %v304 = vadd.f32 %v274, %v303
      %s305 = sld [smem:[#allocation10 + $0x1d]]
      %v306 = vstv %s305
      %v307 = vmul.f32 %v306, %v298
      %v308 = vadd.f32 %v285, %v307
      %s309 = sld [smem:[#allocation10 + $0x38]]
      %v310 = vstv %s309
      %v311 = vmul.f32 %v310, %v298
      %v312 = vadd.f32 %v296, %v311
      %s313 = sld [smem:[#allocation10 + $0x5]]
      %v314 = vstv %s313
      %v315 = vmul.f32 %v314, %v298
      %v316 = vmul.f32 %v314, %v300
      %v319 = vrot.slane %v315, 1
      %v320 = vrot.slane %v316, 1
      %v321 = vsel %vm153, %v319, %v320
      %v323 = vadd.f32 %v304, %v321
      %s324 = sld [smem:[#allocation10 + $0x20]]
      %v325 = vstv %s324
      %v326 = vmul.f32 %v325, %v298
      %v327 = vmul.f32 %v325, %v300
      %v330 = vrot.slane %v326, 1
      %v331 = vrot.slane %v327, 1
      %v332 = vsel %vm153, %v330, %v331
      %v334 = vadd.f32 %v308, %v332
      %s335 = sld [smem:[#allocation10 + $0x3b]]
      %v336 = vstv %s335
      %v337 = vmul.f32 %v336, %v298
      %v338 = vmul.f32 %v336, %v300
      %v341 = vrot.slane %v337, 1
      %v342 = vrot.slane %v338, 1
      %v343 = vsel %vm153, %v341, %v342
      %v345 = vadd.f32 %v312, %v343
      %s346 = sld [smem:[#allocation10 + $0x8]]
      %v347 = vstv %s346
      %v348 = vmul.f32 %v347, %v298
      %v349 = vmul.f32 %v347, %v300
      %v352 = vrot.slane %v348, 2
      %v353 = vrot.slane %v349, 2
      %v354 = vsel %vm187, %v352, %v353
      %v356 = vadd.f32 %v323, %v354
      %s357 = sld [smem:[#allocation10 + $0x23]]
      %v358 = vstv %s357
      %v359 = vmul.f32 %v358, %v298
      %v360 = vmul.f32 %v358, %v300
      %v363 = vrot.slane %v359, 2
      %v364 = vrot.slane %v360, 2
      %v365 = vsel %vm187, %v363, %v364
      %v367 = vadd.f32 %v334, %v365
      %s368 = sld [smem:[#allocation10 + $0x3e]]
      %v369 = vstv %s368
      %v370 = vmul.f32 %v369, %v298
      %v371 = vmul.f32 %v369, %v300
      %v374 = vrot.slane %v370, 2
      %v375 = vrot.slane %v371, 2
      %v376 = vsel %vm187, %v374, %v375
      %v378 = vadd.f32 %v345, %v376
      %s379 = sadd.s32 %s134, 48
      %s380 = scalar_lea.vmem [#allocation5], %s379
      %v381 = vld [vmem:[%s380] sm:$0xff]
      %v382 = vld [vmem:[%s380 + $0x8] sm:$0x3]
      %s383 = sld [smem:[#allocation10 + $0x9]]
      %v384 = vstv %s383
      %v385 = vmul.f32 %v384, %v381
      %v386 = vadd.f32 %v356, %v385
      %s387 = sld [smem:[#allocation10 + $0x24]]
      %v388 = vstv %s387
      %v389 = vmul.f32 %v388, %v381
      %v390 = vadd.f32 %v367, %v389
      %s391 = sld [smem:[#allocation10 + $0x3f]]
      %v392 = vstv %s391
      %v393 = vmul.f32 %v392, %v381
      %v394 = vadd.f32 %v378, %v393
      %s395 = sld [smem:[#allocation10 + $0xc]]
      %v396 = vstv %s395
      %v397 = vmul.f32 %v396, %v381
      %v398 = vmul.f32 %v396, %v382
      %v401 = vrot.slane %v397, 1
      %v402 = vrot.slane %v398, 1
      %v403 = vsel %vm153, %v401, %v402
      %v405 = vadd.f32 %v386, %v403
      %s406 = sld [smem:[#allocation10 + $0x27]]
      %v407 = vstv %s406
      %v408 = vmul.f32 %v407, %v381
      %v409 = vmul.f32 %v407, %v382
      %v412 = vrot.slane %v408, 1
      %v413 = vrot.slane %v409, 1
      %v414 = vsel %vm153, %v412, %v413
      %v416 = vadd.f32 %v390, %v414
      %s417 = sld [smem:[#allocation10 + $0x42]]
      %v418 = vstv %s417
      %v419 = vmul.f32 %v418, %v381
      %v420 = vmul.f32 %v418, %v382
      %v423 = vrot.slane %v419, 1
      %v424 = vrot.slane %v420, 1
      %v425 = vsel %vm153, %v423, %v424
      %v427 = vadd.f32 %v394, %v425
      %s428 = sld [smem:[#allocation10 + $0xf]]
      %v429 = vstv %s428
      %v430 = vmul.f32 %v429, %v381
      %v431 = vmul.f32 %v429, %v382
      %v434 = vrot.slane %v430, 2
      %v435 = vrot.slane %v431, 2
      %v436 = vsel %vm187, %v434, %v435
      %v438 = vadd.f32 %v405, %v436
      %s439 = sld [smem:[#allocation10 + $0x2a]]
      %v440 = vstv %s439
      %v441 = vmul.f32 %v440, %v381
      %v442 = vmul.f32 %v440, %v382
      %v445 = vrot.slane %v441, 2
      %v446 = vrot.slane %v442, 2
      %v447 = vsel %vm187, %v445, %v446
      %v449 = vadd.f32 %v416, %v447
      %s450 = sld [smem:[#allocation10 + $0x45]]
      %v451 = vstv %s450
      %v452 = vmul.f32 %v451, %v381
      %v453 = vmul.f32 %v451, %v382
      %v456 = vrot.slane %v452, 2
      %v457 = vrot.slane %v453, 2
      %v458 = vsel %vm187, %v456, %v457
      %v460 = vadd.f32 %v427, %v458
      %461 = vrot.lane.b32.xlu0 %v381, 127
      %v462 = vpop.permute.xlu0 %461
      %463 = vrot.lane.b32.xlu0 %v382, 127
      %v464 = vpop.permute.xlu0 %463
      %s465 = sld [smem:[#allocation10 + $0xa]]
      %v466 = vstv %s465
      %v467 = vmul.f32 %v466, %v462
      %v468 = vadd.f32 %v438, %v467
      %s469 = sld [smem:[#allocation10 + $0x25]]
      %v470 = vstv %s469
      %v471 = vmul.f32 %v470, %v462
      %v472 = vadd.f32 %v449, %v471
      %s473 = sld [smem:[#allocation10 + $0x40]]
      %v474 = vstv %s473
      %v475 = vmul.f32 %v474, %v462
      %v476 = vadd.f32 %v460, %v475
      %s477 = sld [smem:[#allocation10 + $0xd]]
      %v478 = vstv %s477
      %v479 = vmul.f32 %v478, %v462
      %v480 = vmul.f32 %v478, %v464
      %v483 = vrot.slane %v479, 1
      %v484 = vrot.slane %v480, 1
      %v485 = vsel %vm153, %v483, %v484
      %v487 = vadd.f32 %v468, %v485
      %s488 = sld [smem:[#allocation10 + $0x28]]
      %v489 = vstv %s488
      %v490 = vmul.f32 %v489, %v462
      %v491 = vmul.f32 %v489, %v464
      %v494 = vrot.slane %v490, 1
      %v495 = vrot.slane %v491, 1
      %v496 = vsel %vm153, %v494, %v495
      %v498 = vadd.f32 %v472, %v496
      %s499 = sld [smem:[#allocation10 + $0x43]]
      %v500 = vstv %s499
      %v501 = vmul.f32 %v500, %v462
      %v502 = vmul.f32 %v500, %v464
      %v505 = vrot.slane %v501, 1
      %v506 = vrot.slane %v502, 1
      %v507 = vsel %vm153, %v505, %v506
      %v509 = vadd.f32 %v476, %v507
      %s510 = sld [smem:[#allocation10 + $0x10]]
      %v511 = vstv %s510
      %v512 = vmul.f32 %v511, %v462
      %v513 = vmul.f32 %v511, %v464
      %v516 = vrot.slane %v512, 2
      %v517 = vrot.slane %v513, 2
      %v518 = vsel %vm187, %v516, %v517
      %v520 = vadd.f32 %v487, %v518
      %s521 = sld [smem:[#allocation10 + $0x2b]]
      %v522 = vstv %s521
      %v523 = vmul.f32 %v522, %v462
      %v524 = vmul.f32 %v522, %v464
      %v527 = vrot.slane %v523, 2
      %v528 = vrot.slane %v524, 2
      %v529 = vsel %vm187, %v527, %v528
      %v531 = vadd.f32 %v498, %v529
      %s532 = sld [smem:[#allocation10 + $0x46]]
      %v533 = vstv %s532
      %v534 = vmul.f32 %v533, %v462
      %v535 = vmul.f32 %v533, %v464
      %v538 = vrot.slane %v534, 2
      %v539 = vrot.slane %v535, 2
      %v540 = vsel %vm187, %v538, %v539
      %v542 = vadd.f32 %v509, %v540
      %543 = vrot.lane.b32.xlu0 %v381, 126
      %v544 = vpop.permute.xlu0 %543
      %545 = vrot.lane.b32.xlu0 %v382, 126
      %v546 = vpop.permute.xlu0 %545
      %s547 = sld [smem:[#allocation10 + $0xb]]
      %v548 = vstv %s547
      %v549 = vmul.f32 %v548, %v544
      %v550 = vadd.f32 %v520, %v549
      %s551 = sld [smem:[#allocation10 + $0x26]]
      %v552 = vstv %s551
      %v553 = vmul.f32 %v552, %v544
      %v554 = vadd.f32 %v531, %v553
      %s555 = sld [smem:[#allocation10 + $0x41]]
      %v556 = vstv %s555
      %v557 = vmul.f32 %v556, %v544
      %v558 = vadd.f32 %v542, %v557
      %s559 = sld [smem:[#allocation10 + $0xe]]
      %v560 = vstv %s559
      %v561 = vmul.f32 %v560, %v544
      %v562 = vmul.f32 %v560, %v546
      %v565 = vrot.slane %v561, 1
      %v566 = vrot.slane %v562, 1
      %v567 = vsel %vm153, %v565, %v566
      %v569 = vadd.f32 %v550, %v567
      %s570 = sld [smem:[#allocation10 + $0x29]]
      %v571 = vstv %s570
      %v572 = vmul.f32 %v571, %v544
      %v573 = vmul.f32 %v571, %v546
      %v576 = vrot.slane %v572, 1
      %v577 = vrot.slane %v573, 1
      %v578 = vsel %vm153, %v576, %v577
      %v580 = vadd.f32 %v554, %v578
      %s581 = sld [smem:[#allocation10 + $0x44]]
      %v582 = vstv %s581
      %v583 = vmul.f32 %v582, %v544
      %v584 = vmul.f32 %v582, %v546
      %v587 = vrot.slane %v583, 1
      %v588 = vrot.slane %v584, 1
      %v589 = vsel %vm153, %v587, %v588
      %v591 = vadd.f32 %v558, %v589
      %s592 = sld [smem:[#allocation10 + $0x11]]
      %v593 = vstv %s592
      %v594 = vmul.f32 %v593, %v544
      %v595 = vmul.f32 %v593, %v546
      %v598 = vrot.slane %v594, 2
      %v599 = vrot.slane %v595, 2
      %v600 = vsel %vm187, %v598, %v599
      %v602 = vadd.f32 %v569, %v600
      %s603 = sld [smem:[#allocation10 + $0x2c]]
      %v604 = vstv %s603
      %v605 = vmul.f32 %v604, %v544
      %v606 = vmul.f32 %v604, %v546
      %v609 = vrot.slane %v605, 2
      %v610 = vrot.slane %v606, 2
      %v611 = vsel %vm187, %v609, %v610
      %v613 = vadd.f32 %v580, %v611
      %s614 = sld [smem:[#allocation10 + $0x47]]
      %v615 = vstv %s614
      %v616 = vmul.f32 %v615, %v544
      %v617 = vmul.f32 %v615, %v546
      %v620 = vrot.slane %v616, 2
      %v621 = vrot.slane %v617, 2
      %v622 = vsel %vm187, %v620, %v621
      %v624 = vadd.f32 %v591, %v622
      %s625 = sadd.s32 %s134, 96
      %s626 = scalar_lea.vmem [#allocation5], %s625
      %v627 = vld [vmem:[%s626] sm:$0xff]
      %v628 = vld [vmem:[%s626 + $0x8] sm:$0x3]
      %s629 = sld [smem:[#allocation10 + $0x12]]
      %v630 = vstv %s629
      %v631 = vmul.f32 %v630, %v627
      %v632 = vadd.f32 %v602, %v631
      %s633 = sld [smem:[#allocation10 + $0x2d]]
      %v634 = vstv %s633
      %v635 = vmul.f32 %v634, %v627
      %v636 = vadd.f32 %v613, %v635
      %s637 = sld [smem:[#allocation10 + $0x48]]
      %v638 = vstv %s637
      %v639 = vmul.f32 %v638, %v627
      %v640 = vadd.f32 %v624, %v639
      %s641 = sld [smem:[#allocation10 + $0x15]]
      %v642 = vstv %s641
      %v643 = vmul.f32 %v642, %v627
      %v644 = vmul.f32 %v642, %v628
      %v647 = vrot.slane %v643, 1
      %v648 = vrot.slane %v644, 1
      %v649 = vsel %vm153, %v647, %v648
      %v651 = vadd.f32 %v632, %v649
      %s652 = sld [smem:[#allocation10 + $0x30]]
      %v653 = vstv %s652
      %v654 = vmul.f32 %v653, %v627
      %v655 = vmul.f32 %v653, %v628
      %v658 = vrot.slane %v654, 1
      %v659 = vrot.slane %v655, 1
      %v660 = vsel %vm153, %v658, %v659
      %v662 = vadd.f32 %v636, %v660
      %s663 = sld [smem:[#allocation10 + $0x4b]]
      %v664 = vstv %s663
      %v665 = vmul.f32 %v664, %v627
      %v666 = vmul.f32 %v664, %v628
      %v669 = vrot.slane %v665, 1
      %v670 = vrot.slane %v666, 1
      %v671 = vsel %vm153, %v669, %v670
      %v673 = vadd.f32 %v640, %v671
      %s674 = sld [smem:[#allocation10 + $0x18]]
      %v675 = vstv %s674
      %v676 = vmul.f32 %v675, %v627
      %v677 = vmul.f32 %v675, %v628
      %v680 = vrot.slane %v676, 2
      %v681 = vrot.slane %v677, 2
      %v682 = vsel %vm187, %v680, %v681
      %v684 = vadd.f32 %v651, %v682
      %s685 = sld [smem:[#allocation10 + $0x33]]
      %v686 = vstv %s685
      %v687 = vmul.f32 %v686, %v627
      %v688 = vmul.f32 %v686, %v628
      %v691 = vrot.slane %v687, 2
      %v692 = vrot.slane %v688, 2
      %v693 = vsel %vm187, %v691, %v692
      %v695 = vadd.f32 %v662, %v693
      %s696 = sld [smem:[#allocation10 + $0x4e]]
      %v697 = vstv %s696
      %v698 = vmul.f32 %v697, %v627
      %v699 = vmul.f32 %v697, %v628
      %v702 = vrot.slane %v698, 2
      %v703 = vrot.slane %v699, 2
      %v704 = vsel %vm187, %v702, %v703
      %v706 = vadd.f32 %v673, %v704
      %707 = vrot.lane.b32.xlu0 %v627, 127
      %v708 = vpop.permute.xlu0 %707
      %709 = vrot.lane.b32.xlu0 %v628, 127
      %v710 = vpop.permute.xlu0 %709
      %s711 = sld [smem:[#allocation10 + $0x13]]
      %v712 = vstv %s711
      %v713 = vmul.f32 %v712, %v708
      %v714 = vadd.f32 %v684, %v713
      %s715 = sld [smem:[#allocation10 + $0x2e]]
      %v716 = vstv %s715
      %v717 = vmul.f32 %v716, %v708
      %v718 = vadd.f32 %v695, %v717
      %s719 = sld [smem:[#allocation10 + $0x49]]
      %v720 = vstv %s719
      %v721 = vmul.f32 %v720, %v708
      %v722 = vadd.f32 %v706, %v721
      %s723 = sld [smem:[#allocation10 + $0x16]]
      %v724 = vstv %s723
      %v725 = vmul.f32 %v724, %v708
      %v726 = vmul.f32 %v724, %v710
      %v729 = vrot.slane %v725, 1
      %v730 = vrot.slane %v726, 1
      %v731 = vsel %vm153, %v729, %v730
      %v733 = vadd.f32 %v714, %v731
      %s734 = sld [smem:[#allocation10 + $0x31]]
      %v735 = vstv %s734
      %v736 = vmul.f32 %v735, %v708
      %v737 = vmul.f32 %v735, %v710
      %v740 = vrot.slane %v736, 1
      %v741 = vrot.slane %v737, 1
      %v742 = vsel %vm153, %v740, %v741
      %v744 = vadd.f32 %v718, %v742
      %s745 = sld [smem:[#allocation10 + $0x4c]]
      %v746 = vstv %s745
      %v747 = vmul.f32 %v746, %v708
      %v748 = vmul.f32 %v746, %v710
      %v751 = vrot.slane %v747, 1
      %v752 = vrot.slane %v748, 1
      %v753 = vsel %vm153, %v751, %v752
      %v755 = vadd.f32 %v722, %v753
      %s756 = sld [smem:[#allocation10 + $0x19]]
      %v757 = vstv %s756
      %v758 = vmul.f32 %v757, %v708
      %v759 = vmul.f32 %v757, %v710
      %v762 = vrot.slane %v758, 2
      %v763 = vrot.slane %v759, 2
      %v764 = vsel %vm187, %v762, %v763
      %v766 = vadd.f32 %v733, %v764
      %s767 = sld [smem:[#allocation10 + $0x34]]
      %v768 = vstv %s767
      %v769 = vmul.f32 %v768, %v708
      %v770 = vmul.f32 %v768, %v710
      %v773 = vrot.slane %v769, 2
      %v774 = vrot.slane %v770, 2
      %v775 = vsel %vm187, %v773, %v774
      %v777 = vadd.f32 %v744, %v775
      %s778 = sld [smem:[#allocation10 + $0x4f]]
      %v779 = vstv %s778
      %v780 = vmul.f32 %v779, %v708
      %v781 = vmul.f32 %v779, %v710
      %v784 = vrot.slane %v780, 2
      %v785 = vrot.slane %v781, 2
      %v786 = vsel %vm187, %v784, %v785
      %v788 = vadd.f32 %v755, %v786
      %789 = vrot.lane.b32.xlu0 %v627, 126
      %v790 = vpop.permute.xlu0 %789
      %791 = vrot.lane.b32.xlu0 %v628, 126
      %v792 = vpop.permute.xlu0 %791
      %s793 = sld [smem:[#allocation10 + $0x14]]
      %v794 = vstv %s793
      %v795 = vmul.f32 %v794, %v790
      %v796 = vadd.f32 %v766, %v795
      %s797 = sld [smem:[#allocation10 + $0x2f]]
      %v798 = vstv %s797
      %v799 = vmul.f32 %v798, %v790
      %v800 = vadd.f32 %v777, %v799
      %s801 = sld [smem:[#allocation10 + $0x4a]]
      %v802 = vstv %s801
      %v803 = vmul.f32 %v802, %v790
      %v804 = vadd.f32 %v788, %v803
      %s805 = sld [smem:[#allocation10 + $0x17]]
      %v806 = vstv %s805
      %v807 = vmul.f32 %v806, %v790
      %v808 = vmul.f32 %v806, %v792
      %v811 = vrot.slane %v807, 1
      %v812 = vrot.slane %v808, 1
      %v813 = vsel %vm153, %v811, %v812
      %v815 = vadd.f32 %v796, %v813
      %s816 = sld [smem:[#allocation10 + $0x32]]
      %v817 = vstv %s816
      %v818 = vmul.f32 %v817, %v790
      %v819 = vmul.f32 %v817, %v792
      %v822 = vrot.slane %v818, 1
      %v823 = vrot.slane %v819, 1
      %v824 = vsel %vm153, %v822, %v823
      %v826 = vadd.f32 %v800, %v824
      %s827 = sld [smem:[#allocation10 + $0x4d]]
      %v828 = vstv %s827
      %v829 = vmul.f32 %v828, %v790
      %v830 = vmul.f32 %v828, %v792
      %v833 = vrot.slane %v829, 1
      %v834 = vrot.slane %v830, 1
      %v835 = vsel %vm153, %v833, %v834
      %v837 = vadd.f32 %v804, %v835
      %s838 = sld [smem:[#allocation10 + $0x1a]]
      %v839 = vstv %s838
      %v840 = vmul.f32 %v839, %v790
      %v841 = vmul.f32 %v839, %v792
      %v844 = vrot.slane %v840, 2
      %v845 = vrot.slane %v841, 2
      %v846 = vsel %vm187, %v844, %v845
      %v848 = vadd.f32 %v815, %v846
      %s849 = sld [smem:[#allocation10 + $0x35]]
      %v850 = vstv %s849
      %v851 = vmul.f32 %v850, %v790
      %v852 = vmul.f32 %v850, %v792
      %v855 = vrot.slane %v851, 2
      %v856 = vrot.slane %v852, 2
      %v857 = vsel %vm187, %v855, %v856
      %v859 = vadd.f32 %v826, %v857
      %s860 = sld [smem:[#allocation10 + $0x50]]
      %v861 = vstv %s860
      %v862 = vmul.f32 %v861, %v790
      %v863 = vmul.f32 %v861, %v792
      %v866 = vrot.slane %v862, 2
      %v867 = vrot.slane %v863, 2
      %v868 = vsel %vm187, %v866, %v867
      %v870 = vadd.f32 %v837, %v868
      %s871 = ssub.s32 30, %s134
      %v872 = vstv %s871
      %vm873 = vcmp.lt.s32.totalorder %v115, %v872
      %vm874 = vcmp.lt.s32.totalorder %v117, 30
      %vm875 = vmand %vm873, %vm874
      %v876 = vsel %vm875, %v848, 0.0
      %v877 = vld [vmem:[#allocation3] sm:$0x1]
      %v878 = vrot.slane %v876, 4
      %v879 = vadd.f32 %v876, %v878
      %v880 = vrot.slane %v879, 2
      %v881 = vadd.f32 %v879, %v880
      %v882 = vrot.slane %v881, 1
      %v883 = vadd.f32 %v881, %v882
      %v884 = vadd.f32 %v877, %v883
      %885 = vst [vmem:[#allocation3] sm:$0x1] %v884
      %v886 = vld [vmem:[#allocation4] sm:$0x1]
      %v887 = vmul.f32 %v876, %v876
      %v888 = vrot.slane %v887, 4
      %v889 = vadd.f32 %v887, %v888
      %v890 = vrot.slane %v889, 2
      %v891 = vadd.f32 %v889, %v890
      %v892 = vrot.slane %v891, 1
      %v893 = vadd.f32 %v891, %v892
      %v894 = vadd.f32 %v886, %v893
      %895 = vst [vmem:[#allocation4] sm:$0x1] %v894
      %v896 = vsel %vm875, %v859, 0.0
      %v897 = vld [vmem:[%s120] sm:$0x1]
      %v898 = vrot.slane %v896, 4
      %v899 = vadd.f32 %v896, %v898
      %v900 = vrot.slane %v899, 2
      %v901 = vadd.f32 %v899, %v900
      %v902 = vrot.slane %v901, 1
      %v903 = vadd.f32 %v901, %v902
      %v904 = vadd.f32 %v897, %v903
      %905 = vst [vmem:[%s120] sm:$0x1] %v904
      %v906 = vld [vmem:[%s122] sm:$0x1]
      %v907 = vmul.f32 %v896, %v896
      %v908 = vrot.slane %v907, 4
      %v909 = vadd.f32 %v907, %v908
      %v910 = vrot.slane %v909, 2
      %v911 = vadd.f32 %v909, %v910
      %v912 = vrot.slane %v911, 1
      %v913 = vadd.f32 %v911, %v912
      %v914 = vadd.f32 %v906, %v913
      %915 = vst [vmem:[%s122] sm:$0x1] %v914
      %v916 = vsel %vm875, %v870, 0.0
      %v917 = vld [vmem:[%s124] sm:$0x1]
      %v918 = vrot.slane %v916, 4
      %v919 = vadd.f32 %v916, %v918
      %v920 = vrot.slane %v919, 2
      %v921 = vadd.f32 %v919, %v920
      %v922 = vrot.slane %v921, 1
      %v923 = vadd.f32 %v921, %v922
      %v924 = vadd.f32 %v917, %v923
      %925 = vst [vmem:[%s124] sm:$0x1] %v924
      %v926 = vld [vmem:[%s126] sm:$0x1]
      %v927 = vmul.f32 %v916, %v916
      %v928 = vrot.slane %v927, 4
      %v929 = vadd.f32 %v927, %v928
      %v930 = vrot.slane %v929, 2
      %v931 = vadd.f32 %v929, %v930
      %v932 = vrot.slane %v931, 1
      %v933 = vadd.f32 %v931, %v932
      %v934 = vadd.f32 %v926, %v933
      %935 = vst [vmem:[%s126] sm:$0x1] %v934
      %s936 = scalar_lea.vmem [#allocation2], %s134
      %937 = vst [vmem:[%s936] sm:$0xff] %v848
      %s938 = sadd.s32 %s134, 40
      %s939 = scalar_lea.vmem [#allocation2], %s938
      %940 = vst [vmem:[%s939] sm:$0xff] %v859
      %s941 = sadd.s32 %s134, 80
      %s942 = scalar_lea.vmem [#allocation2], %s941
      %943 = vst [vmem:[%s942] sm:$0xff] %v870
    $region62: #{tpu_custom_call.1} parent=1 // loop_footer
      %s133 = sadd.s32 1, %s129
    $region63: #{tpu_custom_call.1} parent=1 // loop_footer_branch
      %128 = sbr.rel target = $region59
    $region64: #{tpu_custom_call.1} parent=1 // loop_exit
      _
    %v944 = vld [vmem:[#allocation3] sm:$0x1]
    %vm945 = vcmask 1040384
    %v946 = vsel %vm945, %v944, 0.0
    %947 = vadd.xlane.f32.xlu0 %v946
    %v948 = vpop.xlane.xlu0 %947
    %v949 = vrot.slane %v948, 4
    %v950 = vadd.f32 %v948, %v949
    %v951 = vrot.slane %v950, 2
    %v952 = vadd.f32 %v950, %v951
    %v953 = vrot.slane %v952, 1
    %v954 = vadd.f32 %v952, %v953
    %s955 = vtos %v954
    %v956 = vrcp.pop 900.0
    %v957 = vmul.f32 900.0, %v956
    %v958 = vsub.f32 1.0, %v957
    %v959 = vmul.f32 %v956, %v958
    %v960 = vadd.f32 %v956, %v959
    %vm961 = vweird.f32 %v956
    %v962 = vsel %vm961, %v956, %v960
    %s963 = vtos %v962
    %s964 = smul.f32 %s955, %s963
    %v965 = vld [vmem:[#allocation4] sm:$0x1]
    %v966 = vsel %vm945, %v965, 0.0
    %967 = vadd.xlane.f32.xlu0 %v966
    %v968 = vpop.xlane.xlu0 %967
    %v969 = vrot.slane %v968, 4
    %v970 = vadd.f32 %v968, %v969
    %v971 = vrot.slane %v970, 2
    %v972 = vadd.f32 %v970, %v971
    %v973 = vrot.slane %v972, 1
    %v974 = vadd.f32 %v972, %v973
    %s975 = vtos %v974
    %v976 = vrcp.pop 900.0
    %v977 = vmul.f32 900.0, %v976
    %v978 = vsub.f32 1.0, %v977
    %v979 = vmul.f32 %v976, %v978
    %v980 = vadd.f32 %v976, %v979
    %vm981 = vweird.f32 %v976
    %v982 = vsel %vm981, %v976, %v980
    %s983 = vtos %v982
    %s984 = smul.f32 %s975, %s983
    %s985 = smul.f32 %s964, %s964
    %s986 = ssub.f32 %s984, %s985
    %s987 = sadd.f32 %s986, 1e-05
    %v988 = vstv %s987
    %v989 = vrsqrt.pop %v988
    %v990 = vmul.f32 %v989, %v988
    %v991 = vmul.f32 %v990, %v989
    %v992 = vmul.f32 0.5, %v991
    %v993 = vsub.f32 1.5, %v992
    %v994 = vmul.f32 %v989, %v993
    %vm995 = vweird.f32 %v988
    %vm996 = vweird.f32 %v989
    %vm997 = vmor %vm995, %vm996
    %v998 = vsel %vm997, %v989, %v994
    %s999 = vtos %v998
    %v1000 = vld [vmem:[%s120] sm:$0x1]
    %v1001 = vsel %vm945, %v1000, 0.0
    %1002 = vadd.xlane.f32.xlu0 %v1001
    %v1003 = vpop.xlane.xlu0 %1002
    %v1004 = vrot.slane %v1003, 4
    %v1005 = vadd.f32 %v1003, %v1004
    %v1006 = vrot.slane %v1005, 2
    %v1007 = vadd.f32 %v1005, %v1006
    %v1008 = vrot.slane %v1007, 1
    %v1009 = vadd.f32 %v1007, %v1008
    %s1010 = vtos %v1009
    %v1011 = vrcp.pop 900.0
    %v1012 = vmul.f32 900.0, %v1011
    %v1013 = vsub.f32 1.0, %v1012
    %v1014 = vmul.f32 %v1011, %v1013
    %v1015 = vadd.f32 %v1011, %v1014
    %vm1016 = vweird.f32 %v1011
    %v1017 = vsel %vm1016, %v1011, %v1015
    %s1018 = vtos %v1017
    %s1019 = smul.f32 %s1010, %s1018
    %v1020 = vld [vmem:[%s122] sm:$0x1]
    %v1021 = vsel %vm945, %v1020, 0.0
    %1022 = vadd.xlane.f32.xlu0 %v1021
    %v1023 = vpop.xlane.xlu0 %1022
    %v1024 = vrot.slane %v1023, 4
    %v1025 = vadd.f32 %v1023, %v1024
    %v1026 = vrot.slane %v1025, 2
    %v1027 = vadd.f32 %v1025, %v1026
    %v1028 = vrot.slane %v1027, 1
    %v1029 = vadd.f32 %v1027, %v1028
    %s1030 = vtos %v1029
    %v1031 = vrcp.pop 900.0
    %v1032 = vmul.f32 900.0, %v1031
    %v1033 = vsub.f32 1.0, %v1032
    %v1034 = vmul.f32 %v1031, %v1033
    %v1035 = vadd.f32 %v1031, %v1034
    %vm1036 = vweird.f32 %v1031
    %v1037 = vsel %vm1036, %v1031, %v1035
    %s1038 = vtos %v1037
    %s1039 = smul.f32 %s1030, %s1038
    %s1040 = smul.f32 %s1019, %s1019
    %s1041 = ssub.f32 %s1039, %s1040
    %s1042 = sadd.f32 %s1041, 1e-05
    %v1043 = vstv %s1042
    %v1044 = vrsqrt.pop %v1043
    %v1045 = vmul.f32 %v1044, %v1043
    %v1046 = vmul.f32 %v1045, %v1044
    %v1047 = vmul.f32 0.5, %v1046
    %v1048 = vsub.f32 1.5, %v1047
    %v1049 = vmul.f32 %v1044, %v1048
    %vm1050 = vweird.f32 %v1043
    %vm1051 = vweird.f32 %v1044
    %vm1052 = vmor %vm1050, %vm1051
    %v1053 = vsel %vm1052, %v1044, %v1049
    %s1054 = vtos %v1053
    %v1055 = vld [vmem:[%s124] sm:$0x1]
    %v1056 = vsel %vm945, %v1055, 0.0
    %1057 = vadd.xlane.f32.xlu0 %v1056
    %v1058 = vpop.xlane.xlu0 %1057
    %v1059 = vrot.slane %v1058, 4
    %v1060 = vadd.f32 %v1058, %v1059
    %v1061 = vrot.slane %v1060, 2
    %v1062 = vadd.f32 %v1060, %v1061
    %v1063 = vrot.slane %v1062, 1
    %v1064 = vadd.f32 %v1062, %v1063
    %s1065 = vtos %v1064
    %v1066 = vrcp.pop 900.0
    %v1067 = vmul.f32 900.0, %v1066
    %v1068 = vsub.f32 1.0, %v1067
    %v1069 = vmul.f32 %v1066, %v1068
    %v1070 = vadd.f32 %v1066, %v1069
    %vm1071 = vweird.f32 %v1066
    %v1072 = vsel %vm1071, %v1066, %v1070
    %s1073 = vtos %v1072
    %s1074 = smul.f32 %s1065, %s1073
    %v1075 = vld [vmem:[%s126] sm:$0x1]
    %v1076 = vsel %vm945, %v1075, 0.0
    %1077 = vadd.xlane.f32.xlu0 %v1076
    %v1078 = vpop.xlane.xlu0 %1077
    %v1079 = vrot.slane %v1078, 4
    %v1080 = vadd.f32 %v1078, %v1079
    %v1081 = vrot.slane %v1080, 2
    %v1082 = vadd.f32 %v1080, %v1081
    %v1083 = vrot.slane %v1082, 1
    %v1084 = vadd.f32 %v1082, %v1083
    %s1085 = vtos %v1084
    %v1086 = vrcp.pop 900.0
    %v1087 = vmul.f32 900.0, %v1086
    %v1088 = vsub.f32 1.0, %v1087
    %v1089 = vmul.f32 %v1086, %v1088
    %v1090 = vadd.f32 %v1086, %v1089
    %vm1091 = vweird.f32 %v1086
    %v1092 = vsel %vm1091, %v1086, %v1090
    %s1093 = vtos %v1092
    %s1094 = smul.f32 %s1085, %s1093
    %s1095 = smul.f32 %s1074, %s1074
    %s1096 = ssub.f32 %s1094, %s1095
    %s1097 = sadd.f32 %s1096, 1e-05
    %v1098 = vstv %s1097
    %v1099 = vrsqrt.pop %v1098
    %v1100 = vmul.f32 %v1099, %v1098
    %v1101 = vmul.f32 %v1100, %v1099
    %v1102 = vmul.f32 0.5, %v1101
    %v1103 = vsub.f32 1.5, %v1102
    %v1104 = vmul.f32 %v1099, %v1103
    %vm1105 = vweird.f32 %v1098
    %vm1106 = vweird.f32 %v1099
    %vm1107 = vmor %vm1105, %vm1106
    %v1108 = vsel %vm1107, %v1099, %v1104
    %s1109 = vtos %v1108
    %s1110 = sld [smem:[#allocation12]]
    %s1111 = smul.f32 %s1110, %s999
    %s1112 = sld [smem:[#allocation12 + $0x1]]
    %s1113 = smul.f32 %s1112, %s1054
    %s1114 = sld [smem:[#allocation12 + $0x2]]
    %s1115 = smul.f32 %s1114, %s1109
    %1116 = vst [vmem:[#allocation3] sm:$0x1] 0.0
    %1117 = vst [vmem:[#allocation4] sm:$0x1] 0.0
    %1118 = vst [vmem:[%s120] sm:$0x1] 0.0
    %1119 = vst [vmem:[%s122] sm:$0x1] 0.0
    %1120 = vst [vmem:[%s124] sm:$0x1] 0.0
    %1121 = vst [vmem:[%s126] sm:$0x1] 0.0
    loop: start=0, step=1, limit=4
    $region65: #{tpu_custom_call.1} parent=1 // loop_pre_header
      _
    $region66: #{tpu_custom_call.1} parent=1 // loop_header
      %s1123 = sphi 0, %s1127
      %p1124 = scmp.ge.s32.totalorder %s1123, 4
    $region67: #{tpu_custom_call.1} parent=1 // loop_header_branch
      %1126 = sbr.rel (%p1124) target = $region71
    $region68: #{tpu_custom_call.1} parent=1 // loop_body
      %s1128 = smul.u32 %s1123, 8
      %s1129 = scalar_lea.vmem [#allocation2], %s1128
      %v1130 = vld [vmem:[%s1129] sm:$0xff]
      %v1131 = vld [vmem:[%s1129 + $0x8] sm:$0x3]
      %v1132 = vstv %s1111
      %v1133 = vmul.f32 %v1130, %v1132
      %v1134 = vmul.f32 %v1131, %v1132
      %s1135 = sld [smem:[#allocation11]]
      %v1136 = vstv %s1135
      %v1137 = vmul.f32 %v1136, %v1133
      %s1138 = sld [smem:[#allocation11 + $0x1b]]
      %v1139 = vstv %s1138
      %v1140 = vmul.f32 %v1139, %v1133
      %s1141 = sld [smem:[#allocation11 + $0x36]]
      %v1142 = vstv %s1141
      %v1143 = vmul.f32 %v1142, %v1133
      %s1144 = sld [smem:[#allocation11 + $0x3]]
      %v1145 = vstv %s1144
      %v1146 = vmul.f32 %v1145, %v1133
      %v1147 = vmul.f32 %v1145, %v1134
      %vm1150 = vcmask 1046528
      %v1151 = vrot.slane %v1146, 1
      %v1152 = vrot.slane %v1147, 1
      %v1153 = vsel %vm1150, %v1151, %v1152
      %v1155 = vadd.f32 %v1137, %v1153
      %s1156 = sld [smem:[#allocation11 + $0x1e]]
      %v1157 = vstv %s1156
      %v1158 = vmul.f32 %v1157, %v1133
      %v1159 = vmul.f32 %v1157, %v1134
      %v1162 = vrot.slane %v1158, 1
      %v1163 = vrot.slane %v1159, 1
      %v1164 = vsel %vm1150, %v1162, %v1163
      %v1166 = vadd.f32 %v1140, %v1164
      %s1167 = sld [smem:[#allocation11 + $0x39]]
      %v1168 = vstv %s1167
      %v1169 = vmul.f32 %v1168, %v1133
      %v1170 = vmul.f32 %v1168, %v1134
      %v1173 = vrot.slane %v1169, 1
      %v1174 = vrot.slane %v1170, 1
      %v1175 = vsel %vm1150, %v1173, %v1174
      %v1177 = vadd.f32 %v1143, %v1175
      %s1178 = sld [smem:[#allocation11 + $0x6]]
      %v1179 = vstv %s1178
      %v1180 = vmul.f32 %v1179, %v1133
      %v1181 = vmul.f32 %v1179, %v1134
      %vm1184 = vcmask 1045504
      %v1185 = vrot.slane %v1180, 2
      %v1186 = vrot.slane %v1181, 2
      %v1187 = vsel %vm1184, %v1185, %v1186
      %v1189 = vadd.f32 %v1155, %v1187
      %s1190 = sld [smem:[#allocation11 + $0x21]]
      %v1191 = vstv %s1190
      %v1192 = vmul.f32 %v1191, %v1133
      %v1193 = vmul.f32 %v1191, %v1134
      %v1196 = vrot.slane %v1192, 2
      %v1197 = vrot.slane %v1193, 2
      %v1198 = vsel %vm1184, %v1196, %v1197
      %v1200 = vadd.f32 %v1166, %v1198
      %s1201 = sld [smem:[#allocation11 + $0x3c]]
      %v1202 = vstv %s1201
      %v1203 = vmul.f32 %v1202, %v1133
      %v1204 = vmul.f32 %v1202, %v1134
      %v1207 = vrot.slane %v1203, 2
      %v1208 = vrot.slane %v1204, 2
      %v1209 = vsel %vm1184, %v1207, %v1208
      %v1211 = vadd.f32 %v1177, %v1209
      %1212 = vrot.lane.b32.xlu0 %v1133, 127
      %v1213 = vpop.permute.xlu0 %1212
      %1214 = vrot.lane.b32.xlu0 %v1134, 127
      %v1215 = vpop.permute.xlu0 %1214
      %s1216 = sld [smem:[#allocation11 + $0x1]]
      %v1217 = vstv %s1216
      %v1218 = vmul.f32 %v1217, %v1213
      %v1219 = vadd.f32 %v1189, %v1218
      %s1220 = sld [smem:[#allocation11 + $0x1c]]
      %v1221 = vstv %s1220
      %v1222 = vmul.f32 %v1221, %v1213
      %v1223 = vadd.f32 %v1200, %v1222
      %s1224 = sld [smem:[#allocation11 + $0x37]]
      %v1225 = vstv %s1224
      %v1226 = vmul.f32 %v1225, %v1213
      %v1227 = vadd.f32 %v1211, %v1226
      %s1228 = sld [smem:[#allocation11 + $0x4]]
      %v1229 = vstv %s1228
      %v1230 = vmul.f32 %v1229, %v1213
      %v1231 = vmul.f32 %v1229, %v1215
      %v1234 = vrot.slane %v1230, 1
      %v1235 = vrot.slane %v1231, 1
      %v1236 = vsel %vm1150, %v1234, %v1235
      %v1238 = vadd.f32 %v1219, %v1236
      %s1239 = sld [smem:[#allocation11 + $0x1f]]
      %v1240 = vstv %s1239
      %v1241 = vmul.f32 %v1240, %v1213
      %v1242 = vmul.f32 %v1240, %v1215
      %v1245 = vrot.slane %v1241, 1
      %v1246 = vrot.slane %v1242, 1
      %v1247 = vsel %vm1150, %v1245, %v1246
      %v1249 = vadd.f32 %v1223, %v1247
      %s1250 = sld [smem:[#allocation11 + $0x3a]]
      %v1251 = vstv %s1250
      %v1252 = vmul.f32 %v1251, %v1213
      %v1253 = vmul.f32 %v1251, %v1215
      %v1256 = vrot.slane %v1252, 1
      %v1257 = vrot.slane %v1253, 1
      %v1258 = vsel %vm1150, %v1256, %v1257
      %v1260 = vadd.f32 %v1227, %v1258
      %s1261 = sld [smem:[#allocation11 + $0x7]]
      %v1262 = vstv %s1261
      %v1263 = vmul.f32 %v1262, %v1213
      %v1264 = vmul.f32 %v1262, %v1215
      %v1267 = vrot.slane %v1263, 2
      %v1268 = vrot.slane %v1264, 2
      %v1269 = vsel %vm1184, %v1267, %v1268
      %v1271 = vadd.f32 %v1238, %v1269
      %s1272 = sld [smem:[#allocation11 + $0x22]]
      %v1273 = vstv %s1272
      %v1274 = vmul.f32 %v1273, %v1213
      %v1275 = vmul.f32 %v1273, %v1215
      %v1278 = vrot.slane %v1274, 2
      %v1279 = vrot.slane %v1275, 2
      %v1280 = vsel %vm1184, %v1278, %v1279
      %v1282 = vadd.f32 %v1249, %v1280
      %s1283 = sld [smem:[#allocation11 + $0x3d]]
      %v1284 = vstv %s1283
      %v1285 = vmul.f32 %v1284, %v1213
      %v1286 = vmul.f32 %v1284, %v1215
      %v1289 = vrot.slane %v1285, 2
      %v1290 = vrot.slane %v1286, 2
      %v1291 = vsel %vm1184, %v1289, %v1290
      %v1293 = vadd.f32 %v1260, %v1291
      %1294 = vrot.lane.b32.xlu0 %v1133, 126
      %v1295 = vpop.permute.xlu0 %1294
      %1296 = vrot.lane.b32.xlu0 %v1134, 126
      %v1297 = vpop.permute.xlu0 %1296
      %s1298 = sld [smem:[#allocation11 + $0x2]]
      %v1299 = vstv %s1298
      %v1300 = vmul.f32 %v1299, %v1295
      %v1301 = vadd.f32 %v1271, %v1300
      %s1302 = sld [smem:[#allocation11 + $0x1d]]
      %v1303 = vstv %s1302
      %v1304 = vmul.f32 %v1303, %v1295
      %v1305 = vadd.f32 %v1282, %v1304
      %s1306 = sld [smem:[#allocation11 + $0x38]]
      %v1307 = vstv %s1306
      %v1308 = vmul.f32 %v1307, %v1295
      %v1309 = vadd.f32 %v1293, %v1308
      %s1310 = sld [smem:[#allocation11 + $0x5]]
      %v1311 = vstv %s1310
      %v1312 = vmul.f32 %v1311, %v1295
      %v1313 = vmul.f32 %v1311, %v1297
      %v1316 = vrot.slane %v1312, 1
      %v1317 = vrot.slane %v1313, 1
      %v1318 = vsel %vm1150, %v1316, %v1317
      %v1320 = vadd.f32 %v1301, %v1318
      %s1321 = sld [smem:[#allocation11 + $0x20]]
      %v1322 = vstv %s1321
      %v1323 = vmul.f32 %v1322, %v1295
      %v1324 = vmul.f32 %v1322, %v1297
      %v1327 = vrot.slane %v1323, 1
      %v1328 = vrot.slane %v1324, 1
      %v1329 = vsel %vm1150, %v1327, %v1328
      %v1331 = vadd.f32 %v1305, %v1329
      %s1332 = sld [smem:[#allocation11 + $0x3b]]
      %v1333 = vstv %s1332
      %v1334 = vmul.f32 %v1333, %v1295
      %v1335 = vmul.f32 %v1333, %v1297
      %v1338 = vrot.slane %v1334, 1
      %v1339 = vrot.slane %v1335, 1
      %v1340 = vsel %vm1150, %v1338, %v1339
      %v1342 = vadd.f32 %v1309, %v1340
      %s1343 = sld [smem:[#allocation11 + $0x8]]
      %v1344 = vstv %s1343
      %v1345 = vmul.f32 %v1344, %v1295
      %v1346 = vmul.f32 %v1344, %v1297
      %v1349 = vrot.slane %v1345, 2
      %v1350 = vrot.slane %v1346, 2
      %v1351 = vsel %vm1184, %v1349, %v1350
      %v1353 = vadd.f32 %v1320, %v1351
      %s1354 = sld [smem:[#allocation11 + $0x23]]
      %v1355 = vstv %s1354
      %v1356 = vmul.f32 %v1355, %v1295
      %v1357 = vmul.f32 %v1355, %v1297
      %v1360 = vrot.slane %v1356, 2
      %v1361 = vrot.slane %v1357, 2
      %v1362 = vsel %vm1184, %v1360, %v1361
      %v1364 = vadd.f32 %v1331, %v1362
      %s1365 = sld [smem:[#allocation11 + $0x3e]]
      %v1366 = vstv %s1365
      %v1367 = vmul.f32 %v1366, %v1295
      %v1368 = vmul.f32 %v1366, %v1297
      %v1371 = vrot.slane %v1367, 2
      %v1372 = vrot.slane %v1368, 2
      %v1373 = vsel %vm1184, %v1371, %v1372
      %v1375 = vadd.f32 %v1342, %v1373
      %s1376 = sadd.s32 %s1128, 40
      %s1377 = scalar_lea.vmem [#allocation2], %s1376
      %v1378 = vld [vmem:[%s1377] sm:$0xff]
      %v1379 = vld [vmem:[%s1377 + $0x8] sm:$0x3]
      %v1380 = vstv %s1113
      %v1381 = vmul.f32 %v1378, %v1380
      %v1382 = vmul.f32 %v1379, %v1380
      %s1383 = sld [smem:[#allocation11 + $0x9]]
      %v1384 = vstv %s1383
      %v1385 = vmul.f32 %v1384, %v1381
      %v1386 = vadd.f32 %v1353, %v1385
      %s1387 = sld [smem:[#allocation11 + $0x24]]
      %v1388 = vstv %s1387
      %v1389 = vmul.f32 %v1388, %v1381
      %v1390 = vadd.f32 %v1364, %v1389
      %s1391 = sld [smem:[#allocation11 + $0x3f]]
      %v1392 = vstv %s1391
      %v1393 = vmul.f32 %v1392, %v1381
      %v1394 = vadd.f32 %v1375, %v1393
      %s1395 = sld [smem:[#allocation11 + $0xc]]
      %v1396 = vstv %s1395
      %v1397 = vmul.f32 %v1396, %v1381
      %v1398 = vmul.f32 %v1396, %v1382
      %v1401 = vrot.slane %v1397, 1
      %v1402 = vrot.slane %v1398, 1
      %v1403 = vsel %vm1150, %v1401, %v1402
      %v1405 = vadd.f32 %v1386, %v1403
      %s1406 = sld [smem:[#allocation11 + $0x27]]
      %v1407 = vstv %s1406
      %v1408 = vmul.f32 %v1407, %v1381
      %v1409 = vmul.f32 %v1407, %v1382
      %v1412 = vrot.slane %v1408, 1
      %v1413 = vrot.slane %v1409, 1
      %v1414 = vsel %vm1150, %v1412, %v1413
      %v1416 = vadd.f32 %v1390, %v1414
      %s1417 = sld [smem:[#allocation11 + $0x42]]
      %v1418 = vstv %s1417
      %v1419 = vmul.f32 %v1418, %v1381
      %v1420 = vmul.f32 %v1418, %v1382
      %v1423 = vrot.slane %v1419, 1
      %v1424 = vrot.slane %v1420, 1
      %v1425 = vsel %vm1150, %v1423, %v1424
      %v1427 = vadd.f32 %v1394, %v1425
      %s1428 = sld [smem:[#allocation11 + $0xf]]
      %v1429 = vstv %s1428
      %v1430 = vmul.f32 %v1429, %v1381
      %v1431 = vmul.f32 %v1429, %v1382
      %v1434 = vrot.slane %v1430, 2
      %v1435 = vrot.slane %v1431, 2
      %v1436 = vsel %vm1184, %v1434, %v1435
      %v1438 = vadd.f32 %v1405, %v1436
      %s1439 = sld [smem:[#allocation11 + $0x2a]]
      %v1440 = vstv %s1439
      %v1441 = vmul.f32 %v1440, %v1381
      %v1442 = vmul.f32 %v1440, %v1382
      %v1445 = vrot.slane %v1441, 2
      %v1446 = vrot.slane %v1442, 2
      %v1447 = vsel %vm1184, %v1445, %v1446
      %v1449 = vadd.f32 %v1416, %v1447
      %s1450 = sld [smem:[#allocation11 + $0x45]]
      %v1451 = vstv %s1450
      %v1452 = vmul.f32 %v1451, %v1381
      %v1453 = vmul.f32 %v1451, %v1382
      %v1456 = vrot.slane %v1452, 2
      %v1457 = vrot.slane %v1453, 2
      %v1458 = vsel %vm1184, %v1456, %v1457
      %v1460 = vadd.f32 %v1427, %v1458
      %1461 = vrot.lane.b32.xlu0 %v1381, 127
      %v1462 = vpop.permute.xlu0 %1461
      %1463 = vrot.lane.b32.xlu0 %v1382, 127
      %v1464 = vpop.permute.xlu0 %1463
      %s1465 = sld [smem:[#allocation11 + $0xa]]
      %v1466 = vstv %s1465
      %v1467 = vmul.f32 %v1466, %v1462
      %v1468 = vadd.f32 %v1438, %v1467
      %s1469 = sld [smem:[#allocation11 + $0x25]]
      %v1470 = vstv %s1469
      %v1471 = vmul.f32 %v1470, %v1462
      %v1472 = vadd.f32 %v1449, %v1471
      %s1473 = sld [smem:[#allocation11 + $0x40]]
      %v1474 = vstv %s1473
      %v1475 = vmul.f32 %v1474, %v1462
      %v1476 = vadd.f32 %v1460, %v1475
      %s1477 = sld [smem:[#allocation11 + $0xd]]
      %v1478 = vstv %s1477
      %v1479 = vmul.f32 %v1478, %v1462
      %v1480 = vmul.f32 %v1478, %v1464
      %v1483 = vrot.slane %v1479, 1
      %v1484 = vrot.slane %v1480, 1
      %v1485 = vsel %vm1150, %v1483, %v1484
      %v1487 = vadd.f32 %v1468, %v1485
      %s1488 = sld [smem:[#allocation11 + $0x28]]
      %v1489 = vstv %s1488
      %v1490 = vmul.f32 %v1489, %v1462
      %v1491 = vmul.f32 %v1489, %v1464
      %v1494 = vrot.slane %v1490, 1
      %v1495 = vrot.slane %v1491, 1
      %v1496 = vsel %vm1150, %v1494, %v1495
      %v1498 = vadd.f32 %v1472, %v1496
      %s1499 = sld [smem:[#allocation11 + $0x43]]
      %v1500 = vstv %s1499
      %v1501 = vmul.f32 %v1500, %v1462
      %v1502 = vmul.f32 %v1500, %v1464
      %v1505 = vrot.slane %v1501, 1
      %v1506 = vrot.slane %v1502, 1
      %v1507 = vsel %vm1150, %v1505, %v1506
      %v1509 = vadd.f32 %v1476, %v1507
      %s1510 = sld [smem:[#allocation11 + $0x10]]
      %v1511 = vstv %s1510
      %v1512 = vmul.f32 %v1511, %v1462
      %v1513 = vmul.f32 %v1511, %v1464
      %v1516 = vrot.slane %v1512, 2
      %v1517 = vrot.slane %v1513, 2
      %v1518 = vsel %vm1184, %v1516, %v1517
      %v1520 = vadd.f32 %v1487, %v1518
      %s1521 = sld [smem:[#allocation11 + $0x2b]]
      %v1522 = vstv %s1521
      %v1523 = vmul.f32 %v1522, %v1462
      %v1524 = vmul.f32 %v1522, %v1464
      %v1527 = vrot.slane %v1523, 2
      %v1528 = vrot.slane %v1524, 2
      %v1529 = vsel %vm1184, %v1527, %v1528
      %v1531 = vadd.f32 %v1498, %v1529
      %s1532 = sld [smem:[#allocation11 + $0x46]]
      %v1533 = vstv %s1532
      %v1534 = vmul.f32 %v1533, %v1462
      %v1535 = vmul.f32 %v1533, %v1464
      %v1538 = vrot.slane %v1534, 2
      %v1539 = vrot.slane %v1535, 2
      %v1540 = vsel %vm1184, %v1538, %v1539
      %v1542 = vadd.f32 %v1509, %v1540
      %1543 = vrot.lane.b32.xlu0 %v1381, 126
      %v1544 = vpop.permute.xlu0 %1543
      %1545 = vrot.lane.b32.xlu0 %v1382, 126
      %v1546 = vpop.permute.xlu0 %1545
      %s1547 = sld [smem:[#allocation11 + $0xb]]
      %v1548 = vstv %s1547
      %v1549 = vmul.f32 %v1548, %v1544
      %v1550 = vadd.f32 %v1520, %v1549
      %s1551 = sld [smem:[#allocation11 + $0x26]]
      %v1552 = vstv %s1551
      %v1553 = vmul.f32 %v1552, %v1544
      %v1554 = vadd.f32 %v1531, %v1553
      %s1555 = sld [smem:[#allocation11 + $0x41]]
      %v1556 = vstv %s1555
      %v1557 = vmul.f32 %v1556, %v1544
      %v1558 = vadd.f32 %v1542, %v1557
      %s1559 = sld [smem:[#allocation11 + $0xe]]
      %v1560 = vstv %s1559
      %v1561 = vmul.f32 %v1560, %v1544
      %v1562 = vmul.f32 %v1560, %v1546
      %v1565 = vrot.slane %v1561, 1
      %v1566 = vrot.slane %v1562, 1
      %v1567 = vsel %vm1150, %v1565, %v1566
      %v1569 = vadd.f32 %v1550, %v1567
      %s1570 = sld [smem:[#allocation11 + $0x29]]
      %v1571 = vstv %s1570
      %v1572 = vmul.f32 %v1571, %v1544
      %v1573 = vmul.f32 %v1571, %v1546
      %v1576 = vrot.slane %v1572, 1
      %v1577 = vrot.slane %v1573, 1
      %v1578 = vsel %vm1150, %v1576, %v1577
      %v1580 = vadd.f32 %v1554, %v1578
      %s1581 = sld [smem:[#allocation11 + $0x44]]
      %v1582 = vstv %s1581
      %v1583 = vmul.f32 %v1582, %v1544
      %v1584 = vmul.f32 %v1582, %v1546
      %v1587 = vrot.slane %v1583, 1
      %v1588 = vrot.slane %v1584, 1
      %v1589 = vsel %vm1150, %v1587, %v1588
      %v1591 = vadd.f32 %v1558, %v1589
      %s1592 = sld [smem:[#allocation11 + $0x11]]
      %v1593 = vstv %s1592
      %v1594 = vmul.f32 %v1593, %v1544
      %v1595 = vmul.f32 %v1593, %v1546
      %v1598 = vrot.slane %v1594, 2
      %v1599 = vrot.slane %v1595, 2
      %v1600 = vsel %vm1184, %v1598, %v1599
      %v1602 = vadd.f32 %v1569, %v1600
      %s1603 = sld [smem:[#allocation11 + $0x2c]]
      %v1604 = vstv %s1603
      %v1605 = vmul.f32 %v1604, %v1544
      %v1606 = vmul.f32 %v1604, %v1546
      %v1609 = vrot.slane %v1605, 2
      %v1610 = vrot.slane %v1606, 2
      %v1611 = vsel %vm1184, %v1609, %v1610
      %v1613 = vadd.f32 %v1580, %v1611
      %s1614 = sld [smem:[#allocation11 + $0x47]]
      %v1615 = vstv %s1614
      %v1616 = vmul.f32 %v1615, %v1544
      %v1617 = vmul.f32 %v1615, %v1546
      %v1620 = vrot.slane %v1616, 2
      %v1621 = vrot.slane %v1617, 2
      %v1622 = vsel %vm1184, %v1620, %v1621
      %v1624 = vadd.f32 %v1591, %v1622
      %s1625 = sadd.s32 %s1128, 80
      %s1626 = scalar_lea.vmem [#allocation2], %s1625
      %v1627 = vld [vmem:[%s1626] sm:$0xff]
      %v1628 = vld [vmem:[%s1626 + $0x8] sm:$0x3]
      %v1629 = vstv %s1115
      %v1630 = vmul.f32 %v1627, %v1629
      %v1631 = vmul.f32 %v1628, %v1629
      %s1632 = sld [smem:[#allocation11 + $0x12]]
      %v1633 = vstv %s1632
      %v1634 = vmul.f32 %v1633, %v1630
      %v1635 = vadd.f32 %v1602, %v1634
      %s1636 = sld [smem:[#allocation11 + $0x2d]]
      %v1637 = vstv %s1636
      %v1638 = vmul.f32 %v1637, %v1630
      %v1639 = vadd.f32 %v1613, %v1638
      %s1640 = sld [smem:[#allocation11 + $0x48]]
      %v1641 = vstv %s1640
      %v1642 = vmul.f32 %v1641, %v1630
      %v1643 = vadd.f32 %v1624, %v1642
      %s1644 = sld [smem:[#allocation11 + $0x15]]
      %v1645 = vstv %s1644
      %v1646 = vmul.f32 %v1645, %v1630
      %v1647 = vmul.f32 %v1645, %v1631
      %v1650 = vrot.slane %v1646, 1
      %v1651 = vrot.slane %v1647, 1
      %v1652 = vsel %vm1150, %v1650, %v1651
      %v1654 = vadd.f32 %v1635, %v1652
      %s1655 = sld [smem:[#allocation11 + $0x30]]
      %v1656 = vstv %s1655
      %v1657 = vmul.f32 %v1656, %v1630
      %v1658 = vmul.f32 %v1656, %v1631
      %v1661 = vrot.slane %v1657, 1
      %v1662 = vrot.slane %v1658, 1
      %v1663 = vsel %vm1150, %v1661, %v1662
      %v1665 = vadd.f32 %v1639, %v1663
      %s1666 = sld [smem:[#allocation11 + $0x4b]]
      %v1667 = vstv %s1666
      %v1668 = vmul.f32 %v1667, %v1630
      %v1669 = vmul.f32 %v1667, %v1631
      %v1672 = vrot.slane %v1668, 1
      %v1673 = vrot.slane %v1669, 1
      %v1674 = vsel %vm1150, %v1672, %v1673
      %v1676 = vadd.f32 %v1643, %v1674
      %s1677 = sld [smem:[#allocation11 + $0x18]]
      %v1678 = vstv %s1677
      %v1679 = vmul.f32 %v1678, %v1630
      %v1680 = vmul.f32 %v1678, %v1631
      %v1683 = vrot.slane %v1679, 2
      %v1684 = vrot.slane %v1680, 2
      %v1685 = vsel %vm1184, %v1683, %v1684
      %v1687 = vadd.f32 %v1654, %v1685
      %s1688 = sld [smem:[#allocation11 + $0x33]]
      %v1689 = vstv %s1688
      %v1690 = vmul.f32 %v1689, %v1630
      %v1691 = vmul.f32 %v1689, %v1631
      %v1694 = vrot.slane %v1690, 2
      %v1695 = vrot.slane %v1691, 2
      %v1696 = vsel %vm1184, %v1694, %v1695
      %v1698 = vadd.f32 %v1665, %v1696
      %s1699 = sld [smem:[#allocation11 + $0x4e]]
      %v1700 = vstv %s1699
      %v1701 = vmul.f32 %v1700, %v1630
      %v1702 = vmul.f32 %v1700, %v1631
      %v1705 = vrot.slane %v1701, 2
      %v1706 = vrot.slane %v1702, 2
      %v1707 = vsel %vm1184, %v1705, %v1706
      %v1709 = vadd.f32 %v1676, %v1707
      %1710 = vrot.lane.b32.xlu0 %v1630, 127
      %v1711 = vpop.permute.xlu0 %1710
      %1712 = vrot.lane.b32.xlu0 %v1631, 127
      %v1713 = vpop.permute.xlu0 %1712
      %s1714 = sld [smem:[#allocation11 + $0x13]]
      %v1715 = vstv %s1714
      %v1716 = vmul.f32 %v1715, %v1711
      %v1717 = vadd.f32 %v1687, %v1716
      %s1718 = sld [smem:[#allocation11 + $0x2e]]
      %v1719 = vstv %s1718
      %v1720 = vmul.f32 %v1719, %v1711
      %v1721 = vadd.f32 %v1698, %v1720
      %s1722 = sld [smem:[#allocation11 + $0x49]]
      %v1723 = vstv %s1722
      %v1724 = vmul.f32 %v1723, %v1711
      %v1725 = vadd.f32 %v1709, %v1724
      %s1726 = sld [smem:[#allocation11 + $0x16]]
      %v1727 = vstv %s1726
      %v1728 = vmul.f32 %v1727, %v1711
      %v1729 = vmul.f32 %v1727, %v1713
      %v1732 = vrot.slane %v1728, 1
      %v1733 = vrot.slane %v1729, 1
      %v1734 = vsel %vm1150, %v1732, %v1733
      %v1736 = vadd.f32 %v1717, %v1734
      %s1737 = sld [smem:[#allocation11 + $0x31]]
      %v1738 = vstv %s1737
      %v1739 = vmul.f32 %v1738, %v1711
      %v1740 = vmul.f32 %v1738, %v1713
      %v1743 = vrot.slane %v1739, 1
      %v1744 = vrot.slane %v1740, 1
      %v1745 = vsel %vm1150, %v1743, %v1744
      %v1747 = vadd.f32 %v1721, %v1745
      %s1748 = sld [smem:[#allocation11 + $0x4c]]
      %v1749 = vstv %s1748
      %v1750 = vmul.f32 %v1749, %v1711
      %v1751 = vmul.f32 %v1749, %v1713
      %v1754 = vrot.slane %v1750, 1
      %v1755 = vrot.slane %v1751, 1
      %v1756 = vsel %vm1150, %v1754, %v1755
      %v1758 = vadd.f32 %v1725, %v1756
      %s1759 = sld [smem:[#allocation11 + $0x19]]
      %v1760 = vstv %s1759
      %v1761 = vmul.f32 %v1760, %v1711
      %v1762 = vmul.f32 %v1760, %v1713
      %v1765 = vrot.slane %v1761, 2
      %v1766 = vrot.slane %v1762, 2
      %v1767 = vsel %vm1184, %v1765, %v1766
      %v1769 = vadd.f32 %v1736, %v1767
      %s1770 = sld [smem:[#allocation11 + $0x34]]
      %v1771 = vstv %s1770
      %v1772 = vmul.f32 %v1771, %v1711
      %v1773 = vmul.f32 %v1771, %v1713
      %v1776 = vrot.slane %v1772, 2
      %v1777 = vrot.slane %v1773, 2
      %v1778 = vsel %vm1184, %v1776, %v1777
      %v1780 = vadd.f32 %v1747, %v1778
      %s1781 = sld [smem:[#allocation11 + $0x4f]]
      %v1782 = vstv %s1781
      %v1783 = vmul.f32 %v1782, %v1711
      %v1784 = vmul.f32 %v1782, %v1713
      %v1787 = vrot.slane %v1783, 2
      %v1788 = vrot.slane %v1784, 2
      %v1789 = vsel %vm1184, %v1787, %v1788
      %v1791 = vadd.f32 %v1758, %v1789
      %1792 = vrot.lane.b32.xlu0 %v1630, 126
      %v1793 = vpop.permute.xlu0 %1792
      %1794 = vrot.lane.b32.xlu0 %v1631, 126
      %v1795 = vpop.permute.xlu0 %1794
      %s1796 = sld [smem:[#allocation11 + $0x14]]
      %v1797 = vstv %s1796
      %v1798 = vmul.f32 %v1797, %v1793
      %v1799 = vadd.f32 %v1769, %v1798
      %s1800 = sld [smem:[#allocation11 + $0x2f]]
      %v1801 = vstv %s1800
      %v1802 = vmul.f32 %v1801, %v1793
      %v1803 = vadd.f32 %v1780, %v1802
      %s1804 = sld [smem:[#allocation11 + $0x4a]]
      %v1805 = vstv %s1804
      %v1806 = vmul.f32 %v1805, %v1793
      %v1807 = vadd.f32 %v1791, %v1806
      %s1808 = sld [smem:[#allocation11 + $0x17]]
      %v1809 = vstv %s1808
      %v1810 = vmul.f32 %v1809, %v1793
      %v1811 = vmul.f32 %v1809, %v1795
      %v1814 = vrot.slane %v1810, 1
      %v1815 = vrot.slane %v1811, 1
      %v1816 = vsel %vm1150, %v1814, %v1815
      %v1818 = vadd.f32 %v1799, %v1816
      %s1819 = sld [smem:[#allocation11 + $0x32]]
      %v1820 = vstv %s1819
      %v1821 = vmul.f32 %v1820, %v1793
      %v1822 = vmul.f32 %v1820, %v1795
      %v1825 = vrot.slane %v1821, 1
      %v1826 = vrot.slane %v1822, 1
      %v1827 = vsel %vm1150, %v1825, %v1826
      %v1829 = vadd.f32 %v1803, %v1827
      %s1830 = sld [smem:[#allocation11 + $0x4d]]
      %v1831 = vstv %s1830
      %v1832 = vmul.f32 %v1831, %v1793
      %v1833 = vmul.f32 %v1831, %v1795
      %v1836 = vrot.slane %v1832, 1
      %v1837 = vrot.slane %v1833, 1
      %v1838 = vsel %vm1150, %v1836, %v1837
      %v1840 = vadd.f32 %v1807, %v1838
      %s1841 = sld [smem:[#allocation11 + $0x1a]]
      %v1842 = vstv %s1841
      %v1843 = vmul.f32 %v1842, %v1793
      %v1844 = vmul.f32 %v1842, %v1795
      %v1847 = vrot.slane %v1843, 2
      %v1848 = vrot.slane %v1844, 2
      %v1849 = vsel %vm1184, %v1847, %v1848
      %v1851 = vadd.f32 %v1818, %v1849
      %s1852 = sld [smem:[#allocation11 + $0x35]]
      %v1853 = vstv %s1852
      %v1854 = vmul.f32 %v1853, %v1793
      %v1855 = vmul.f32 %v1853, %v1795
      %v1858 = vrot.slane %v1854, 2
      %v1859 = vrot.slane %v1855, 2
      %v1860 = vsel %vm1184, %v1858, %v1859
      %v1862 = vadd.f32 %v1829, %v1860
      %s1863 = sld [smem:[#allocation11 + $0x50]]
      %v1864 = vstv %s1863
      %v1865 = vmul.f32 %v1864, %v1793
      %v1866 = vmul.f32 %v1864, %v1795
      %v1869 = vrot.slane %v1865, 2
      %v1870 = vrot.slane %v1866, 2
      %v1871 = vsel %vm1184, %v1869, %v1870
      %v1873 = vadd.f32 %v1840, %v1871
      %s1874 = ssub.s32 28, %s1128
      %v1875 = vstv %s1874
      %vm1876 = vcmp.lt.s32.totalorder %v115, %v1875
      %vm1877 = vcmp.lt.s32.totalorder %v117, 28
      %vm1878 = vmand %vm1876, %vm1877
      %v1879 = vsel %vm1878, %v1851, 0.0
      %v1880 = vld [vmem:[#allocation3] sm:$0x1]
      %v1881 = vrot.slane %v1879, 4
      %v1882 = vadd.f32 %v1879, %v1881
      %v1883 = vrot.slane %v1882, 2
      %v1884 = vadd.f32 %v1882, %v1883
      %v1885 = vrot.slane %v1884, 1
      %v1886 = vadd.f32 %v1884, %v1885
      %v1887 = vadd.f32 %v1880, %v1886
      %1888 = vst [vmem:[#allocation3] sm:$0x1] %v1887
      %v1889 = vld [vmem:[#allocation4] sm:$0x1]
      %v1890 = vmul.f32 %v1879, %v1879
      %v1891 = vrot.slane %v1890, 4
      %v1892 = vadd.f32 %v1890, %v1891
      %v1893 = vrot.slane %v1892, 2
      %v1894 = vadd.f32 %v1892, %v1893
      %v1895 = vrot.slane %v1894, 1
      %v1896 = vadd.f32 %v1894, %v1895
      %v1897 = vadd.f32 %v1889, %v1896
      %1898 = vst [vmem:[#allocation4] sm:$0x1] %v1897
      %v1899 = vsel %vm1878, %v1862, 0.0
      %v1900 = vld [vmem:[%s120] sm:$0x1]
      %v1901 = vrot.slane %v1899, 4
      %v1902 = vadd.f32 %v1899, %v1901
      %v1903 = vrot.slane %v1902, 2
      %v1904 = vadd.f32 %v1902, %v1903
      %v1905 = vrot.slane %v1904, 1
      %v1906 = vadd.f32 %v1904, %v1905
      %v1907 = vadd.f32 %v1900, %v1906
      %1908 = vst [vmem:[%s120] sm:$0x1] %v1907
      %v1909 = vld [vmem:[%s122] sm:$0x1]
      %v1910 = vmul.f32 %v1899, %v1899
      %v1911 = vrot.slane %v1910, 4
      %v1912 = vadd.f32 %v1910, %v1911
      %v1913 = vrot.slane %v1912, 2
      %v1914 = vadd.f32 %v1912, %v1913
      %v1915 = vrot.slane %v1914, 1
      %v1916 = vadd.f32 %v1914, %v1915
      %v1917 = vadd.f32 %v1909, %v1916
      %1918 = vst [vmem:[%s122] sm:$0x1] %v1917
      %v1919 = vsel %vm1878, %v1873, 0.0
      %v1920 = vld [vmem:[%s124] sm:$0x1]
      %v1921 = vrot.slane %v1919, 4
      %v1922 = vadd.f32 %v1919, %v1921
      %v1923 = vrot.slane %v1922, 2
      %v1924 = vadd.f32 %v1922, %v1923
      %v1925 = vrot.slane %v1924, 1
      %v1926 = vadd.f32 %v1924, %v1925
      %v1927 = vadd.f32 %v1920, %v1926
      %1928 = vst [vmem:[%s124] sm:$0x1] %v1927
      %v1929 = vld [vmem:[%s126] sm:$0x1]
      %v1930 = vmul.f32 %v1919, %v1919
      %v1931 = vrot.slane %v1930, 4
      %v1932 = vadd.f32 %v1930, %v1931
      %v1933 = vrot.slane %v1932, 2
      %v1934 = vadd.f32 %v1932, %v1933
      %v1935 = vrot.slane %v1934, 1
      %v1936 = vadd.f32 %v1934, %v1935
      %v1937 = vadd.f32 %v1929, %v1936
      %1938 = vst [vmem:[%s126] sm:$0x1] %v1937
      %s1939 = scalar_lea.vmem [#allocation18], %s1128
      %1940 = vst [vmem:[%s1939] sm:$0xff] %v1851
      %s1941 = sadd.s32 %s1128, 32
      %s1942 = scalar_lea.vmem [#allocation18], %s1941
      %1943 = vst [vmem:[%s1942] sm:$0xff] %v1862
      %s1944 = sadd.s32 %s1128, 64
      %s1945 = scalar_lea.vmem [#allocation18], %s1944
      %1946 = vst [vmem:[%s1945] sm:$0xff] %v1873
    $region69: #{tpu_custom_call.1} parent=1 // loop_footer
      %s1127 = sadd.s32 1, %s1123
    $region70: #{tpu_custom_call.1} parent=1 // loop_footer_branch
      %1122 = sbr.rel target = $region66
    $region71: #{tpu_custom_call.1} parent=1 // loop_exit
      _
    %v1947 = vld [vmem:[#allocation3] sm:$0x1]
    %v1948 = vsel %vm945, %v1947, 0.0
    %1949 = vadd.xlane.f32.xlu0 %v1948
    %v1950 = vpop.xlane.xlu0 %1949
    %v1951 = vrot.slane %v1950, 4
    %v1952 = vadd.f32 %v1950, %v1951
    %v1953 = vrot.slane %v1952, 2
    %v1954 = vadd.f32 %v1952, %v1953
    %v1955 = vrot.slane %v1954, 1
    %v1956 = vadd.f32 %v1954, %v1955
    %s1957 = vtos %v1956
    %v1958 = vrcp.pop 784.0
    %v1959 = vmul.f32 784.0, %v1958
    %v1960 = vsub.f32 1.0, %v1959
    %v1961 = vmul.f32 %v1958, %v1960
    %v1962 = vadd.f32 %v1958, %v1961
    %vm1963 = vweird.f32 %v1958
    %v1964 = vsel %vm1963, %v1958, %v1962
    %s1965 = vtos %v1964
    %s1966 = smul.f32 %s1957, %s1965
    %v1967 = vld [vmem:[#allocation4] sm:$0x1]
    %v1968 = vsel %vm945, %v1967, 0.0
    %1969 = vadd.xlane.f32.xlu0 %v1968
    %v1970 = vpop.xlane.xlu0 %1969
    %v1971 = vrot.slane %v1970, 4
    %v1972 = vadd.f32 %v1970, %v1971
    %v1973 = vrot.slane %v1972, 2
    %v1974 = vadd.f32 %v1972, %v1973
    %v1975 = vrot.slane %v1974, 1
    %v1976 = vadd.f32 %v1974, %v1975
    %s1977 = vtos %v1976
    %v1978 = vrcp.pop 784.0
    %v1979 = vmul.f32 784.0, %v1978
    %v1980 = vsub.f32 1.0, %v1979
    %v1981 = vmul.f32 %v1978, %v1980
    %v1982 = vadd.f32 %v1978, %v1981
    %vm1983 = vweird.f32 %v1978
    %v1984 = vsel %vm1983, %v1978, %v1982
    %s1985 = vtos %v1984
    %s1986 = smul.f32 %s1977, %s1985
    %s1987 = smul.f32 %s1966, %s1966
    %s1988 = ssub.f32 %s1986, %s1987
    %s1989 = sadd.f32 %s1988, 1e-05
    %v1990 = vstv %s1989
    %v1991 = vrsqrt.pop %v1990
    %v1992 = vmul.f32 %v1991, %v1990
    %v1993 = vmul.f32 %v1992, %v1991
    %v1994 = vmul.f32 0.5, %v1993
    %v1995 = vsub.f32 1.5, %v1994
    %v1996 = vmul.f32 %v1991, %v1995
    %vm1997 = vweird.f32 %v1990
    %vm1998 = vweird.f32 %v1991
    %vm1999 = vmor %vm1997, %vm1998
    %v2000 = vsel %vm1999, %v1991, %v1996
    %s2001 = vtos %v2000
    %v2002 = vld [vmem:[%s120] sm:$0x1]
    %v2003 = vsel %vm945, %v2002, 0.0
    %2004 = vadd.xlane.f32.xlu0 %v2003
    %v2005 = vpop.xlane.xlu0 %2004
    %v2006 = vrot.slane %v2005, 4
    %v2007 = vadd.f32 %v2005, %v2006
    %v2008 = vrot.slane %v2007, 2
    %v2009 = vadd.f32 %v2007, %v2008
    %v2010 = vrot.slane %v2009, 1
    %v2011 = vadd.f32 %v2009, %v2010
    %s2012 = vtos %v2011
    %v2013 = vrcp.pop 784.0
    %v2014 = vmul.f32 784.0, %v2013
    %v2015 = vsub.f32 1.0, %v2014
    %v2016 = vmul.f32 %v2013, %v2015
    %v2017 = vadd.f32 %v2013, %v2016
    %vm2018 = vweird.f32 %v2013
    %v2019 = vsel %vm2018, %v2013, %v2017
    %s2020 = vtos %v2019
    %s2021 = smul.f32 %s2012, %s2020
    %v2022 = vld [vmem:[%s122] sm:$0x1]
    %v2023 = vsel %vm945, %v2022, 0.0
    %2024 = vadd.xlane.f32.xlu0 %v2023
    %v2025 = vpop.xlane.xlu0 %2024
    %v2026 = vrot.slane %v2025, 4
    %v2027 = vadd.f32 %v2025, %v2026
    %v2028 = vrot.slane %v2027, 2
    %v2029 = vadd.f32 %v2027, %v2028
    %v2030 = vrot.slane %v2029, 1
    %v2031 = vadd.f32 %v2029, %v2030
    %s2032 = vtos %v2031
    %v2033 = vrcp.pop 784.0
    %v2034 = vmul.f32 784.0, %v2033
    %v2035 = vsub.f32 1.0, %v2034
    %v2036 = vmul.f32 %v2033, %v2035
    %v2037 = vadd.f32 %v2033, %v2036
    %vm2038 = vweird.f32 %v2033
    %v2039 = vsel %vm2038, %v2033, %v2037
    %s2040 = vtos %v2039
    %s2041 = smul.f32 %s2032, %s2040
    %s2042 = smul.f32 %s2021, %s2021
    %s2043 = ssub.f32 %s2041, %s2042
    %s2044 = sadd.f32 %s2043, 1e-05
    %v2045 = vstv %s2044
    %v2046 = vrsqrt.pop %v2045
    %v2047 = vmul.f32 %v2046, %v2045
    %v2048 = vmul.f32 %v2047, %v2046
    %v2049 = vmul.f32 0.5, %v2048
    %v2050 = vsub.f32 1.5, %v2049
    %v2051 = vmul.f32 %v2046, %v2050
    %vm2052 = vweird.f32 %v2045
    %vm2053 = vweird.f32 %v2046
    %vm2054 = vmor %vm2052, %vm2053
    %v2055 = vsel %vm2054, %v2046, %v2051
    %s2056 = vtos %v2055
    %v2057 = vld [vmem:[%s124] sm:$0x1]
    %v2058 = vsel %vm945, %v2057, 0.0
    %2059 = vadd.xlane.f32.xlu0 %v2058
    %v2060 = vpop.xlane.xlu0 %2059
    %v2061 = vrot.slane %v2060, 4
    %v2062 = vadd.f32 %v2060, %v2061
    %v2063 = vrot.slane %v2062, 2
    %v2064 = vadd.f32 %v2062, %v2063
    %v2065 = vrot.slane %v2064, 1
    %v2066 = vadd.f32 %v2064, %v2065
    %s2067 = vtos %v2066
    %v2068 = vrcp.pop 784.0
    %v2069 = vmul.f32 784.0, %v2068
    %v2070 = vsub.f32 1.0, %v2069
    %v2071 = vmul.f32 %v2068, %v2070
    %v2072 = vadd.f32 %v2068, %v2071
    %vm2073 = vweird.f32 %v2068
    %v2074 = vsel %vm2073, %v2068, %v2072
    %s2075 = vtos %v2074
    %s2076 = smul.f32 %s2067, %s2075
    %v2077 = vld [vmem:[%s126] sm:$0x1]
    %v2078 = vsel %vm945, %v2077, 0.0
    %2079 = vadd.xlane.f32.xlu0 %v2078
    %v2080 = vpop.xlane.xlu0 %2079
    %v2081 = vrot.slane %v2080, 4
    %v2082 = vadd.f32 %v2080, %v2081
    %v2083 = vrot.slane %v2082, 2
    %v2084 = vadd.f32 %v2082, %v2083
    %v2085 = vrot.slane %v2084, 1
    %v2086 = vadd.f32 %v2084, %v2085
    %s2087 = vtos %v2086
    %v2088 = vrcp.pop 784.0
    %v2089 = vmul.f32 784.0, %v2088
    %v2090 = vsub.f32 1.0, %v2089
    %v2091 = vmul.f32 %v2088, %v2090
    %v2092 = vadd.f32 %v2088, %v2091
    %vm2093 = vweird.f32 %v2088
    %v2094 = vsel %vm2093, %v2088, %v2092
    %s2095 = vtos %v2094
    %s2096 = smul.f32 %s2087, %s2095
    %s2097 = smul.f32 %s2076, %s2076
    %s2098 = ssub.f32 %s2096, %s2097
    %s2099 = sadd.f32 %s2098, 1e-05
    %v2100 = vstv %s2099
    %v2101 = vrsqrt.pop %v2100
    %v2102 = vmul.f32 %v2101, %v2100
    %v2103 = vmul.f32 %v2102, %v2101
    %v2104 = vmul.f32 0.5, %v2103
    %v2105 = vsub.f32 1.5, %v2104
    %v2106 = vmul.f32 %v2101, %v2105
    %vm2107 = vweird.f32 %v2100
    %vm2108 = vweird.f32 %v2101
    %vm2109 = vmor %vm2107, %vm2108
    %v2110 = vsel %vm2109, %v2101, %v2106
    %s2111 = vtos %v2110
    %s2112 = sld [smem:[#allocation15]]
    %s2113 = smul.f32 %s2112, %s2001
    %s2114 = sld [smem:[#allocation15 + $0x1]]
    %s2115 = smul.f32 %s2114, %s2056
    %s2116 = sld [smem:[#allocation15 + $0x2]]
    %s2117 = smul.f32 %s2116, %s2111
    %s2118 = sld [smem:[#allocation17]]
    %s2119 = smul.f32 %s1966, %s2113
    %s2120 = ssub.f32 %s2118, %s2119
    %s2121 = sld [smem:[#allocation17 + $0x1]]
    %s2122 = smul.f32 %s2021, %s2115
    %s2123 = ssub.f32 %s2121, %s2122
    %s2124 = sld [smem:[#allocation17 + $0x2]]
    %s2125 = smul.f32 %s2076, %s2117
    %s2126 = ssub.f32 %s2124, %s2125
    loop: start=0, step=1, limit=4
    $region72: #{tpu_custom_call.1} parent=1 // loop_pre_header
      _
    $region73: #{tpu_custom_call.1} parent=1 // loop_header
      %s2128 = sphi 0, %s2132
      %p2129 = scmp.ge.s32.totalorder %s2128, 4
    $region74: #{tpu_custom_call.1} parent=1 // loop_header_branch
      %2131 = sbr.rel (%p2129) target = $region78
    $region75: #{tpu_custom_call.1} parent=1 // loop_body
      %s2133 = smul.u32 %s2128, 8
      %s2134 = scalar_lea.vmem [#allocation18], %s2133
      %v2135 = vld [vmem:[%s2134] sm:$0xff]
      %v2136 = vstv %s2113
      %v2137 = vmul.f32 %v2135, %v2136
      %v2138 = vstv %s2120
      %v2139 = vadd.f32 %v2137, %v2138
      %2140 = vst [vmem:[%s2134] sm:$0xff] %v2139
      %s2141 = sadd.s32 %s2133, 32
      %s2142 = scalar_lea.vmem [#allocation18], %s2141
      %v2143 = vld [vmem:[%s2142] sm:$0xff]
      %v2144 = vstv %s2115
      %v2145 = vmul.f32 %v2143, %v2144
      %v2146 = vstv %s2123
      %v2147 = vadd.f32 %v2145, %v2146
      %2148 = vst [vmem:[%s2142] sm:$0xff] %v2147
      %s2149 = sadd.s32 %s2133, 64
      %s2150 = scalar_lea.vmem [#allocation18], %s2149
      %v2151 = vld [vmem:[%s2150] sm:$0xff]
      %v2152 = vstv %s2117
      %v2153 = vmul.f32 %v2151, %v2152
      %v2154 = vstv %s2126
      %v2155 = vadd.f32 %v2153, %v2154
      %2156 = vst [vmem:[%s2150] sm:$0xff] %v2155
    $region76: #{tpu_custom_call.1} parent=1 // loop_footer
      %s2132 = sadd.s32 1, %s2128
    $region77: #{tpu_custom_call.1} parent=1 // loop_footer_branch
      %2127 = sbr.rel target = $region73
    $region78: #{tpu_custom_call.1} parent=1 // loop_exit
      _
    // Predicated region
    $region79: #{tpu_custom_call.1} parent=1 // pred_check
      _
    $region80: #{tpu_custom_call.1} parent=1 // pred_check_branch
      %2158 = sbr.rel (0) target = $region82
    $region81: #{tpu_custom_call.1} parent=1 // pred_region
      %2160 = vsyncadd [#allocation7], 0
      %s2161 = sshll.u32 [#allocation18], 4
      %s2162 = int_to_ptr.vmem [resolvable:$true] %s2161
      %s2163 = sshll.u32 %s7, 4
      %s2164 = int_to_ptr.hbm [resolvable:$true] %s2163
      %2169 = dma.vmem_to_hbm [thread:$0]  %s2162, 1536, %s2164, [#allocation7], 128, 128, 8
    $region82: #{tpu_custom_call.1} parent=1 // pred_fallthru
      _
    // Predicated region
    $region83: #{tpu_custom_call.1} parent=1 // pred_check
      _
    $region84: #{tpu_custom_call.1} parent=1 // pred_check_branch
      %2171 = sbr.rel (0) target = $region86
    $region85: #{tpu_custom_call.1} parent=1 // pred_region
      %2173 = dma.done [#allocation7], 1536
    $region86: #{tpu_custom_call.1} parent=1 // pred_fallthru
      _
    %2174 = vsyncpa [#allocation6], 1
    %2175 = vsyncpa [#allocation7], 1
    %2176 = vsyncpa [#allocation8], 1
    %2177 = vsyncpa [#allocation9], 1
    %2178 = vsyncpa [#allocation13], 1
    %2179 = vsyncpa [#allocation16], 1

</llo_original>
